<compile_context>
chip_gen: v5e
topology: v5e:2x2
jax: 0.10.0
libtpu: 0.0.40
codegen_flags: <defaults>
</compile_context>

<pallas_src>
import math

import jax
import jax.numpy as jnp
from jax.experimental import pallas as pl
from jax.experimental.pallas import tpu as pltpu

# ----------------------------- configuration --------------------------------
B = 2                 # videos
B2 = 2 * B            # text batch (positives + negatives) in the train branch
C = 3                 # image channels
IMG = 16              # image spatial size
PATCH = 8             # patch size -> 4 patches
VIS_DIM = 32          # visual_cfg['embed_dim']
VIS_HEADS = 4
TXT_DIM = 32          # text_cfg.hidden_size
TXT_HEADS = 4
MLP_RATIO = 4
NUM_QUERY = 8         # num_learnable_token (scaled down from 256)
L = 8                 # text / prompt sequence length
VOCAB = 128
NUM_CLASSES = 4
T_SEQ = NUM_QUERY + L         # 16 decoder positions per sequence
NP = (IMG // PATCH) ** 2      # 4 patches
NV = NP + 1                   # 5 visual tokens (cls + patches)
PACK_W = 128                  # packed-vector row width (== VOCAB lane width)
assert VOCAB == PACK_W        # caption CE row and cls CE row share the output lane width

# ------------------------- packed small-vector layout ------------------------
_VIS_VECS = (
    ("ln1_g", VIS_DIM), ("ln1_b", VIS_DIM), ("bqkv", 3 * VIS_DIM), ("bo", VIS_DIM),
    ("ln2_g", VIS_DIM), ("ln2_b", VIS_DIM), ("b1", MLP_RATIO * VIS_DIM), ("b2", VIS_DIM),
    ("lnf_g", VIS_DIM), ("lnf_b", VIS_DIM),
    ("lnq_g", VIS_DIM), ("lnq_b", VIS_DIM), ("lnk_g", VIS_DIM), ("lnk_b", VIS_DIM),
    ("bq_p", VIS_DIM), ("bkv_p", 2 * VIS_DIM), ("bo_p", VIS_DIM),
    ("ln2p_g", VIS_DIM), ("ln2p_b", VIS_DIM), ("b1p", MLP_RATIO * VIS_DIM), ("b2p", VIS_DIM),
    ("fc_b", TXT_DIM),
)
_GPT_VECS = (
    ("ln1_g", TXT_DIM), ("ln1_b", TXT_DIM), ("bqkv", 3 * TXT_DIM), ("bo", TXT_DIM),
    ("ln2_g", TXT_DIM), ("ln2_b", TXT_DIM), ("b1", MLP_RATIO * TXT_DIM), ("b2", TXT_DIM),
    ("lnf_g", TXT_DIM), ("lnf_b", TXT_DIM),
    ("lm_b", VOCAB), ("cls_b1", TXT_DIM), ("cls_b2", PACK_W),
)
_VIS_IDX = {n: i for i, (n, _) in enumerate(_VIS_VECS)}
_VIS_W = dict(_VIS_VECS)
_GPT_IDX = {n: i for i, (n, _) in enumerate(_GPT_VECS)}
_GPT_W = dict(_GPT_VECS)


# --------------------------- in-kernel helpers -------------------------------
def _mm(a, b):
    """bf16-input / fp32-accumulate MXU matmul."""
    return jnp.dot(a.astype(jnp.bfloat16), b.astype(jnp.bfloat16),
                   preferred_element_type=jnp.float32)


def _ln(x, g, b, eps):
    """LayerNormWithForceFP32."""
    x = x.astype(jnp.float32)
    mu = jnp.mean(x, axis=-1, keepdims=True)
    var = jnp.mean((x - mu) ** 2, axis=-1, keepdims=True)
    return (x - mu) * jax.lax.rsqrt(var + eps) * g + b


def _mha(q, k, v, wo, bias, num_heads):
    """Multi-head attention with an additive bias.

    Head outputs are written into contiguous lane columns (concat) and the
    output projection is ONE matmul with K = D (not num_heads matmuls of K=Dh).
    """
    _, D = q.shape
    Dh = D // num_heads
    scale = 1.0 / math.sqrt(Dh)
    outs = []
    for h in range(num_heads):
        sl = slice(h * Dh, (h + 1) * Dh)
        s = jax.lax.dot_general(q[:, sl].astype(jnp.bfloat16),
                                k[:, sl].astype(jnp.bfloat16),
                                (((1,), (1,)), ((), ())),
                                preferred_element_type=jnp.float32) * scale
        s = s + bias
        s = s - jnp.max(s, axis=-1, keepdims=True)
        p = jnp.exp(s)
        p = p * pl.reciprocal(jnp.sum(p, axis=-1, keepdims=True), approx=True)
        outs.append(jnp.dot(p.astype(jnp.bfloat16), v[:, sl].astype(jnp.bfloat16),
                            preferred_element_type=jnp.float32))
    return _mm(jnp.concatenate(outs, axis=1), wo)


def _block(x, bias, num_heads, eps, wqkv, wo, w1, w2, vec):
    """Pre-LN transformer block + final LayerNorm, fully VMEM-resident.

    `vec(name)` returns a (1, width) fp32 row from the packed small-vector tensor.
    """
    D = x.shape[-1]
    h = _ln(x, vec("ln1_g"), vec("ln1_b"), eps)
    qkv = _mm(h, wqkv) + vec("bqkv")                 # fused QKV projection, M = folded batch
    q, k, v = qkv[:, :D], qkv[:, D:2 * D], qkv[:, 2 * D:]
    x = x + _mha(q, k, v, wo, bias, num_heads) + vec("bo")
    h = _ln(x, vec("ln2_g"), vec("ln2_b"), eps)
    # TODO(synk): PyTorch nn.GELU default is the exact erf form; tanh approx used here.
    h = jax.nn.gelu(_mm(h, w1) + vec("b1"), approximate=True)
    x = x + _mm(h, w2) + vec("b2")
    return _ln(x, vec("lnf_g"), vec("lnf_b"), eps)


# ------------------------------ Pallas kernels -------------------------------
def _visual_kernel(tok_ref, q_ref, vbias_ref, pbias_ref, vec_ref,
                   wqkv_ref, wo_ref, w1_ref, w2_ref,
                   wq_ref, wkv_ref, wop_ref, w1p_ref, w2p_ref, fcw_ref,
                   o_ref):
    vecs = vec_ref[...]
    vec = lambda n: vecs[_VIS_IDX[n]:_VIS_IDX[n] + 1, :_VIS_W[n]]

    # ViT block + final LN, batch folded; vbias block-diagonally isolates videos.
    x = tok_ref[...].astype(jnp.float32)                              # [B*Nv, Dv]
    x = _block(x, vbias_ref[...], VIS_HEADS, 1e-6,
               wqkv_ref[...], wo_ref[...], w1_ref[...], w2_ref[...], vec)

    # Attention pool: learnable queries are shared across batch -> project once.
    qparam = q_ref[...].astype(jnp.float32)                           # [Nq, Dv]
    qn = _ln(qparam, vec("lnq_g"), vec("lnq_b"), 1e-6)
    kn = _ln(x, vec("lnk_g"), vec("lnk_b"), 1e-6)
    qp = _mm(qn, wq_ref[...]) + vec("bq_p")                           # [Nq, Dv]
    kv = _mm(kn, wkv_ref[...]) + vec("bkv_p")                         # [B*Nv, 2*Dv]
    k, v = kv[:, :VIS_DIM], kv[:, VIS_DIM:]
    q_fold = jnp.concatenate([qp] * B, axis=0)                        # [B*Nq, Dv]
    xq = jnp.concatenate([qparam] * B, axis=0)                        # residual (pre-LN queries)
    xp = xq + _mha(q_fold, k, v, wop_ref[...], pbias_ref[...], VIS_HEADS) + vec("bo_p")
    hp = _ln(xp, vec("ln2p_g"), vec("ln2p_b"), 1e-6)
    hp = jax.nn.gelu(_mm(hp, w1p_ref[...]) + vec("b1p"), approximate=True)
    xp = xp + _mm(hp, w2p_ref[...]) + vec("b2p")

    # visual_fc fused here (visual_norm = Identity)
    o_ref[...] = (_mm(xp, fcw_ref[...]) + vec("fc_b")).astype(o_ref.dtype)


def _gpt_kernel(x_ref, kmask_ref, causal_ref, capw_ref, sel_ref, clsw_ref, vec_ref,
                wqkv_ref, wo_ref, w1_ref, w2_ref, lmw_ref, cw1_ref, cw2_ref,
                o_ref):
    i = pl.program_id(0)                       # 0 = caption half, 1 = prompt half
    vecs = vec_ref[...]
    vec = lambda n: vecs[_GPT_IDX[n]:_GPT_IDX[n] + 1, :_GPT_W[n]]

    x = x_ref[0].astype(jnp.float32)           # [B2*T, D]  (4 sequences folded)
    # block-diag causal + key-padding bias from the O(T) mask (no [B,T,T] HBM bias)
    allowed = (causal_ref[...] > 0.5) & (kmask_ref[0] > 0.5)
    bias = jnp.where(allowed, 0.0, -1e9)
    h = _block(x, bias, TXT_HEADS, 1e-5,
               wqkv_ref[...], wo_ref[...], w1_ref[...], w2_ref[...], vec)

    @pl.when(i == 0)
    def _():
        # caption half: lm_head + masked token CE; logits never leave VMEM.
        logits = _mm(h, lmw_ref[...]) + vec("lm_b")                   # [B2*T, V]
        m = jnp.max(logits, axis=-1, keepdims=True)
        lse = jnp.log(jnp.sum(jnp.exp(logits - m), axis=-1, keepdims=True)) + m
        # capw = onehot(labels) * loss_mask  -> lane-dense (1, V) row of contributions
        o_ref[0] = jnp.sum((lse - logits) * capw_ref[...], axis=0, keepdims=True)

    @pl.when(i == 1)
    def _():
        # prompt half: last-valid-token pool (selection matmul) + cls head + CE.
        pooled = _mm(sel_ref[...], h)                                 # [B2, D]
        hc = jnp.maximum(_mm(pooled, cw1_ref[...]) + vec("cls_b1"), 0.0)
        logits = _mm(hc, cw2_ref[...]) + vec("cls_b2")                # [B2, 128] (classes padded)
        m = jnp.max(logits, axis=-1, keepdims=True)
        lse = jnp.log(jnp.sum(jnp.exp(logits - m), axis=-1, keepdims=True)) + m
        o_ref[0] = jnp.sum((lse - logits) * clsw_ref[...], axis=0, keepdims=True)


# ------------------------------- wrappers ------------------------------------
def _full_spec(x):
    nd = x.ndim
    return pl.BlockSpec(tuple(x.shape), lambda i, nd=nd: (0,) * nd)


def _pack_rows(named, order):
    """Pack many (1, width<=128) vectors into one [N, 128] fp32 tensor (one DMA stream)."""
    rows = []
    for name, _w in order:
        v = jnp.asarray(named[name], jnp.float32).reshape(1, -1)
        rows.append(jnp.pad(v, ((0, 0), (0, PACK_W - v.shape[1]))))
    return jnp.concatenate(rows, axis=0)


def visual_query_features(image, params):
    """Patch embed (XLA glue) -> fused [ViT block + pool + visual_fc] pallas_call."""
    vp, pp = params["visual"], params["attn_pool"]
    vb = vp["block"]
    Bb = image.shape[0]

    # patch embedding + cls token + pos embed: left to XLA (no dedicated pallas_call)
    gh = gw = IMG // PATCH
    patches = (image.reshape(Bb, C, gh, PATCH, gw, PATCH)
               .transpose(0, 2, 4, 1, 3, 5)
               .reshape(Bb, gh * gw, C * PATCH * PATCH))
    x = patches @ vp["patch_w"] + vp["patch_b"]
    cls = jnp.broadcast_to(vp["cls_token"], (Bb, 1, VIS_DIM))
    x = jnp.concatenate([cls, x], axis=1) + vp["pos_embed"]           # [B, Nv, Dv]
    tokens = x.reshape(Bb * NV, VIS_DIM).astype(jnp.bfloat16)         # bf16 activation

    # constant block-diagonal biases (batch-independent; no per-step varying DMA)
    tok_vid = jnp.repeat(jnp.arange(Bb), NV)
    qry_vid = jnp.repeat(jnp.arange(Bb), NUM_QUERY)
    vbias = jnp.where(tok_vid[:, None] == tok_vid[None, :], 0.0, -1e9).astype(jnp.float32)
    pbias = jnp.where(qry_vid[:, None] == tok_vid[None, :], 0.0, -1e9).astype(jnp.float32)

    vecs = _pack_rows(dict(
        ln1_g=vb["ln1_g"], ln1_b=vb["ln1_b"], bqkv=vb["bqkv"], bo=vb["bo"],
        ln2_g=vb["ln2_g"], ln2_b=vb["ln2_b"], b1=vb["b1"], b2=vb["b2"],
        lnf_g=vp["ln_f_g"], lnf_b=vp["ln_f_b"],
        lnq_g=pp["ln_q_g"], lnq_b=pp["ln_q_b"], lnk_g=pp["ln_k_g"], lnk_b=pp["ln_k_b"],
        bq_p=pp["bq"], bkv_p=pp["bkv"], bo_p=pp["bo"],
        ln2p_g=pp["ln2_g"], ln2p_b=pp["ln2_b"], b1p=pp["b1"], b2p=pp["b2"],
        fc_b=params["visual_fc_b"]), _VIS_VECS)

    bf = jnp.bfloat16
    mats = [vb["wqkv"].astype(bf), vb["wo"].astype(bf), vb["w1"].astype(bf), vb["w2"].astype(bf),
            pp["wq"].astype(bf), pp["wkv"].astype(bf), pp["wo"].astype(bf),
            pp["w1"].astype(bf), pp["w2"].astype(bf), params["visual_fc_w"].astype(bf)]
    queries = params["learnable_queries"].reshape(NUM_QUERY, VIS_DIM)

    operands = [tokens, queries, vbias, pbias, vecs] + mats
    out = pl.pallas_call(
        _visual_kernel,
        grid=(1,),
        out_shape=jax.ShapeDtypeStruct((Bb * NUM_QUERY, TXT_DIM), jnp.bfloat16),
        in_specs=[_full_spec(a) for a in operands],
        out_specs=pl.BlockSpec((Bb * NUM_QUERY, TXT_DIM), lambda i: (0, 0)),
        compiler_params=pltpu.CompilerParams(dimension_semantics=("arbitrary",)),
    )(*operands)
    return out.reshape(Bb, NUM_QUERY, TXT_DIM)


def gpt_losses(emb_cap, mask_cap, cap_weights, emb_prompt, mask_prompt, sel, cls_weights, params):
    """One pallas_call, grid=(2,): step 0 = caption CE, step 1 = cls CE.

    Both steps run the same GPT block + final LN over their 4 folded sequences;
    on a v7x megacore the two halves can go to the two TensorCores.
    """
    gp = params["gpt"]
    gb = gp["block"]
    M = B2 * T_SEQ

    x = jnp.stack([emb_cap.reshape(M, TXT_DIM),
                   emb_prompt.reshape(M, TXT_DIM)], axis=0).astype(jnp.bfloat16)   # [2, M, D]
    kmask = jnp.stack([mask_cap.reshape(1, M),
                       mask_prompt.reshape(1, M)], axis=0).astype(jnp.float32)     # [2, 1, M]

    # constant block-diagonal causal structure (shared by both halves)
    seq_id = jnp.repeat(jnp.arange(B2), T_SEQ)
    pos = jnp.tile(jnp.arange(T_SEQ), B2)
    causal = jnp.logical_and(seq_id[:, None] == seq_id[None, :],
                             pos[:, None] >= pos[None, :]).astype(jnp.float32)     # [M, M]

    cb2 = jnp.pad(params["cls_b2"], ((0, 0), (0, PACK_W - NUM_CLASSES)),
                  constant_values=-1e9)          # padded class columns never win the softmax
    cw2 = jnp.pad(params["cls_w2"], ((0, 0), (0, PACK_W - NUM_CLASSES)))

    vecs = _pack_rows(dict(
        ln1_g=gb["ln1_g"], ln1_b=gb["ln1_b"], bqkv=gb["bqkv"], bo=gb["bo"],
        ln2_g=gb["ln2_g"], ln2_b=gb["ln2_b"], b1=gb["b1"], b2=gb["b2"],
        lnf_g=gp["ln_f_g"], lnf_b=gp["ln_f_b"],
        lm_b=gp["lm_head_b"], cls_b1=params["cls_b1"], cls_b2=cb2), _GPT_VECS)

    bf = jnp.bfloat16
    mats = [gb["wqkv"].astype(bf), gb["wo"].astype(bf), gb["w1"].astype(bf), gb["w2"].astype(bf),
            gp["lm_head_w"].astype(bf), params["cls_w1"].astype(bf), cw2.astype(bf)]

    operands = [x, kmask, causal, cap_weights, sel, cls_weights, vecs] + mats
    in_specs = ([pl.BlockSpec((1, M, TXT_DIM), lambda i: (i, 0, 0)),
                 pl.BlockSpec((1, 1, M), lambda i: (i, 0, 0))]
                + [_full_spec(a) for a in operands[2:]])

    out = pl.pallas_call(
        _gpt_kernel,
        grid=(2,),
        out_shape=jax.ShapeDtypeStruct((2, 1, PACK_W), jnp.float32),
        in_specs=in_specs,
        out_specs=pl.BlockSpec((1, 1, PACK_W), lambda i: (i, 0, 0)),
        compiler_params=pltpu.CompilerParams(dimension_semantics=("parallel",)),
    )(*operands)
    return out[0, 0], out[1, 0]          # caption-loss row, cls-loss row (lane-dense)


# ----------------------------- parameter init --------------------------------
def _dense(key, fan_in, fan_out, std=0.015):
    return jax.random.normal(key, (fan_in, fan_out), jnp.float32) * std


def _init_block(key, dim):
    ks = jax.random.split(key, 4)
    hid = dim * MLP_RATIO
    return dict(
        ln1_g=jnp.ones((1, dim), jnp.float32), ln1_b=jnp.zeros((1, dim), jnp.float32),
        wqkv=_dense(ks[0], dim, 3 * dim), bqkv=jnp.zeros((1, 3 * dim), jnp.float32),
        wo=_dense(ks[1], dim, dim), bo=jnp.zeros((1, dim), jnp.float32),
        ln2_g=jnp.ones((1, dim), jnp.float32), ln2_b=jnp.zeros((1, dim), jnp.float32),
        w1=_dense(ks[2], dim, hid), b1=jnp.zeros((1, hid), jnp.float32),
        w2=_dense(ks[3], hid, dim), b2=jnp.zeros((1, dim), jnp.float32),
    )


def _init_pool(key, dim):
    ks = jax.random.split(key, 5)
    hid = dim * MLP_RATIO
    return dict(
        ln_q_g=jnp.ones((1, dim), jnp.float32), ln_q_b=jnp.zeros((1, dim), jnp.float32),
        ln_k_g=jnp.ones((1, dim), jnp.float32), ln_k_b=jnp.zeros((1, dim), jnp.float32),
        wq=_dense(ks[0], dim, dim), bq=jnp.zeros((1, dim), jnp.float32),
        wkv=_dense(ks[1], dim, 2 * dim), bkv=jnp.zeros((1, 2 * dim), jnp.float32),
        wo=_dense(ks[2], dim, dim), bo=jnp.zeros((1, dim), jnp.float32),
        ln2_g=jnp.ones((1, dim), jnp.float32), ln2_b=jnp.zeros((1, dim), jnp.float32),
        w1=_dense(ks[3], dim, hid), b1=jnp.zeros((1, hid), jnp.float32),
        w2=_dense(ks[4], hid, dim), b2=jnp.zeros((1, dim), jnp.float32),
    )


def init_params(key):
    ks = jax.random.split(key, 13)
    visual = dict(
        patch_w=_dense(ks[0], C * PATCH * PATCH, VIS_DIM),
        patch_b=jnp.zeros((1, VIS_DIM), jnp.float32),
        cls_token=jax.random.normal(ks[1], (1, 1, VIS_DIM), jnp.float32) * 0.015,
        pos_embed=jax.random.normal(ks[2], (1, NV, VIS_DIM), jnp.float32) * 0.015,
        block=_init_block(ks[3], VIS_DIM),
        ln_f_g=jnp.ones((1, VIS_DIM), jnp.float32),
        ln_f_b=jnp.zeros((1, VIS_DIM), jnp.float32),
    )
    gpt = dict(
        pos_embed=jax.random.normal(ks[4], (1, T_SEQ, TXT_DIM), jnp.float32) * 0.015,
        block=_init_block(ks[5], TXT_DIM),
        ln_f_g=jnp.ones((1, TXT_DIM), jnp.float32),
        ln_f_b=jnp.zeros((1, TXT_DIM), jnp.float32),
        lm_head_w=_dense(ks[6], TXT_DIM, VOCAB),
        lm_head_b=jnp.zeros((1, VOCAB), jnp.float32),
    )
    return dict(
        visual=visual,
        attn_pool=_init_pool(ks[7], VIS_DIM),
        gpt=gpt,
        word_emb=jax.random.normal(ks[8], (VOCAB, TXT_DIM), jnp.float32) * 0.015,
        learnable_queries=jax.random.normal(ks[9], (1, NUM_QUERY, VIS_DIM), jnp.float32) * 0.015,
        visual_fc_w=_dense(ks[10], VIS_DIM, TXT_DIM),
        visual_fc_b=jnp.zeros((1, TXT_DIM), jnp.float32),
        cls_w1=_dense(ks[11], TXT_DIM, TXT_DIM),
        cls_b1=jnp.zeros((1, TXT_DIM), jnp.float32),
        cls_w2=_dense(ks[12], TXT_DIM, NUM_CLASSES),
        cls_b2=jnp.zeros((1, NUM_CLASSES), jnp.float32),
    )


# -------------------------------- forward ------------------------------------
def forward(params, image, text_ids, text_mask, prompt_lengths,
            prompt_ids, prompt_mask, negative_indices, labels):
    # 1) visual encoder + learnable-query attention pool + visual_fc (fused kernel 1)
    query_features = visual_query_features(image, params)                         # [B, Nq, Dt] bf16

    # 2) text bookkeeping (pure index ops, glue)
    targets = text_ids[:, 1:]
    targets = jnp.concatenate([targets, targets[:, :1]], axis=1)                  # [B2, L]
    text_loss_atts = text_mask[:, 1:]                                             # [B2, L-1]
    keep = (jnp.arange(L - 1)[None, :] >= prompt_lengths[:, None]).astype(text_loss_atts.dtype)
    text_loss_atts = text_loss_atts * keep
    # pad to length L so the mask aligns with the wrapped-around last target column
    text_loss_atts = jnp.concatenate(
        [text_loss_atts, jnp.zeros((B2, 1), text_loss_atts.dtype)], axis=1)       # [B2, L]

    # 3) train branch: positives + negatives
    qf2 = jnp.concatenate([query_features,
                           jnp.take(query_features, negative_indices, axis=0)], axis=0)  # [2B, Nq, Dt]
    n2 = qf2.shape[0]
    query_atts = jnp.ones((n2, NUM_QUERY), jnp.int32)
    # 100 is a valid token id at VOCAB=128; those positions are zeroed by loss_mask.
    empty_targets = jnp.full((n2, NUM_QUERY), 100, jnp.int32)
    targets_full = jnp.concatenate([empty_targets, targets], axis=1)              # [2B, Nq+L]

    word = params["word_emb"].astype(jnp.bfloat16)
    pos = params["gpt"]["pos_embed"][:, :T_SEQ]

    emb_cap = jnp.concatenate([qf2, jnp.take(word, text_ids, axis=0)], axis=1)
    emb_cap = emb_cap.astype(jnp.float32) + pos                                   # [2B, T, D]
    attn_cap = jnp.concatenate([query_atts, text_mask], axis=1)                   # [2B, T]
    loss_mask = jnp.concatenate([1 - query_atts, text_loss_atts], axis=1).astype(jnp.float32)
    cap_weights = (jax.nn.one_hot(targets_full, VOCAB, dtype=jnp.float32)
                   * loss_mask[..., None]).reshape(n2 * T_SEQ, VOCAB)             # [2B*T, V]

    # 4) use_cls branch inputs: prompt pass (only hidden states feed the cls head;
    #    the original's discarded masked-LM loss on this pass is intentionally skipped)
    emb_prompt = jnp.concatenate([qf2, jnp.take(word, prompt_ids, axis=0)], axis=1)
    emb_prompt = emb_prompt.astype(jnp.float32) + pos
    attn_prompt = jnp.concatenate([query_atts, prompt_mask], axis=1)              # [2B, T]
    last_idx = jnp.sum(attn_prompt, axis=-1) - 1                                  # [2B]
    sel = jax.nn.one_hot(jnp.arange(n2) * T_SEQ + last_idx, n2 * T_SEQ,
                         dtype=jnp.float32)                                       # [2B, 2B*T]
    cls_weights = jax.nn.one_hot(labels, PACK_W, dtype=jnp.float32)               # [2B, 128]

    # 5) fused GPT kernel (caption CE + cls CE)
    cap_row, cls_row = gpt_losses(emb_cap, attn_cap, cap_weights,
                                  emb_prompt, attn_prompt, sel, cls_weights, params)
    loss_caption = jnp.sum(cap_row) / jnp.maximum(jnp.sum(loss_mask), 1.0)
    loss_cls = jnp.sum(cls_row) / n2
    return loss_caption, loss_cls


# --------------------------------- driver ------------------------------------
if __name__ == "__main__":
    root = jax.random.PRNGKey(0)
    kp, kimg, kids, kpids, klab = jax.random.split(root, 5)

    params = init_params(kp)

    image = jax.random.normal(kimg, (B, C, IMG, IMG), jnp.float32)                # NCHW
    text_ids = jax.random.randint(kids, (B2, L), 0, VOCAB, dtype=jnp.int32)
    text_mask = jnp.array([[1, 1, 1, 1, 1, 1, 0, 0],
                           [1, 1, 1, 1, 1, 1, 1, 0],
                           [1, 1, 1, 1, 1, 0, 0, 0],
                           [1, 1, 1, 1, 1, 1, 1, 1]], dtype=jnp.int32)
    prompt_lengths = jnp.array([2, 2, 3, 3], dtype=jnp.int32)
    prompt_ids = jax.random.randint(kpids, (B2, L), 0, VOCAB, dtype=jnp.int32)
    prompt_mask = jnp.array([[1, 1, 1, 1, 0, 0, 0, 0],
                             [1, 1, 1, 1, 1, 0, 0, 0],
                             [1, 1, 1, 0, 0, 0, 0, 0],
                             [1, 1, 1, 1, 1, 1, 0, 0]], dtype=jnp.int32)
    negative_indices = jnp.array([1, 0], dtype=jnp.int32)
    labels = jax.random.randint(klab, (B2,), 0, NUM_CLASSES, dtype=jnp.int32)

    loss_caption, loss_cls = jax.jit(forward)(
        params, image, text_ids, text_mask, prompt_lengths,
        prompt_ids, prompt_mask, negative_indices, labels)
    jax.block_until_ready((loss_caption, loss_cls))
    assert jnp.isfinite(loss_caption) and jnp.isfinite(loss_cls)
    print("KERNEL_OK")
</pallas_src>

<mosaic_0001>
module attributes {stable_mosaic.version = 11 : i64} {
  func.func @_visual_kernel(%arg0: i32, %arg1: memref<10x32xbf16, #tpu.memory_space<vmem>>, %arg2: memref<8x32xf32, #tpu.memory_space<vmem>>, %arg3: memref<10x10xf32, #tpu.memory_space<vmem>>, %arg4: memref<16x10xf32, #tpu.memory_space<vmem>>, %arg5: memref<22x128xf32, #tpu.memory_space<vmem>>, %arg6: memref<32x96xbf16, #tpu.memory_space<vmem>>, %arg7: memref<32x32xbf16, #tpu.memory_space<vmem>>, %arg8: memref<32x128xbf16, #tpu.memory_space<vmem>>, %arg9: memref<128x32xbf16, #tpu.memory_space<vmem>>, %arg10: memref<32x32xbf16, #tpu.memory_space<vmem>>, %arg11: memref<32x64xbf16, #tpu.memory_space<vmem>>, %arg12: memref<32x32xbf16, #tpu.memory_space<vmem>>, %arg13: memref<32x128xbf16, #tpu.memory_space<vmem>>, %arg14: memref<128x32xbf16, #tpu.memory_space<vmem>>, %arg15: memref<32x32xbf16, #tpu.memory_space<vmem>>, %arg16: memref<16x32xbf16, #tpu.memory_space<vmem>>) attributes {dimension_semantics = [#tpu.dimension_semantics<arbitrary>], iteration_bounds = array<i64: 1>, scalar_prefetch = 0 : i64, scratch_operands = 0 : i64, tpu.core_type = #tpu.core_type<tc>, window_params = [{pipeline_mode = #tpu.pipeline_mode<synchronous>, transform_indices = @transform_0, window_bounds = array<i64: 10, 32>}, {pipeline_mode = #tpu.pipeline_mode<synchronous>, transform_indices = @transform_1, window_bounds = array<i64: 8, 32>}, {pipeline_mode = #tpu.pipeline_mode<synchronous>, transform_indices = @transform_2, window_bounds = array<i64: 10, 10>}, {pipeline_mode = #tpu.pipeline_mode<synchronous>, transform_indices = @transform_3, window_bounds = array<i64: 16, 10>}, {pipeline_mode = #tpu.pipeline_mode<synchronous>, transform_indices = @transform_4, window_bounds = array<i64: 22, 128>}, {pipeline_mode = #tpu.pipeline_mode<synchronous>, transform_indices = @transform_5, window_bounds = array<i64: 32, 96>}, {pipeline_mode = #tpu.pipeline_mode<synchronous>, transform_indices = @transform_6, window_bounds = array<i64: 32, 32>}, {pipeline_mode = #tpu.pipeline_mode<synchronous>, transform_indices = @transform_7, window_bounds = array<i64: 32, 128>}, {pipeline_mode = #tpu.pipeline_mode<synchronous>, transform_indices = @transform_8, window_bounds = array<i64: 128, 32>}, {pipeline_mode = #tpu.pipeline_mode<synchronous>, transform_indices = @transform_9, window_bounds = array<i64: 32, 32>}, {pipeline_mode = #tpu.pipeline_mode<synchronous>, transform_indices = @transform_10, window_bounds = array<i64: 32, 64>}, {pipeline_mode = #tpu.pipeline_mode<synchronous>, transform_indices = @transform_11, window_bounds = array<i64: 32, 32>}, {pipeline_mode = #tpu.pipeline_mode<synchronous>, transform_indices = @transform_12, window_bounds = array<i64: 32, 128>}, {pipeline_mode = #tpu.pipeline_mode<synchronous>, transform_indices = @transform_13, window_bounds = array<i64: 128, 32>}, {pipeline_mode = #tpu.pipeline_mode<synchronous>, transform_indices = @transform_14, window_bounds = array<i64: 32, 32>}, {pipeline_mode = #tpu.pipeline_mode<synchronous>, transform_indices = @transform_15, window_bounds = array<i64: 16, 32>}]} {
    %c0 = arith.constant 0 : index
    %c0_0 = arith.constant 0 : index
    %0 = vector.load %arg5[%c0, %c0_0] : memref<22x128xf32, #tpu.memory_space<vmem>>, vector<22x128xf32>
    %c0_1 = arith.constant 0 : index
    %c0_2 = arith.constant 0 : index
    %1 = vector.load %arg1[%c0_1, %c0_2] : memref<10x32xbf16, #tpu.memory_space<vmem>>, vector<10x32xbf16>
    %2 = arith.extf %1 : vector<10x32xbf16> to vector<10x32xf32>
    %c0_3 = arith.constant 0 : index
    %c0_4 = arith.constant 0 : index
    %3 = vector.load %arg3[%c0_3, %c0_4] : memref<10x10xf32, #tpu.memory_space<vmem>>, vector<10x10xf32>
    %c0_5 = arith.constant 0 : index
    %c0_6 = arith.constant 0 : index
    %4 = vector.load %arg6[%c0_5, %c0_6] : memref<32x96xbf16, #tpu.memory_space<vmem>>, vector<32x96xbf16>
    %c0_7 = arith.constant 0 : index
    %c0_8 = arith.constant 0 : index
    %5 = vector.load %arg7[%c0_7, %c0_8] : memref<32x32xbf16, #tpu.memory_space<vmem>>, vector<32x32xbf16>
    %c0_9 = arith.constant 0 : index
    %c0_10 = arith.constant 0 : index
    %6 = vector.load %arg8[%c0_9, %c0_10] : memref<32x128xbf16, #tpu.memory_space<vmem>>, vector<32x128xbf16>
    %c0_11 = arith.constant 0 : index
    %c0_12 = arith.constant 0 : index
    %7 = vector.load %arg9[%c0_11, %c0_12] : memref<128x32xbf16, #tpu.memory_space<vmem>>, vector<128x32xbf16>
    %8 = vector.extract_strided_slice %0 {offsets = [0, 0], sizes = [1, 32], strides = [1, 1]} : vector<22x128xf32> to vector<1x32xf32>
    %9 = vector.extract_strided_slice %0 {offsets = [1, 0], sizes = [1, 32], strides = [1, 1]} : vector<22x128xf32> to vector<1x32xf32>
    %cst = arith.constant dense<0.000000e+00> : vector<10xf32>
    %10 = vector.multi_reduction <add>, %2, %cst [1] : vector<10x32xf32> to vector<10xf32>
    %11 = vector.shape_cast %10 : vector<10xf32> to vector<10x1xf32>
    %cst_13 = arith.constant 3.200000e+01 : f32
    %12 = vector.broadcast %cst_13 : f32 to vector<10x1xf32>
    %13 = arith.divf %11, %12 : vector<10x1xf32>
    %14 = vector.broadcast %13 : vector<10x1xf32> to vector<10x32xf32>
    %15 = arith.subf %2, %14 : vector<10x32xf32>
    %16 = arith.mulf %15, %15 : vector<10x32xf32>
    %cst_14 = arith.constant dense<0.000000e+00> : vector<10xf32>
    %17 = vector.multi_reduction <add>, %16, %cst_14 [1] : vector<10x32xf32> to vector<10xf32>
    %18 = vector.shape_cast %17 : vector<10xf32> to vector<10x1xf32>
    %cst_15 = arith.constant 3.200000e+01 : f32
    %19 = vector.broadcast %cst_15 : f32 to vector<10x1xf32>
    %20 = arith.divf %18, %19 : vector<10x1xf32>
    %21 = vector.broadcast %13 : vector<10x1xf32> to vector<10x32xf32>
    %22 = arith.subf %2, %21 : vector<10x32xf32>
    %cst_16 = arith.constant 9.99999997E-7 : f32
    %23 = vector.broadcast %cst_16 : f32 to vector<10x1xf32>
    %24 = arith.addf %20, %23 : vector<10x1xf32>
    %25 = math.rsqrt %24 : vector<10x1xf32>
    %26 = vector.broadcast %25 : vector<10x1xf32> to vector<10x32xf32>
    %27 = arith.mulf %22, %26 : vector<10x32xf32>
    %28 = vector.broadcast %8 : vector<1x32xf32> to vector<10x32xf32>
    %29 = arith.mulf %27, %28 : vector<10x32xf32>
    %30 = vector.broadcast %9 : vector<1x32xf32> to vector<10x32xf32>
    %31 = arith.addf %29, %30 : vector<10x32xf32>
    %32 = arith.truncf %31 : vector<10x32xf32> to vector<10x32xbf16>
    %cst_17 = arith.constant dense<0.000000e+00> : vector<10x96xf32>
    %33 = tpu.matmul %32, %4, %cst_17 {dimension_numbers = #tpu.dot_dimension_numbers<[1], [0], [0], [1], [0, 0, 1, 1], [], []>} : vector<10x32xbf16>, vector<32x96xbf16>, vector<10x96xf32> -> vector<10x96xf32>
    %34 = vector.extract_strided_slice %0 {offsets = [2, 0], sizes = [1, 96], strides = [1, 1]} : vector<22x128xf32> to vector<1x96xf32>
    %35 = vector.broadcast %34 : vector<1x96xf32> to vector<10x96xf32>
    %36 = arith.addf %33, %35 : vector<10x96xf32>
    %37 = vector.extract_strided_slice %36 {offsets = [0, 0], sizes = [10, 32], strides = [1, 1]} : vector<10x96xf32> to vector<10x32xf32>
    %38 = vector.extract_strided_slice %36 {offsets = [0, 32], sizes = [10, 32], strides = [1, 1]} : vector<10x96xf32> to vector<10x32xf32>
    %39 = vector.extract_strided_slice %36 {offsets = [0, 64], sizes = [10, 32], strides = [1, 1]} : vector<10x96xf32> to vector<10x32xf32>
    %40 = vector.extract_strided_slice %37 {offsets = [0, 0], sizes = [10, 8], strides = [1, 1]} : vector<10x32xf32> to vector<10x8xf32>
    %41 = arith.truncf %40 : vector<10x8xf32> to vector<10x8xbf16>
    %42 = vector.extract_strided_slice %38 {offsets = [0, 0], sizes = [10, 8], strides = [1, 1]} : vector<10x32xf32> to vector<10x8xf32>
    %43 = arith.truncf %42 : vector<10x8xf32> to vector<10x8xbf16>
    %cst_18 = arith.constant dense<0.000000e+00> : vector<10x10xf32>
    %44 = tpu.matmul %41, %43, %cst_18 {dimension_numbers = #tpu.dot_dimension_numbers<[1], [1], [0], [0], [0, 0, 1, 0], [], []>} : vector<10x8xbf16>, vector<10x8xbf16>, vector<10x10xf32> -> vector<10x10xf32>
    %cst_19 = arith.constant 0.353553385 : f32
    %45 = vector.broadcast %cst_19 : f32 to vector<10x10xf32>
    %46 = arith.mulf %44, %45 : vector<10x10xf32>
    %47 = arith.addf %46, %3 : vector<10x10xf32>
    %cst_20 = arith.constant dense<0xFF800000> : vector<10xf32>
    %48 = vector.multi_reduction <maximumf>, %47, %cst_20 [1] : vector<10x10xf32> to vector<10xf32>
    %49 = vector.shape_cast %48 : vector<10xf32> to vector<10x1xf32>
    %50 = vector.broadcast %49 : vector<10x1xf32> to vector<10x10xf32>
    %51 = arith.subf %47, %50 : vector<10x10xf32>
    %52 = math.exp %51 : vector<10x10xf32>
    %cst_21 = arith.constant dense<0.000000e+00> : vector<10xf32>
    %53 = vector.multi_reduction <add>, %52, %cst_21 [1] : vector<10x10xf32> to vector<10xf32>
    %54 = vector.shape_cast %53 : vector<10xf32> to vector<10x1xf32>
    %55 = tpu.reciprocal %54 {approx = true} : vector<10x1xf32> -> vector<10x1xf32>
    %56 = vector.broadcast %55 : vector<10x1xf32> to vector<10x10xf32>
    %57 = arith.mulf %52, %56 : vector<10x10xf32>
    %58 = arith.truncf %57 : vector<10x10xf32> to vector<10x10xbf16>
    %59 = vector.extract_strided_slice %39 {offsets = [0, 0], sizes = [10, 8], strides = [1, 1]} : vector<10x32xf32> to vector<10x8xf32>
    %60 = arith.truncf %59 : vector<10x8xf32> to vector<10x8xbf16>
    %cst_22 = arith.constant dense<0.000000e+00> : vector<10x8xf32>
    %61 = tpu.matmul %58, %60, %cst_22 {dimension_numbers = #tpu.dot_dimension_numbers<[1], [0], [0], [1], [0, 0, 1, 1], [], []>} : vector<10x10xbf16>, vector<10x8xbf16>, vector<10x8xf32> -> vector<10x8xf32>
    %62 = vector.extract_strided_slice %37 {offsets = [0, 8], sizes = [10, 8], strides = [1, 1]} : vector<10x32xf32> to vector<10x8xf32>
    %63 = arith.truncf %62 : vector<10x8xf32> to vector<10x8xbf16>
    %64 = vector.extract_strided_slice %38 {offsets = [0, 8], sizes = [10, 8], strides = [1, 1]} : vector<10x32xf32> to vector<10x8xf32>
    %65 = arith.truncf %64 : vector<10x8xf32> to vector<10x8xbf16>
    %cst_23 = arith.constant dense<0.000000e+00> : vector<10x10xf32>
    %66 = tpu.matmul %63, %65, %cst_23 {dimension_numbers = #tpu.dot_dimension_numbers<[1], [1], [0], [0], [0, 0, 1, 0], [], []>} : vector<10x8xbf16>, vector<10x8xbf16>, vector<10x10xf32> -> vector<10x10xf32>
    %cst_24 = arith.constant 0.353553385 : f32
    %67 = vector.broadcast %cst_24 : f32 to vector<10x10xf32>
    %68 = arith.mulf %66, %67 : vector<10x10xf32>
    %69 = arith.addf %68, %3 : vector<10x10xf32>
    %cst_25 = arith.constant dense<0xFF800000> : vector<10xf32>
    %70 = vector.multi_reduction <maximumf>, %69, %cst_25 [1] : vector<10x10xf32> to vector<10xf32>
    %71 = vector.shape_cast %70 : vector<10xf32> to vector<10x1xf32>
    %72 = vector.broadcast %71 : vector<10x1xf32> to vector<10x10xf32>
    %73 = arith.subf %69, %72 : vector<10x10xf32>
    %74 = math.exp %73 : vector<10x10xf32>
    %cst_26 = arith.constant dense<0.000000e+00> : vector<10xf32>
    %75 = vector.multi_reduction <add>, %74, %cst_26 [1] : vector<10x10xf32> to vector<10xf32>
    %76 = vector.shape_cast %75 : vector<10xf32> to vector<10x1xf32>
    %77 = tpu.reciprocal %76 {approx = true} : vector<10x1xf32> -> vector<10x1xf32>
    %78 = vector.broadcast %77 : vector<10x1xf32> to vector<10x10xf32>
    %79 = arith.mulf %74, %78 : vector<10x10xf32>
    %80 = arith.truncf %79 : vector<10x10xf32> to vector<10x10xbf16>
    %81 = vector.extract_strided_slice %39 {offsets = [0, 8], sizes = [10, 8], strides = [1, 1]} : vector<10x32xf32> to vector<10x8xf32>
    %82 = arith.truncf %81 : vector<10x8xf32> to vector<10x8xbf16>
    %cst_27 = arith.constant dense<0.000000e+00> : vector<10x8xf32>
    %83 = tpu.matmul %80, %82, %cst_27 {dimension_numbers = #tpu.dot_dimension_numbers<[1], [0], [0], [1], [0, 0, 1, 1], [], []>} : vector<10x10xbf16>, vector<10x8xbf16>, vector<10x8xf32> -> vector<10x8xf32>
    %84 = vector.extract_strided_slice %37 {offsets = [0, 16], sizes = [10, 8], strides = [1, 1]} : vector<10x32xf32> to vector<10x8xf32>
    %85 = arith.truncf %84 : vector<10x8xf32> to vector<10x8xbf16>
    %86 = vector.extract_strided_slice %38 {offsets = [0, 16], sizes = [10, 8], strides = [1, 1]} : vector<10x32xf32> to vector<10x8xf32>
    %87 = arith.truncf %86 : vector<10x8xf32> to vector<10x8xbf16>
    %cst_28 = arith.constant dense<0.000000e+00> : vector<10x10xf32>
    %88 = tpu.matmul %85, %87, %cst_28 {dimension_numbers = #tpu.dot_dimension_numbers<[1], [1], [0], [0], [0, 0, 1, 0], [], []>} : vector<10x8xbf16>, vector<10x8xbf16>, vector<10x10xf32> -> vector<10x10xf32>
    %cst_29 = arith.constant 0.353553385 : f32
    %89 = vector.broadcast %cst_29 : f32 to vector<10x10xf32>
    %90 = arith.mulf %88, %89 : vector<10x10xf32>
    %91 = arith.addf %90, %3 : vector<10x10xf32>
    %cst_30 = arith.constant dense<0xFF800000> : vector<10xf32>
    %92 = vector.multi_reduction <maximumf>, %91, %cst_30 [1] : vector<10x10xf32> to vector<10xf32>
    %93 = vector.shape_cast %92 : vector<10xf32> to vector<10x1xf32>
    %94 = vector.broadcast %93 : vector<10x1xf32> to vector<10x10xf32>
    %95 = arith.subf %91, %94 : vector<10x10xf32>
    %96 = math.exp %95 : vector<10x10xf32>
    %cst_31 = arith.constant dense<0.000000e+00> : vector<10xf32>
    %97 = vector.multi_reduction <add>, %96, %cst_31 [1] : vector<10x10xf32> to vector<10xf32>
    %98 = vector.shape_cast %97 : vector<10xf32> to vector<10x1xf32>
    %99 = tpu.reciprocal %98 {approx = true} : vector<10x1xf32> -> vector<10x1xf32>
    %100 = vector.broadcast %99 : vector<10x1xf32> to vector<10x10xf32>
    %101 = arith.mulf %96, %100 : vector<10x10xf32>
    %102 = arith.truncf %101 : vector<10x10xf32> to vector<10x10xbf16>
    %103 = vector.extract_strided_slice %39 {offsets = [0, 16], sizes = [10, 8], strides = [1, 1]} : vector<10x32xf32> to vector<10x8xf32>
    %104 = arith.truncf %103 : vector<10x8xf32> to vector<10x8xbf16>
    %cst_32 = arith.constant dense<0.000000e+00> : vector<10x8xf32>
    %105 = tpu.matmul %102, %104, %cst_32 {dimension_numbers = #tpu.dot_dimension_numbers<[1], [0], [0], [1], [0, 0, 1, 1], [], []>} : vector<10x10xbf16>, vector<10x8xbf16>, vector<10x8xf32> -> vector<10x8xf32>
    %106 = vector.extract_strided_slice %37 {offsets = [0, 24], sizes = [10, 8], strides = [1, 1]} : vector<10x32xf32> to vector<10x8xf32>
    %107 = arith.truncf %106 : vector<10x8xf32> to vector<10x8xbf16>
    %108 = vector.extract_strided_slice %38 {offsets = [0, 24], sizes = [10, 8], strides = [1, 1]} : vector<10x32xf32> to vector<10x8xf32>
    %109 = arith.truncf %108 : vector<10x8xf32> to vector<10x8xbf16>
    %cst_33 = arith.constant dense<0.000000e+00> : vector<10x10xf32>
    %110 = tpu.matmul %107, %109, %cst_33 {dimension_numbers = #tpu.dot_dimension_numbers<[1], [1], [0], [0], [0, 0, 1, 0], [], []>} : vector<10x8xbf16>, vector<10x8xbf16>, vector<10x10xf32> -> vector<10x10xf32>
    %cst_34 = arith.constant 0.353553385 : f32
    %111 = vector.broadcast %cst_34 : f32 to vector<10x10xf32>
    %112 = arith.mulf %110, %111 : vector<10x10xf32>
    %113 = arith.addf %112, %3 : vector<10x10xf32>
    %cst_35 = arith.constant dense<0xFF800000> : vector<10xf32>
    %114 = vector.multi_reduction <maximumf>, %113, %cst_35 [1] : vector<10x10xf32> to vector<10xf32>
    %115 = vector.shape_cast %114 : vector<10xf32> to vector<10x1xf32>
    %116 = vector.broadcast %115 : vector<10x1xf32> to vector<10x10xf32>
    %117 = arith.subf %113, %116 : vector<10x10xf32>
    %118 = math.exp %117 : vector<10x10xf32>
    %cst_36 = arith.constant dense<0.000000e+00> : vector<10xf32>
    %119 = vector.multi_reduction <add>, %118, %cst_36 [1] : vector<10x10xf32> to vector<10xf32>
    %120 = vector.shape_cast %119 : vector<10xf32> to vector<10x1xf32>
    %121 = tpu.reciprocal %120 {approx = true} : vector<10x1xf32> -> vector<10x1xf32>
    %122 = vector.broadcast %121 : vector<10x1xf32> to vector<10x10xf32>
    %123 = arith.mulf %118, %122 : vector<10x10xf32>
    %124 = arith.truncf %123 : vector<10x10xf32> to vector<10x10xbf16>
    %125 = vector.extract_strided_slice %39 {offsets = [0, 24], sizes = [10, 8], strides = [1, 1]} : vector<10x32xf32> to vector<10x8xf32>
    %126 = arith.truncf %125 : vector<10x8xf32> to vector<10x8xbf16>
    %cst_37 = arith.constant dense<0.000000e+00> : vector<10x8xf32>
    %127 = tpu.matmul %124, %126, %cst_37 {dimension_numbers = #tpu.dot_dimension_numbers<[1], [0], [0], [1], [0, 0, 1, 1], [], []>} : vector<10x10xbf16>, vector<10x8xbf16>, vector<10x8xf32> -> vector<10x8xf32>
    %128 = tpu.concatenate %61, %83, %105, %127 in 1 : vector<10x8xf32>, vector<10x8xf32>, vector<10x8xf32>, vector<10x8xf32> -> vector<10x32xf32>
    %129 = arith.truncf %128 : vector<10x32xf32> to vector<10x32xbf16>
    %cst_38 = arith.constant dense<0.000000e+00> : vector<10x32xf32>
    %130 = tpu.matmul %129, %5, %cst_38 {dimension_numbers = #tpu.dot_dimension_numbers<[1], [0], [0], [1], [0, 0, 1, 1], [], []>} : vector<10x32xbf16>, vector<32x32xbf16>, vector<10x32xf32> -> vector<10x32xf32>
    %131 = arith.addf %2, %130 : vector<10x32xf32>
    %132 = vector.extract_strided_slice %0 {offsets = [3, 0], sizes = [1, 32], strides = [1, 1]} : vector<22x128xf32> to vector<1x32xf32>
    %133 = vector.broadcast %132 : vector<1x32xf32> to vector<10x32xf32>
    %134 = arith.addf %131, %133 : vector<10x32xf32>
    %135 = vector.extract_strided_slice %0 {offsets = [4, 0], sizes = [1, 32], strides = [1, 1]} : vector<22x128xf32> to vector<1x32xf32>
    %136 = vector.extract_strided_slice %0 {offsets = [5, 0], sizes = [1, 32], strides = [1, 1]} : vector<22x128xf32> to vector<1x32xf32>
    %cst_39 = arith.constant dense<0.000000e+00> : vector<10xf32>
    %137 = vector.multi_reduction <add>, %134, %cst_39 [1] : vector<10x32xf32> to vector<10xf32>
    %138 = vector.shape_cast %137 : vector<10xf32> to vector<10x1xf32>
    %cst_40 = arith.constant 3.200000e+01 : f32
    %139 = vector.broadcast %cst_40 : f32 to vector<10x1xf32>
    %140 = arith.divf %138, %139 : vector<10x1xf32>
    %141 = vector.broadcast %140 : vector<10x1xf32> to vector<10x32xf32>
    %142 = arith.subf %134, %141 : vector<10x32xf32>
    %143 = arith.mulf %142, %142 : vector<10x32xf32>
    %cst_41 = arith.constant dense<0.000000e+00> : vector<10xf32>
    %144 = vector.multi_reduction <add>, %143, %cst_41 [1] : vector<10x32xf32> to vector<10xf32>
    %145 = vector.shape_cast %144 : vector<10xf32> to vector<10x1xf32>
    %cst_42 = arith.constant 3.200000e+01 : f32
    %146 = vector.broadcast %cst_42 : f32 to vector<10x1xf32>
    %147 = arith.divf %145, %146 : vector<10x1xf32>
    %148 = vector.broadcast %140 : vector<10x1xf32> to vector<10x32xf32>
    %149 = arith.subf %134, %148 : vector<10x32xf32>
    %cst_43 = arith.constant 9.99999997E-7 : f32
    %150 = vector.broadcast %cst_43 : f32 to vector<10x1xf32>
    %151 = arith.addf %147, %150 : vector<10x1xf32>
    %152 = math.rsqrt %151 : vector<10x1xf32>
    %153 = vector.broadcast %152 : vector<10x1xf32> to vector<10x32xf32>
    %154 = arith.mulf %149, %153 : vector<10x32xf32>
    %155 = vector.broadcast %135 : vector<1x32xf32> to vector<10x32xf32>
    %156 = arith.mulf %154, %155 : vector<10x32xf32>
    %157 = vector.broadcast %136 : vector<1x32xf32> to vector<10x32xf32>
    %158 = arith.addf %156, %157 : vector<10x32xf32>
    %159 = arith.truncf %158 : vector<10x32xf32> to vector<10x32xbf16>
    %cst_44 = arith.constant dense<0.000000e+00> : vector<10x128xf32>
    %160 = tpu.matmul %159, %6, %cst_44 {dimension_numbers = #tpu.dot_dimension_numbers<[1], [0], [0], [1], [0, 0, 1, 1], [], []>} : vector<10x32xbf16>, vector<32x128xbf16>, vector<10x128xf32> -> vector<10x128xf32>
    %161 = vector.extract_strided_slice %0 {offsets = [6, 0], sizes = [1, 128], strides = [1, 1]} : vector<22x128xf32> to vector<1x128xf32>
    %162 = vector.broadcast %161 : vector<1x128xf32> to vector<10x128xf32>
    %163 = arith.addf %160, %162 : vector<10x128xf32>
    %164 = arith.mulf %163, %163 : vector<10x128xf32>
    %165 = arith.mulf %163, %164 : vector<10x128xf32>
    %cst_45 = arith.constant 4.471500e-02 : f32
    %166 = vector.broadcast %cst_45 : f32 to vector<10x128xf32>
    %167 = arith.mulf %166, %165 : vector<10x128xf32>
    %168 = arith.addf %163, %167 : vector<10x128xf32>
    %cst_46 = arith.constant 0.797884583 : f32
    %169 = vector.broadcast %cst_46 : f32 to vector<10x128xf32>
    %170 = arith.mulf %169, %168 : vector<10x128xf32>
    %171 = math.tanh %170 : vector<10x128xf32>
    %cst_47 = arith.constant 1.000000e+00 : f32
    %172 = vector.broadcast %cst_47 : f32 to vector<10x128xf32>
    %173 = arith.addf %172, %171 : vector<10x128xf32>
    %cst_48 = arith.constant 5.000000e-01 : f32
    %174 = vector.broadcast %cst_48 : f32 to vector<10x128xf32>
    %175 = arith.mulf %174, %173 : vector<10x128xf32>
    %176 = arith.mulf %163, %175 : vector<10x128xf32>
    %177 = arith.truncf %176 : vector<10x128xf32> to vector<10x128xbf16>
    %cst_49 = arith.constant dense<0.000000e+00> : vector<10x32xf32>
    %178 = tpu.matmul %177, %7, %cst_49 {dimension_numbers = #tpu.dot_dimension_numbers<[1], [0], [0], [1], [0, 0, 1, 1], [], []>} : vector<10x128xbf16>, vector<128x32xbf16>, vector<10x32xf32> -> vector<10x32xf32>
    %179 = arith.addf %134, %178 : vector<10x32xf32>
    %180 = vector.extract_strided_slice %0 {offsets = [7, 0], sizes = [1, 32], strides = [1, 1]} : vector<22x128xf32> to vector<1x32xf32>
    %181 = vector.broadcast %180 : vector<1x32xf32> to vector<10x32xf32>
    %182 = arith.addf %179, %181 : vector<10x32xf32>
    %183 = vector.extract_strided_slice %0 {offsets = [8, 0], sizes = [1, 32], strides = [1, 1]} : vector<22x128xf32> to vector<1x32xf32>
    %184 = vector.extract_strided_slice %0 {offsets = [9, 0], sizes = [1, 32], strides = [1, 1]} : vector<22x128xf32> to vector<1x32xf32>
    %cst_50 = arith.constant dense<0.000000e+00> : vector<10xf32>
    %185 = vector.multi_reduction <add>, %182, %cst_50 [1] : vector<10x32xf32> to vector<10xf32>
    %186 = vector.shape_cast %185 : vector<10xf32> to vector<10x1xf32>
    %cst_51 = arith.constant 3.200000e+01 : f32
    %187 = vector.broadcast %cst_51 : f32 to vector<10x1xf32>
    %188 = arith.divf %186, %187 : vector<10x1xf32>
    %189 = vector.broadcast %188 : vector<10x1xf32> to vector<10x32xf32>
    %190 = arith.subf %182, %189 : vector<10x32xf32>
    %191 = arith.mulf %190, %190 : vector<10x32xf32>
    %cst_52 = arith.constant dense<0.000000e+00> : vector<10xf32>
    %192 = vector.multi_reduction <add>, %191, %cst_52 [1] : vector<10x32xf32> to vector<10xf32>
    %193 = vector.shape_cast %192 : vector<10xf32> to vector<10x1xf32>
    %cst_53 = arith.constant 3.200000e+01 : f32
    %194 = vector.broadcast %cst_53 : f32 to vector<10x1xf32>
    %195 = arith.divf %193, %194 : vector<10x1xf32>
    %196 = vector.broadcast %188 : vector<10x1xf32> to vector<10x32xf32>
    %197 = arith.subf %182, %196 : vector<10x32xf32>
    %cst_54 = arith.constant 9.99999997E-7 : f32
    %198 = vector.broadcast %cst_54 : f32 to vector<10x1xf32>
    %199 = arith.addf %195, %198 : vector<10x1xf32>
    %200 = math.rsqrt %199 : vector<10x1xf32>
    %201 = vector.broadcast %200 : vector<10x1xf32> to vector<10x32xf32>
    %202 = arith.mulf %197, %201 : vector<10x32xf32>
    %203 = vector.broadcast %183 : vector<1x32xf32> to vector<10x32xf32>
    %204 = arith.mulf %202, %203 : vector<10x32xf32>
    %205 = vector.broadcast %184 : vector<1x32xf32> to vector<10x32xf32>
    %206 = arith.addf %204, %205 : vector<10x32xf32>
    %c0_55 = arith.constant 0 : index
    %c0_56 = arith.constant 0 : index
    %207 = vector.load %arg2[%c0_55, %c0_56] : memref<8x32xf32, #tpu.memory_space<vmem>>, vector<8x32xf32>
    %208 = vector.extract_strided_slice %0 {offsets = [10, 0], sizes = [1, 32], strides = [1, 1]} : vector<22x128xf32> to vector<1x32xf32>
    %209 = vector.extract_strided_slice %0 {offsets = [11, 0], sizes = [1, 32], strides = [1, 1]} : vector<22x128xf32> to vector<1x32xf32>
    %cst_57 = arith.constant dense<0.000000e+00> : vector<8xf32>
    %210 = vector.multi_reduction <add>, %207, %cst_57 [1] : vector<8x32xf32> to vector<8xf32>
    %211 = vector.shape_cast %210 : vector<8xf32> to vector<8x1xf32>
    %cst_58 = arith.constant 3.200000e+01 : f32
    %212 = vector.broadcast %cst_58 : f32 to vector<8x1xf32>
    %213 = arith.divf %211, %212 : vector<8x1xf32>
    %214 = vector.broadcast %213 : vector<8x1xf32> to vector<8x32xf32>
    %215 = arith.subf %207, %214 : vector<8x32xf32>
    %216 = arith.mulf %215, %215 : vector<8x32xf32>
    %cst_59 = arith.constant dense<0.000000e+00> : vector<8xf32>
    %217 = vector.multi_reduction <add>, %216, %cst_59 [1] : vector<8x32xf32> to vector<8xf32>
    %218 = vector.shape_cast %217 : vector<8xf32> to vector<8x1xf32>
    %cst_60 = arith.constant 3.200000e+01 : f32
    %219 = vector.broadcast %cst_60 : f32 to vector<8x1xf32>
    %220 = arith.divf %218, %219 : vector<8x1xf32>
    %221 = vector.broadcast %213 : vector<8x1xf32> to vector<8x32xf32>
    %222 = arith.subf %207, %221 : vector<8x32xf32>
    %cst_61 = arith.constant 9.99999997E-7 : f32
    %223 = vector.broadcast %cst_61 : f32 to vector<8x1xf32>
    %224 = arith.addf %220, %223 : vector<8x1xf32>
    %225 = math.rsqrt %224 : vector<8x1xf32>
    %226 = vector.broadcast %225 : vector<8x1xf32> to vector<8x32xf32>
    %227 = arith.mulf %222, %226 : vector<8x32xf32>
    %228 = vector.broadcast %208 : vector<1x32xf32> to vector<8x32xf32>
    %229 = arith.mulf %227, %228 : vector<8x32xf32>
    %230 = vector.broadcast %209 : vector<1x32xf32> to vector<8x32xf32>
    %231 = arith.addf %229, %230 : vector<8x32xf32>
    %232 = vector.extract_strided_slice %0 {offsets = [12, 0], sizes = [1, 32], strides = [1, 1]} : vector<22x128xf32> to vector<1x32xf32>
    %233 = vector.extract_strided_slice %0 {offsets = [13, 0], sizes = [1, 32], strides = [1, 1]} : vector<22x128xf32> to vector<1x32xf32>
    %cst_62 = arith.constant dense<0.000000e+00> : vector<10xf32>
    %234 = vector.multi_reduction <add>, %206, %cst_62 [1] : vector<10x32xf32> to vector<10xf32>
    %235 = vector.shape_cast %234 : vector<10xf32> to vector<10x1xf32>
    %cst_63 = arith.constant 3.200000e+01 : f32
    %236 = vector.broadcast %cst_63 : f32 to vector<10x1xf32>
    %237 = arith.divf %235, %236 : vector<10x1xf32>
    %238 = vector.broadcast %237 : vector<10x1xf32> to vector<10x32xf32>
    %239 = arith.subf %206, %238 : vector<10x32xf32>
    %240 = arith.mulf %239, %239 : vector<10x32xf32>
    %cst_64 = arith.constant dense<0.000000e+00> : vector<10xf32>
    %241 = vector.multi_reduction <add>, %240, %cst_64 [1] : vector<10x32xf32> to vector<10xf32>
    %242 = vector.shape_cast %241 : vector<10xf32> to vector<10x1xf32>
    %cst_65 = arith.constant 3.200000e+01 : f32
    %243 = vector.broadcast %cst_65 : f32 to vector<10x1xf32>
    %244 = arith.divf %242, %243 : vector<10x1xf32>
    %245 = vector.broadcast %237 : vector<10x1xf32> to vector<10x32xf32>
    %246 = arith.subf %206, %245 : vector<10x32xf32>
    %cst_66 = arith.constant 9.99999997E-7 : f32
    %247 = vector.broadcast %cst_66 : f32 to vector<10x1xf32>
    %248 = arith.addf %244, %247 : vector<10x1xf32>
    %249 = math.rsqrt %248 : vector<10x1xf32>
    %250 = vector.broadcast %249 : vector<10x1xf32> to vector<10x32xf32>
    %251 = arith.mulf %246, %250 : vector<10x32xf32>
    %252 = vector.broadcast %232 : vector<1x32xf32> to vector<10x32xf32>
    %253 = arith.mulf %251, %252 : vector<10x32xf32>
    %254 = vector.broadcast %233 : vector<1x32xf32> to vector<10x32xf32>
    %255 = arith.addf %253, %254 : vector<10x32xf32>
    %c0_67 = arith.constant 0 : index
    %c0_68 = arith.constant 0 : index
    %256 = vector.load %arg10[%c0_67, %c0_68] : memref<32x32xbf16, #tpu.memory_space<vmem>>, vector<32x32xbf16>
    %257 = arith.truncf %231 : vector<8x32xf32> to vector<8x32xbf16>
    %cst_69 = arith.constant dense<0.000000e+00> : vector<8x32xf32>
    %258 = tpu.matmul %257, %256, %cst_69 {dimension_numbers = #tpu.dot_dimension_numbers<[1], [0], [0], [1], [0, 0, 1, 1], [], []>} : vector<8x32xbf16>, vector<32x32xbf16>, vector<8x32xf32> -> vector<8x32xf32>
    %259 = vector.extract_strided_slice %0 {offsets = [14, 0], sizes = [1, 32], strides = [1, 1]} : vector<22x128xf32> to vector<1x32xf32>
    %260 = vector.broadcast %259 : vector<1x32xf32> to vector<8x32xf32>
    %261 = arith.addf %258, %260 : vector<8x32xf32>
    %c0_70 = arith.constant 0 : index
    %c0_71 = arith.constant 0 : index
    %262 = vector.load %arg11[%c0_70, %c0_71] : memref<32x64xbf16, #tpu.memory_space<vmem>>, vector<32x64xbf16>
    %263 = arith.truncf %255 : vector<10x32xf32> to vector<10x32xbf16>
    %cst_72 = arith.constant dense<0.000000e+00> : vector<10x64xf32>
    %264 = tpu.matmul %263, %262, %cst_72 {dimension_numbers = #tpu.dot_dimension_numbers<[1], [0], [0], [1], [0, 0, 1, 1], [], []>} : vector<10x32xbf16>, vector<32x64xbf16>, vector<10x64xf32> -> vector<10x64xf32>
    %265 = vector.extract_strided_slice %0 {offsets = [15, 0], sizes = [1, 64], strides = [1, 1]} : vector<22x128xf32> to vector<1x64xf32>
    %266 = vector.broadcast %265 : vector<1x64xf32> to vector<10x64xf32>
    %267 = arith.addf %264, %266 : vector<10x64xf32>
    %268 = vector.extract_strided_slice %267 {offsets = [0, 0], sizes = [10, 32], strides = [1, 1]} : vector<10x64xf32> to vector<10x32xf32>
    %269 = vector.extract_strided_slice %267 {offsets = [0, 32], sizes = [10, 32], strides = [1, 1]} : vector<10x64xf32> to vector<10x32xf32>
    %270 = tpu.concatenate %261, %261 in 0 : vector<8x32xf32>, vector<8x32xf32> -> vector<16x32xf32>
    %271 = tpu.concatenate %207, %207 in 0 : vector<8x32xf32>, vector<8x32xf32> -> vector<16x32xf32>
    %c0_73 = arith.constant 0 : index
    %c0_74 = arith.constant 0 : index
    %272 = vector.load %arg12[%c0_73, %c0_74] : memref<32x32xbf16, #tpu.memory_space<vmem>>, vector<32x32xbf16>
    %c0_75 = arith.constant 0 : index
    %c0_76 = arith.constant 0 : index
    %273 = vector.load %arg4[%c0_75, %c0_76] : memref<16x10xf32, #tpu.memory_space<vmem>>, vector<16x10xf32>
    %274 = vector.extract_strided_slice %270 {offsets = [0, 0], sizes = [16, 8], strides = [1, 1]} : vector<16x32xf32> to vector<16x8xf32>
    %275 = arith.truncf %274 : vector<16x8xf32> to vector<16x8xbf16>
    %276 = vector.extract_strided_slice %268 {offsets = [0, 0], sizes = [10, 8], strides = [1, 1]} : vector<10x32xf32> to vector<10x8xf32>
    %277 = arith.truncf %276 : vector<10x8xf32> to vector<10x8xbf16>
    %cst_77 = arith.constant dense<0.000000e+00> : vector<16x10xf32>
    %278 = tpu.matmul %275, %277, %cst_77 {dimension_numbers = #tpu.dot_dimension_numbers<[1], [1], [0], [0], [0, 0, 1, 0], [], []>} : vector<16x8xbf16>, vector<10x8xbf16>, vector<16x10xf32> -> vector<16x10xf32>
    %cst_78 = arith.constant 0.353553385 : f32
    %279 = vector.broadcast %cst_78 : f32 to vector<16x10xf32>
    %280 = arith.mulf %278, %279 : vector<16x10xf32>
    %281 = arith.addf %280, %273 : vector<16x10xf32>
    %cst_79 = arith.constant dense<0xFF800000> : vector<16xf32>
    %282 = vector.multi_reduction <maximumf>, %281, %cst_79 [1] : vector<16x10xf32> to vector<16xf32>
    %283 = vector.shape_cast %282 : vector<16xf32> to vector<16x1xf32>
    %284 = vector.broadcast %283 : vector<16x1xf32> to vector<16x10xf32>
    %285 = arith.subf %281, %284 : vector<16x10xf32>
    %286 = math.exp %285 : vector<16x10xf32>
    %cst_80 = arith.constant dense<0.000000e+00> : vector<16xf32>
    %287 = vector.multi_reduction <add>, %286, %cst_80 [1] : vector<16x10xf32> to vector<16xf32>
    %288 = vector.shape_cast %287 : vector<16xf32> to vector<16x1xf32>
    %289 = tpu.reciprocal %288 {approx = true} : vector<16x1xf32> -> vector<16x1xf32>
    %290 = vector.broadcast %289 : vector<16x1xf32> to vector<16x10xf32>
    %291 = arith.mulf %286, %290 : vector<16x10xf32>
    %292 = arith.truncf %291 : vector<16x10xf32> to vector<16x10xbf16>
    %293 = vector.extract_strided_slice %269 {offsets = [0, 0], sizes = [10, 8], strides = [1, 1]} : vector<10x32xf32> to vector<10x8xf32>
    %294 = arith.truncf %293 : vector<10x8xf32> to vector<10x8xbf16>
    %cst_81 = arith.constant dense<0.000000e+00> : vector<16x8xf32>
    %295 = tpu.matmul %292, %294, %cst_81 {dimension_numbers = #tpu.dot_dimension_numbers<[1], [0], [0], [1], [0, 0, 1, 1], [], []>} : vector<16x10xbf16>, vector<10x8xbf16>, vector<16x8xf32> -> vector<16x8xf32>
    %296 = vector.extract_strided_slice %270 {offsets = [0, 8], sizes = [16, 8], strides = [1, 1]} : vector<16x32xf32> to vector<16x8xf32>
    %297 = arith.truncf %296 : vector<16x8xf32> to vector<16x8xbf16>
    %298 = vector.extract_strided_slice %268 {offsets = [0, 8], sizes = [10, 8], strides = [1, 1]} : vector<10x32xf32> to vector<10x8xf32>
    %299 = arith.truncf %298 : vector<10x8xf32> to vector<10x8xbf16>
    %cst_82 = arith.constant dense<0.000000e+00> : vector<16x10xf32>
    %300 = tpu.matmul %297, %299, %cst_82 {dimension_numbers = #tpu.dot_dimension_numbers<[1], [1], [0], [0], [0, 0, 1, 0], [], []>} : vector<16x8xbf16>, vector<10x8xbf16>, vector<16x10xf32> -> vector<16x10xf32>
    %cst_83 = arith.constant 0.353553385 : f32
    %301 = vector.broadcast %cst_83 : f32 to vector<16x10xf32>
    %302 = arith.mulf %300, %301 : vector<16x10xf32>
    %303 = arith.addf %302, %273 : vector<16x10xf32>
    %cst_84 = arith.constant dense<0xFF800000> : vector<16xf32>
    %304 = vector.multi_reduction <maximumf>, %303, %cst_84 [1] : vector<16x10xf32> to vector<16xf32>
    %305 = vector.shape_cast %304 : vector<16xf32> to vector<16x1xf32>
    %306 = vector.broadcast %305 : vector<16x1xf32> to vector<16x10xf32>
    %307 = arith.subf %303, %306 : vector<16x10xf32>
    %308 = math.exp %307 : vector<16x10xf32>
    %cst_85 = arith.constant dense<0.000000e+00> : vector<16xf32>
    %309 = vector.multi_reduction <add>, %308, %cst_85 [1] : vector<16x10xf32> to vector<16xf32>
    %310 = vector.shape_cast %309 : vector<16xf32> to vector<16x1xf32>
    %311 = tpu.reciprocal %310 {approx = true} : vector<16x1xf32> -> vector<16x1xf32>
    %312 = vector.broadcast %311 : vector<16x1xf32> to vector<16x10xf32>
    %313 = arith.mulf %308, %312 : vector<16x10xf32>
    %314 = arith.truncf %313 : vector<16x10xf32> to vector<16x10xbf16>
    %315 = vector.extract_strided_slice %269 {offsets = [0, 8], sizes = [10, 8], strides = [1, 1]} : vector<10x32xf32> to vector<10x8xf32>
    %316 = arith.truncf %315 : vector<10x8xf32> to vector<10x8xbf16>
    %cst_86 = arith.constant dense<0.000000e+00> : vector<16x8xf32>
    %317 = tpu.matmul %314, %316, %cst_86 {dimension_numbers = #tpu.dot_dimension_numbers<[1], [0], [0], [1], [0, 0, 1, 1], [], []>} : vector<16x10xbf16>, vector<10x8xbf16>, vector<16x8xf32> -> vector<16x8xf32>
    %318 = vector.extract_strided_slice %270 {offsets = [0, 16], sizes = [16, 8], strides = [1, 1]} : vector<16x32xf32> to vector<16x8xf32>
    %319 = arith.truncf %318 : vector<16x8xf32> to vector<16x8xbf16>
    %320 = vector.extract_strided_slice %268 {offsets = [0, 16], sizes = [10, 8], strides = [1, 1]} : vector<10x32xf32> to vector<10x8xf32>
    %321 = arith.truncf %320 : vector<10x8xf32> to vector<10x8xbf16>
    %cst_87 = arith.constant dense<0.000000e+00> : vector<16x10xf32>
    %322 = tpu.matmul %319, %321, %cst_87 {dimension_numbers = #tpu.dot_dimension_numbers<[1], [1], [0], [0], [0, 0, 1, 0], [], []>} : vector<16x8xbf16>, vector<10x8xbf16>, vector<16x10xf32> -> vector<16x10xf32>
    %cst_88 = arith.constant 0.353553385 : f32
    %323 = vector.broadcast %cst_88 : f32 to vector<16x10xf32>
    %324 = arith.mulf %322, %323 : vector<16x10xf32>
    %325 = arith.addf %324, %273 : vector<16x10xf32>
    %cst_89 = arith.constant dense<0xFF800000> : vector<16xf32>
    %326 = vector.multi_reduction <maximumf>, %325, %cst_89 [1] : vector<16x10xf32> to vector<16xf32>
    %327 = vector.shape_cast %326 : vector<16xf32> to vector<16x1xf32>
    %328 = vector.broadcast %327 : vector<16x1xf32> to vector<16x10xf32>
    %329 = arith.subf %325, %328 : vector<16x10xf32>
    %330 = math.exp %329 : vector<16x10xf32>
    %cst_90 = arith.constant dense<0.000000e+00> : vector<16xf32>
    %331 = vector.multi_reduction <add>, %330, %cst_90 [1] : vector<16x10xf32> to vector<16xf32>
    %332 = vector.shape_cast %331 : vector<16xf32> to vector<16x1xf32>
    %333 = tpu.reciprocal %332 {approx = true} : vector<16x1xf32> -> vector<16x1xf32>
    %334 = vector.broadcast %333 : vector<16x1xf32> to vector<16x10xf32>
    %335 = arith.mulf %330, %334 : vector<16x10xf32>
    %336 = arith.truncf %335 : vector<16x10xf32> to vector<16x10xbf16>
    %337 = vector.extract_strided_slice %269 {offsets = [0, 16], sizes = [10, 8], strides = [1, 1]} : vector<10x32xf32> to vector<10x8xf32>
    %338 = arith.truncf %337 : vector<10x8xf32> to vector<10x8xbf16>
    %cst_91 = arith.constant dense<0.000000e+00> : vector<16x8xf32>
    %339 = tpu.matmul %336, %338, %cst_91 {dimension_numbers = #tpu.dot_dimension_numbers<[1], [0], [0], [1], [0, 0, 1, 1], [], []>} : vector<16x10xbf16>, vector<10x8xbf16>, vector<16x8xf32> -> vector<16x8xf32>
    %340 = vector.extract_strided_slice %270 {offsets = [0, 24], sizes = [16, 8], strides = [1, 1]} : vector<16x32xf32> to vector<16x8xf32>
    %341 = arith.truncf %340 : vector<16x8xf32> to vector<16x8xbf16>
    %342 = vector.extract_strided_slice %268 {offsets = [0, 24], sizes = [10, 8], strides = [1, 1]} : vector<10x32xf32> to vector<10x8xf32>
    %343 = arith.truncf %342 : vector<10x8xf32> to vector<10x8xbf16>
    %cst_92 = arith.constant dense<0.000000e+00> : vector<16x10xf32>
    %344 = tpu.matmul %341, %343, %cst_92 {dimension_numbers = #tpu.dot_dimension_numbers<[1], [1], [0], [0], [0, 0, 1, 0], [], []>} : vector<16x8xbf16>, vector<10x8xbf16>, vector<16x10xf32> -> vector<16x10xf32>
    %cst_93 = arith.constant 0.353553385 : f32
    %345 = vector.broadcast %cst_93 : f32 to vector<16x10xf32>
    %346 = arith.mulf %344, %345 : vector<16x10xf32>
    %347 = arith.addf %346, %273 : vector<16x10xf32>
    %cst_94 = arith.constant dense<0xFF800000> : vector<16xf32>
    %348 = vector.multi_reduction <maximumf>, %347, %cst_94 [1] : vector<16x10xf32> to vector<16xf32>
    %349 = vector.shape_cast %348 : vector<16xf32> to vector<16x1xf32>
    %350 = vector.broadcast %349 : vector<16x1xf32> to vector<16x10xf32>
    %351 = arith.subf %347, %350 : vector<16x10xf32>
    %352 = math.exp %351 : vector<16x10xf32>
    %cst_95 = arith.constant dense<0.000000e+00> : vector<16xf32>
    %353 = vector.multi_reduction <add>, %352, %cst_95 [1] : vector<16x10xf32> to vector<16xf32>
    %354 = vector.shape_cast %353 : vector<16xf32> to vector<16x1xf32>
    %355 = tpu.reciprocal %354 {approx = true} : vector<16x1xf32> -> vector<16x1xf32>
    %356 = vector.broadcast %355 : vector<16x1xf32> to vector<16x10xf32>
    %357 = arith.mulf %352, %356 : vector<16x10xf32>
    %358 = arith.truncf %357 : vector<16x10xf32> to vector<16x10xbf16>
    %359 = vector.extract_strided_slice %269 {offsets = [0, 24], sizes = [10, 8], strides = [1, 1]} : vector<10x32xf32> to vector<10x8xf32>
    %360 = arith.truncf %359 : vector<10x8xf32> to vector<10x8xbf16>
    %cst_96 = arith.constant dense<0.000000e+00> : vector<16x8xf32>
    %361 = tpu.matmul %358, %360, %cst_96 {dimension_numbers = #tpu.dot_dimension_numbers<[1], [0], [0], [1], [0, 0, 1, 1], [], []>} : vector<16x10xbf16>, vector<10x8xbf16>, vector<16x8xf32> -> vector<16x8xf32>
    %362 = tpu.concatenate %295, %317, %339, %361 in 1 : vector<16x8xf32>, vector<16x8xf32>, vector<16x8xf32>, vector<16x8xf32> -> vector<16x32xf32>
    %363 = arith.truncf %362 : vector<16x32xf32> to vector<16x32xbf16>
    %cst_97 = arith.constant dense<0.000000e+00> : vector<16x32xf32>
    %364 = tpu.matmul %363, %272, %cst_97 {dimension_numbers = #tpu.dot_dimension_numbers<[1], [0], [0], [1], [0, 0, 1, 1], [], []>} : vector<16x32xbf16>, vector<32x32xbf16>, vector<16x32xf32> -> vector<16x32xf32>
    %365 = arith.addf %271, %364 : vector<16x32xf32>
    %366 = vector.extract_strided_slice %0 {offsets = [16, 0], sizes = [1, 32], strides = [1, 1]} : vector<22x128xf32> to vector<1x32xf32>
    %367 = vector.broadcast %366 : vector<1x32xf32> to vector<16x32xf32>
    %368 = arith.addf %365, %367 : vector<16x32xf32>
    %369 = vector.extract_strided_slice %0 {offsets = [17, 0], sizes = [1, 32], strides = [1, 1]} : vector<22x128xf32> to vector<1x32xf32>
    %370 = vector.extract_strided_slice %0 {offsets = [18, 0], sizes = [1, 32], strides = [1, 1]} : vector<22x128xf32> to vector<1x32xf32>
    %cst_98 = arith.constant dense<0.000000e+00> : vector<16xf32>
    %371 = vector.multi_reduction <add>, %368, %cst_98 [1] : vector<16x32xf32> to vector<16xf32>
    %372 = vector.shape_cast %371 : vector<16xf32> to vector<16x1xf32>
    %cst_99 = arith.constant 3.200000e+01 : f32
    %373 = vector.broadcast %cst_99 : f32 to vector<16x1xf32>
    %374 = arith.divf %372, %373 : vector<16x1xf32>
    %375 = vector.broadcast %374 : vector<16x1xf32> to vector<16x32xf32>
    %376 = arith.subf %368, %375 : vector<16x32xf32>
    %377 = arith.mulf %376, %376 : vector<16x32xf32>
    %cst_100 = arith.constant dense<0.000000e+00> : vector<16xf32>
    %378 = vector.multi_reduction <add>, %377, %cst_100 [1] : vector<16x32xf32> to vector<16xf32>
    %379 = vector.shape_cast %378 : vector<16xf32> to vector<16x1xf32>
    %cst_101 = arith.constant 3.200000e+01 : f32
    %380 = vector.broadcast %cst_101 : f32 to vector<16x1xf32>
    %381 = arith.divf %379, %380 : vector<16x1xf32>
    %382 = vector.broadcast %374 : vector<16x1xf32> to vector<16x32xf32>
    %383 = arith.subf %368, %382 : vector<16x32xf32>
    %cst_102 = arith.constant 9.99999997E-7 : f32
    %384 = vector.broadcast %cst_102 : f32 to vector<16x1xf32>
    %385 = arith.addf %381, %384 : vector<16x1xf32>
    %386 = math.rsqrt %385 : vector<16x1xf32>
    %387 = vector.broadcast %386 : vector<16x1xf32> to vector<16x32xf32>
    %388 = arith.mulf %383, %387 : vector<16x32xf32>
    %389 = vector.broadcast %369 : vector<1x32xf32> to vector<16x32xf32>
    %390 = arith.mulf %388, %389 : vector<16x32xf32>
    %391 = vector.broadcast %370 : vector<1x32xf32> to vector<16x32xf32>
    %392 = arith.addf %390, %391 : vector<16x32xf32>
    %c0_103 = arith.constant 0 : index
    %c0_104 = arith.constant 0 : index
    %393 = vector.load %arg13[%c0_103, %c0_104] : memref<32x128xbf16, #tpu.memory_space<vmem>>, vector<32x128xbf16>
    %394 = arith.truncf %392 : vector<16x32xf32> to vector<16x32xbf16>
    %cst_105 = arith.constant dense<0.000000e+00> : vector<16x128xf32>
    %395 = tpu.matmul %394, %393, %cst_105 {dimension_numbers = #tpu.dot_dimension_numbers<[1], [0], [0], [1], [0, 0, 1, 1], [], []>} : vector<16x32xbf16>, vector<32x128xbf16>, vector<16x128xf32> -> vector<16x128xf32>
    %396 = vector.extract_strided_slice %0 {offsets = [19, 0], sizes = [1, 128], strides = [1, 1]} : vector<22x128xf32> to vector<1x128xf32>
    %397 = vector.broadcast %396 : vector<1x128xf32> to vector<16x128xf32>
    %398 = arith.addf %395, %397 : vector<16x128xf32>
    %399 = arith.mulf %398, %398 : vector<16x128xf32>
    %400 = arith.mulf %398, %399 : vector<16x128xf32>
    %cst_106 = arith.constant 4.471500e-02 : f32
    %401 = vector.broadcast %cst_106 : f32 to vector<16x128xf32>
    %402 = arith.mulf %401, %400 : vector<16x128xf32>
    %403 = arith.addf %398, %402 : vector<16x128xf32>
    %cst_107 = arith.constant 0.797884583 : f32
    %404 = vector.broadcast %cst_107 : f32 to vector<16x128xf32>
    %405 = arith.mulf %404, %403 : vector<16x128xf32>
    %406 = math.tanh %405 : vector<16x128xf32>
    %cst_108 = arith.constant 1.000000e+00 : f32
    %407 = vector.broadcast %cst_108 : f32 to vector<16x128xf32>
    %408 = arith.addf %407, %406 : vector<16x128xf32>
    %cst_109 = arith.constant 5.000000e-01 : f32
    %409 = vector.broadcast %cst_109 : f32 to vector<16x128xf32>
    %410 = arith.mulf %409, %408 : vector<16x128xf32>
    %411 = arith.mulf %398, %410 : vector<16x128xf32>
    %c0_110 = arith.constant 0 : index
    %c0_111 = arith.constant 0 : index
    %412 = vector.load %arg14[%c0_110, %c0_111] : memref<128x32xbf16, #tpu.memory_space<vmem>>, vector<128x32xbf16>
    %413 = arith.truncf %411 : vector<16x128xf32> to vector<16x128xbf16>
    %cst_112 = arith.constant dense<0.000000e+00> : vector<16x32xf32>
    %414 = tpu.matmul %413, %412, %cst_112 {dimension_numbers = #tpu.dot_dimension_numbers<[1], [0], [0], [1], [0, 0, 1, 1], [], []>} : vector<16x128xbf16>, vector<128x32xbf16>, vector<16x32xf32> -> vector<16x32xf32>
    %415 = arith.addf %368, %414 : vector<16x32xf32>
    %416 = vector.extract_strided_slice %0 {offsets = [20, 0], sizes = [1, 32], strides = [1, 1]} : vector<22x128xf32> to vector<1x32xf32>
    %417 = vector.broadcast %416 : vector<1x32xf32> to vector<16x32xf32>
    %418 = arith.addf %415, %417 : vector<16x32xf32>
    %c0_113 = arith.constant 0 : index
    %c0_114 = arith.constant 0 : index
    %419 = vector.load %arg15[%c0_113, %c0_114] : memref<32x32xbf16, #tpu.memory_space<vmem>>, vector<32x32xbf16>
    %420 = arith.truncf %418 : vector<16x32xf32> to vector<16x32xbf16>
    %cst_115 = arith.constant dense<0.000000e+00> : vector<16x32xf32>
    %421 = tpu.matmul %420, %419, %cst_115 {dimension_numbers = #tpu.dot_dimension_numbers<[1], [0], [0], [1], [0, 0, 1, 1], [], []>} : vector<16x32xbf16>, vector<32x32xbf16>, vector<16x32xf32> -> vector<16x32xf32>
    %422 = vector.extract_strided_slice %0 {offsets = [21, 0], sizes = [1, 32], strides = [1, 1]} : vector<22x128xf32> to vector<1x32xf32>
    %423 = vector.broadcast %422 : vector<1x32xf32> to vector<16x32xf32>
    %424 = arith.addf %421, %423 : vector<16x32xf32>
    %425 = arith.truncf %424 : vector<16x32xf32> to vector<16x32xbf16>
    %c0_116 = arith.constant 0 : index
    %c0_117 = arith.constant 0 : index
    %426 = vector.load %arg16[%c0_116, %c0_117] : memref<16x32xbf16, #tpu.memory_space<vmem>>, vector<16x32xbf16>
    tpu.vector_store %arg16[%c0_116, %c0_117], %425 {strides = array<i32>} : memref<16x32xbf16, #tpu.memory_space<vmem>>, vector<16x32xbf16>,
    return
  }
  func.func @transform_0(%arg0: i32) -> (i32, i32) {
    %c0_i32 = arith.constant 0 : i32
    %c0_i32_0 = arith.constant 0 : i32
    %c0_i32_1 = arith.constant 0 : i32
    return %c0_i32, %c0_i32_0 : i32, i32
  }
  func.func @transform_1(%arg0: i32) -> (i32, i32) {
    %c0_i32 = arith.constant 0 : i32
    %c0_i32_0 = arith.constant 0 : i32
    %c0_i32_1 = arith.constant 0 : i32
    return %c0_i32, %c0_i32_0 : i32, i32
  }
  func.func @transform_2(%arg0: i32) -> (i32, i32) {
    %c0_i32 = arith.constant 0 : i32
    %c0_i32_0 = arith.constant 0 : i32
    %c0_i32_1 = arith.constant 0 : i32
    return %c0_i32, %c0_i32_0 : i32, i32
  }
  func.func @transform_3(%arg0: i32) -> (i32, i32) {
    %c0_i32 = arith.constant 0 : i32
    %c0_i32_0 = arith.constant 0 : i32
    %c0_i32_1 = arith.constant 0 : i32
    return %c0_i32, %c0_i32_0 : i32, i32
  }
  func.func @transform_4(%arg0: i32) -> (i32, i32) {
    %c0_i32 = arith.constant 0 : i32
    %c0_i32_0 = arith.constant 0 : i32
    %c0_i32_1 = arith.constant 0 : i32
    return %c0_i32, %c0_i32_0 : i32, i32
  }
  func.func @transform_5(%arg0: i32) -> (i32, i32) {
    %c0_i32 = arith.constant 0 : i32
    %c0_i32_0 = arith.constant 0 : i32
    %c0_i32_1 = arith.constant 0 : i32
    return %c0_i32, %c0_i32_0 : i32, i32
  }
  func.func @transform_6(%arg0: i32) -> (i32, i32) {
    %c0_i32 = arith.constant 0 : i32
    %c0_i32_0 = arith.constant 0 : i32
    %c0_i32_1 = arith.constant 0 : i32
    return %c0_i32, %c0_i32_0 : i32, i32
  }
  func.func @transform_7(%arg0: i32) -> (i32, i32) {
    %c0_i32 = arith.constant 0 : i32
    %c0_i32_0 = arith.constant 0 : i32
    %c0_i32_1 = arith.constant 0 : i32
    return %c0_i32, %c0_i32_0 : i32, i32
  }
  func.func @transform_8(%arg0: i32) -> (i32, i32) {
    %c0_i32 = arith.constant 0 : i32
    %c0_i32_0 = arith.constant 0 : i32
    %c0_i32_1 = arith.constant 0 : i32
    return %c0_i32, %c0_i32_0 : i32, i32
  }
  func.func @transform_9(%arg0: i32) -> (i32, i32) {
    %c0_i32 = arith.constant 0 : i32
    %c0_i32_0 = arith.constant 0 : i32
    %c0_i32_1 = arith.constant 0 : i32
    return %c0_i32, %c0_i32_0 : i32, i32
  }
  func.func @transform_10(%arg0: i32) -> (i32, i32) {
    %c0_i32 = arith.constant 0 : i32
    %c0_i32_0 = arith.constant 0 : i32
    %c0_i32_1 = arith.constant 0 : i32
    return %c0_i32, %c0_i32_0 : i32, i32
  }
  func.func @transform_11(%arg0: i32) -> (i32, i32) {
    %c0_i32 = arith.constant 0 : i32
    %c0_i32_0 = arith.constant 0 : i32
    %c0_i32_1 = arith.constant 0 : i32
    return %c0_i32, %c0_i32_0 : i32, i32
  }
  func.func @transform_12(%arg0: i32) -> (i32, i32) {
    %c0_i32 = arith.constant 0 : i32
    %c0_i32_0 = arith.constant 0 : i32
    %c0_i32_1 = arith.constant 0 : i32
    return %c0_i32, %c0_i32_0 : i32, i32
  }
  func.func @transform_13(%arg0: i32) -> (i32, i32) {
    %c0_i32 = arith.constant 0 : i32
    %c0_i32_0 = arith.constant 0 : i32
    %c0_i32_1 = arith.constant 0 : i32
    return %c0_i32, %c0_i32_0 : i32, i32
  }
  func.func @transform_14(%arg0: i32) -> (i32, i32) {
    %c0_i32 = arith.constant 0 : i32
    %c0_i32_0 = arith.constant 0 : i32
    %c0_i32_1 = arith.constant 0 : i32
    return %c0_i32, %c0_i32_0 : i32, i32
  }
  func.func @transform_15(%arg0: i32) -> (i32, i32) {
    %c0_i32 = arith.constant 0 : i32
    %c0_i32_0 = arith.constant 0 : i32
    %c0_i32_1 = arith.constant 0 : i32
    return %c0_i32, %c0_i32_0 : i32, i32
  }
}

module attributes {stable_mosaic.version = 11 : i64} {
  func.func @_gpt_kernel(%arg0: i32, %arg1: memref<1x64x32xbf16, #tpu.memory_space<vmem>>, %arg2: memref<1x1x64xf32, #tpu.memory_space<vmem>>, %arg3: memref<64x64xf32, #tpu.memory_space<vmem>>, %arg4: memref<64x128xf32, #tpu.memory_space<vmem>>, %arg5: memref<4x64xf32, #tpu.memory_space<vmem>>, %arg6: memref<4x128xf32, #tpu.memory_space<vmem>>, %arg7: memref<13x128xf32, #tpu.memory_space<vmem>>, %arg8: memref<32x96xbf16, #tpu.memory_space<vmem>>, %arg9: memref<32x32xbf16, #tpu.memory_space<vmem>>, %arg10: memref<32x128xbf16, #tpu.memory_space<vmem>>, %arg11: memref<128x32xbf16, #tpu.memory_space<vmem>>, %arg12: memref<32x128xbf16, #tpu.memory_space<vmem>>, %arg13: memref<32x32xbf16, #tpu.memory_space<vmem>>, %arg14: memref<32x128xbf16, #tpu.memory_space<vmem>>, %arg15: memref<1x1x128xf32, #tpu.memory_space<vmem>>) attributes {dimension_semantics = [#tpu.dimension_semantics<parallel>], iteration_bounds = array<i64: 2>, scalar_prefetch = 0 : i64, scratch_operands = 0 : i64, tpu.core_type = #tpu.core_type<tc>, window_params = [{transform_indices = @transform_0, window_bounds = array<i64: 1, 64, 32>}, {transform_indices = @transform_1, window_bounds = array<i64: 1, 1, 64>}, {pipeline_mode = #tpu.pipeline_mode<synchronous>, transform_indices = @transform_2, window_bounds = array<i64: 64, 64>}, {pipeline_mode = #tpu.pipeline_mode<synchronous>, transform_indices = @transform_3, window_bounds = array<i64: 64, 128>}, {pipeline_mode = #tpu.pipeline_mode<synchronous>, transform_indices = @transform_4, window_bounds = array<i64: 4, 64>}, {pipeline_mode = #tpu.pipeline_mode<synchronous>, transform_indices = @transform_5, window_bounds = array<i64: 4, 128>}, {pipeline_mode = #tpu.pipeline_mode<synchronous>, transform_indices = @transform_6, window_bounds = array<i64: 13, 128>}, {pipeline_mode = #tpu.pipeline_mode<synchronous>, transform_indices = @transform_7, window_bounds = array<i64: 32, 96>}, {pipeline_mode = #tpu.pipeline_mode<synchronous>, transform_indices = @transform_8, window_bounds = array<i64: 32, 32>}, {pipeline_mode = #tpu.pipeline_mode<synchronous>, transform_indices = @transform_9, window_bounds = array<i64: 32, 128>}, {pipeline_mode = #tpu.pipeline_mode<synchronous>, transform_indices = @transform_10, window_bounds = array<i64: 128, 32>}, {pipeline_mode = #tpu.pipeline_mode<synchronous>, transform_indices = @transform_11, window_bounds = array<i64: 32, 128>}, {pipeline_mode = #tpu.pipeline_mode<synchronous>, transform_indices = @transform_12, window_bounds = array<i64: 32, 32>}, {pipeline_mode = #tpu.pipeline_mode<synchronous>, transform_indices = @transform_13, window_bounds = array<i64: 32, 128>}, {transform_indices = @transform_14, window_bounds = array<i64: 1, 1, 128>}]} {
    %c0 = arith.constant 0 : index
    %c0_0 = arith.constant 0 : index
    %0 = vector.load %arg7[%c0, %c0_0] : memref<13x128xf32, #tpu.memory_space<vmem>>, vector<13x128xf32>
    %c0_1 = arith.constant 0 : index
    %c0_2 = arith.constant 0 : index
    %c0_3 = arith.constant 0 : index
    %1 = vector.load %arg1[%c0_1, %c0_2, %c0_3] : memref<1x64x32xbf16, #tpu.memory_space<vmem>>, vector<1x64x32xbf16>
    %2 = vector.shape_cast %1 : vector<1x64x32xbf16> to vector<64x32xbf16>
    %3 = arith.extf %2 : vector<64x32xbf16> to vector<64x32xf32>
    %c0_4 = arith.constant 0 : index
    %c0_5 = arith.constant 0 : index
    %4 = vector.load %arg3[%c0_4, %c0_5] : memref<64x64xf32, #tpu.memory_space<vmem>>, vector<64x64xf32>
    %cst = arith.constant 5.000000e-01 : f32
    %5 = vector.broadcast %cst : f32 to vector<64x64xf32>
    %6 = arith.cmpf ogt, %4, %5 : vector<64x64xf32>
    %c0_6 = arith.constant 0 : index
    %c0_7 = arith.constant 0 : index
    %c0_8 = arith.constant 0 : index
    %7 = vector.load %arg2[%c0_6, %c0_7, %c0_8] : memref<1x1x64xf32, #tpu.memory_space<vmem>>, vector<1x1x64xf32>
    %8 = vector.shape_cast %7 : vector<1x1x64xf32> to vector<1x64xf32>
    %cst_9 = arith.constant 5.000000e-01 : f32
    %9 = vector.broadcast %cst_9 : f32 to vector<1x64xf32>
    %10 = arith.cmpf ogt, %8, %9 : vector<1x64xf32>
    %11 = vector.broadcast %10 : vector<1x64xi1> to vector<64x64xi1>
    %12 = arith.andi %6, %11 : vector<64x64xi1>
    %cst_10 = arith.constant 0.000000e+00 : f32
    %cst_11 = arith.constant -1.000000e+09 : f32
    %13 = vector.broadcast %cst_10 : f32 to vector<64x64xf32>
    %14 = vector.broadcast %cst_11 : f32 to vector<64x64xf32>
    %15 = arith.select %12, %13, %14 : vector<64x64xi1>, vector<64x64xf32>
    %c0_12 = arith.constant 0 : index
    %c0_13 = arith.constant 0 : index
    %16 = vector.load %arg8[%c0_12, %c0_13] : memref<32x96xbf16, #tpu.memory_space<vmem>>, vector<32x96xbf16>
    %c0_14 = arith.constant 0 : index
    %c0_15 = arith.constant 0 : index
    %17 = vector.load %arg9[%c0_14, %c0_15] : memref<32x32xbf16, #tpu.memory_space<vmem>>, vector<32x32xbf16>
    %c0_16 = arith.constant 0 : index
    %c0_17 = arith.constant 0 : index
    %18 = vector.load %arg10[%c0_16, %c0_17] : memref<32x128xbf16, #tpu.memory_space<vmem>>, vector<32x128xbf16>
    %c0_18 = arith.constant 0 : index
    %c0_19 = arith.constant 0 : index
    %19 = vector.load %arg11[%c0_18, %c0_19] : memref<128x32xbf16, #tpu.memory_space<vmem>>, vector<128x32xbf16>
    %20 = vector.extract_strided_slice %0 {offsets = [0, 0], sizes = [1, 32], strides = [1, 1]} : vector<13x128xf32> to vector<1x32xf32>
    %21 = vector.extract_strided_slice %0 {offsets = [1, 0], sizes = [1, 32], strides = [1, 1]} : vector<13x128xf32> to vector<1x32xf32>
    %cst_20 = arith.constant dense<0.000000e+00> : vector<64xf32>
    %22 = vector.multi_reduction <add>, %3, %cst_20 [1] : vector<64x32xf32> to vector<64xf32>
    %23 = vector.shape_cast %22 : vector<64xf32> to vector<64x1xf32>
    %cst_21 = arith.constant 3.200000e+01 : f32
    %24 = vector.broadcast %cst_21 : f32 to vector<64x1xf32>
    %25 = arith.divf %23, %24 : vector<64x1xf32>
    %26 = vector.broadcast %25 : vector<64x1xf32> to vector<64x32xf32>
    %27 = arith.subf %3, %26 : vector<64x32xf32>
    %28 = arith.mulf %27, %27 : vector<64x32xf32>
    %cst_22 = arith.constant dense<0.000000e+00> : vector<64xf32>
    %29 = vector.multi_reduction <add>, %28, %cst_22 [1] : vector<64x32xf32> to vector<64xf32>
    %30 = vector.shape_cast %29 : vector<64xf32> to vector<64x1xf32>
    %cst_23 = arith.constant 3.200000e+01 : f32
    %31 = vector.broadcast %cst_23 : f32 to vector<64x1xf32>
    %32 = arith.divf %30, %31 : vector<64x1xf32>
    %33 = vector.broadcast %25 : vector<64x1xf32> to vector<64x32xf32>
    %34 = arith.subf %3, %33 : vector<64x32xf32>
    %cst_24 = arith.constant 9.99999974E-6 : f32
    %35 = vector.broadcast %cst_24 : f32 to vector<64x1xf32>
    %36 = arith.addf %32, %35 : vector<64x1xf32>
    %37 = math.rsqrt %36 : vector<64x1xf32>
    %38 = vector.broadcast %37 : vector<64x1xf32> to vector<64x32xf32>
    %39 = arith.mulf %34, %38 : vector<64x32xf32>
    %40 = vector.broadcast %20 : vector<1x32xf32> to vector<64x32xf32>
    %41 = arith.mulf %39, %40 : vector<64x32xf32>
    %42 = vector.broadcast %21 : vector<1x32xf32> to vector<64x32xf32>
    %43 = arith.addf %41, %42 : vector<64x32xf32>
    %44 = arith.truncf %43 : vector<64x32xf32> to vector<64x32xbf16>
    %cst_25 = arith.constant dense<0.000000e+00> : vector<64x96xf32>
    %45 = tpu.matmul %44, %16, %cst_25 {dimension_numbers = #tpu.dot_dimension_numbers<[1], [0], [0], [1], [0, 0, 1, 1], [], []>} : vector<64x32xbf16>, vector<32x96xbf16>, vector<64x96xf32> -> vector<64x96xf32>
    %46 = vector.extract_strided_slice %0 {offsets = [2, 0], sizes = [1, 96], strides = [1, 1]} : vector<13x128xf32> to vector<1x96xf32>
    %47 = vector.broadcast %46 : vector<1x96xf32> to vector<64x96xf32>
    %48 = arith.addf %45, %47 : vector<64x96xf32>
    %49 = vector.extract_strided_slice %48 {offsets = [0, 0], sizes = [64, 32], strides = [1, 1]} : vector<64x96xf32> to vector<64x32xf32>
    %50 = vector.extract_strided_slice %48 {offsets = [0, 32], sizes = [64, 32], strides = [1, 1]} : vector<64x96xf32> to vector<64x32xf32>
    %51 = vector.extract_strided_slice %48 {offsets = [0, 64], sizes = [64, 32], strides = [1, 1]} : vector<64x96xf32> to vector<64x32xf32>
    %52 = vector.extract_strided_slice %49 {offsets = [0, 0], sizes = [64, 8], strides = [1, 1]} : vector<64x32xf32> to vector<64x8xf32>
    %53 = arith.truncf %52 : vector<64x8xf32> to vector<64x8xbf16>
    %54 = vector.extract_strided_slice %50 {offsets = [0, 0], sizes = [64, 8], strides = [1, 1]} : vector<64x32xf32> to vector<64x8xf32>
    %55 = arith.truncf %54 : vector<64x8xf32> to vector<64x8xbf16>
    %cst_26 = arith.constant dense<0.000000e+00> : vector<64x64xf32>
    %56 = tpu.matmul %53, %55, %cst_26 {dimension_numbers = #tpu.dot_dimension_numbers<[1], [1], [0], [0], [0, 0, 1, 0], [], []>} : vector<64x8xbf16>, vector<64x8xbf16>, vector<64x64xf32> -> vector<64x64xf32>
    %cst_27 = arith.constant 0.353553385 : f32
    %57 = vector.broadcast %cst_27 : f32 to vector<64x64xf32>
    %58 = arith.mulf %56, %57 : vector<64x64xf32>
    %59 = arith.addf %58, %15 : vector<64x64xf32>
    %cst_28 = arith.constant dense<0xFF800000> : vector<64xf32>
    %60 = vector.multi_reduction <maximumf>, %59, %cst_28 [1] : vector<64x64xf32> to vector<64xf32>
    %61 = vector.shape_cast %60 : vector<64xf32> to vector<64x1xf32>
    %62 = vector.broadcast %61 : vector<64x1xf32> to vector<64x64xf32>
    %63 = arith.subf %59, %62 : vector<64x64xf32>
    %64 = math.exp %63 : vector<64x64xf32>
    %cst_29 = arith.constant dense<0.000000e+00> : vector<64xf32>
    %65 = vector.multi_reduction <add>, %64, %cst_29 [1] : vector<64x64xf32> to vector<64xf32>
    %66 = vector.shape_cast %65 : vector<64xf32> to vector<64x1xf32>
    %67 = tpu.reciprocal %66 {approx = true} : vector<64x1xf32> -> vector<64x1xf32>
    %68 = vector.broadcast %67 : vector<64x1xf32> to vector<64x64xf32>
    %69 = arith.mulf %64, %68 : vector<64x64xf32>
    %70 = arith.truncf %69 : vector<64x64xf32> to vector<64x64xbf16>
    %71 = vector.extract_strided_slice %51 {offsets = [0, 0], sizes = [64, 8], strides = [1, 1]} : vector<64x32xf32> to vector<64x8xf32>
    %72 = arith.truncf %71 : vector<64x8xf32> to vector<64x8xbf16>
    %cst_30 = arith.constant dense<0.000000e+00> : vector<64x8xf32>
    %73 = tpu.matmul %70, %72, %cst_30 {dimension_numbers = #tpu.dot_dimension_numbers<[1], [0], [0], [1], [0, 0, 1, 1], [], []>} : vector<64x64xbf16>, vector<64x8xbf16>, vector<64x8xf32> -> vector<64x8xf32>
    %74 = vector.extract_strided_slice %49 {offsets = [0, 8], sizes = [64, 8], strides = [1, 1]} : vector<64x32xf32> to vector<64x8xf32>
    %75 = arith.truncf %74 : vector<64x8xf32> to vector<64x8xbf16>
    %76 = vector.extract_strided_slice %50 {offsets = [0, 8], sizes = [64, 8], strides = [1, 1]} : vector<64x32xf32> to vector<64x8xf32>
    %77 = arith.truncf %76 : vector<64x8xf32> to vector<64x8xbf16>
    %cst_31 = arith.constant dense<0.000000e+00> : vector<64x64xf32>
    %78 = tpu.matmul %75, %77, %cst_31 {dimension_numbers = #tpu.dot_dimension_numbers<[1], [1], [0], [0], [0, 0, 1, 0], [], []>} : vector<64x8xbf16>, vector<64x8xbf16>, vector<64x64xf32> -> vector<64x64xf32>
    %cst_32 = arith.constant 0.353553385 : f32
    %79 = vector.broadcast %cst_32 : f32 to vector<64x64xf32>
    %80 = arith.mulf %78, %79 : vector<64x64xf32>
    %81 = arith.addf %80, %15 : vector<64x64xf32>
    %cst_33 = arith.constant dense<0xFF800000> : vector<64xf32>
    %82 = vector.multi_reduction <maximumf>, %81, %cst_33 [1] : vector<64x64xf32> to vector<64xf32>
    %83 = vector.shape_cast %82 : vector<64xf32> to vector<64x1xf32>
    %84 = vector.broadcast %83 : vector<64x1xf32> to vector<64x64xf32>
    %85 = arith.subf %81, %84 : vector<64x64xf32>
    %86 = math.exp %85 : vector<64x64xf32>
    %cst_34 = arith.constant dense<0.000000e+00> : vector<64xf32>
    %87 = vector.multi_reduction <add>, %86, %cst_34 [1] : vector<64x64xf32> to vector<64xf32>
    %88 = vector.shape_cast %87 : vector<64xf32> to vector<64x1xf32>
    %89 = tpu.reciprocal %88 {approx = true} : vector<64x1xf32> -> vector<64x1xf32>
    %90 = vector.broadcast %89 : vector<64x1xf32> to vector<64x64xf32>
    %91 = arith.mulf %86, %90 : vector<64x64xf32>
    %92 = arith.truncf %91 : vector<64x64xf32> to vector<64x64xbf16>
    %93 = vector.extract_strided_slice %51 {offsets = [0, 8], sizes = [64, 8], strides = [1, 1]} : vector<64x32xf32> to vector<64x8xf32>
    %94 = arith.truncf %93 : vector<64x8xf32> to vector<64x8xbf16>
    %cst_35 = arith.constant dense<0.000000e+00> : vector<64x8xf32>
    %95 = tpu.matmul %92, %94, %cst_35 {dimension_numbers = #tpu.dot_dimension_numbers<[1], [0], [0], [1], [0, 0, 1, 1], [], []>} : vector<64x64xbf16>, vector<64x8xbf16>, vector<64x8xf32> -> vector<64x8xf32>
    %96 = vector.extract_strided_slice %49 {offsets = [0, 16], sizes = [64, 8], strides = [1, 1]} : vector<64x32xf32> to vector<64x8xf32>
    %97 = arith.truncf %96 : vector<64x8xf32> to vector<64x8xbf16>
    %98 = vector.extract_strided_slice %50 {offsets = [0, 16], sizes = [64, 8], strides = [1, 1]} : vector<64x32xf32> to vector<64x8xf32>
    %99 = arith.truncf %98 : vector<64x8xf32> to vector<64x8xbf16>
    %cst_36 = arith.constant dense<0.000000e+00> : vector<64x64xf32>
    %100 = tpu.matmul %97, %99, %cst_36 {dimension_numbers = #tpu.dot_dimension_numbers<[1], [1], [0], [0], [0, 0, 1, 0], [], []>} : vector<64x8xbf16>, vector<64x8xbf16>, vector<64x64xf32> -> vector<64x64xf32>
    %cst_37 = arith.constant 0.353553385 : f32
    %101 = vector.broadcast %cst_37 : f32 to vector<64x64xf32>
    %102 = arith.mulf %100, %101 : vector<64x64xf32>
    %103 = arith.addf %102, %15 : vector<64x64xf32>
    %cst_38 = arith.constant dense<0xFF800000> : vector<64xf32>
    %104 = vector.multi_reduction <maximumf>, %103, %cst_38 [1] : vector<64x64xf32> to vector<64xf32>
    %105 = vector.shape_cast %104 : vector<64xf32> to vector<64x1xf32>
    %106 = vector.broadcast %105 : vector<64x1xf32> to vector<64x64xf32>
    %107 = arith.subf %103, %106 : vector<64x64xf32>
    %108 = math.exp %107 : vector<64x64xf32>
    %cst_39 = arith.constant dense<0.000000e+00> : vector<64xf32>
    %109 = vector.multi_reduction <add>, %108, %cst_39 [1] : vector<64x64xf32> to vector<64xf32>
    %110 = vector.shape_cast %109 : vector<64xf32> to vector<64x1xf32>
    %111 = tpu.reciprocal %110 {approx = true} : vector<64x1xf32> -> vector<64x1xf32>
    %112 = vector.broadcast %111 : vector<64x1xf32> to vector<64x64xf32>
    %113 = arith.mulf %108, %112 : vector<64x64xf32>
    %114 = arith.truncf %113 : vector<64x64xf32> to vector<64x64xbf16>
    %115 = vector.extract_strided_slice %51 {offsets = [0, 16], sizes = [64, 8], strides = [1, 1]} : vector<64x32xf32> to vector<64x8xf32>
    %116 = arith.truncf %115 : vector<64x8xf32> to vector<64x8xbf16>
    %cst_40 = arith.constant dense<0.000000e+00> : vector<64x8xf32>
    %117 = tpu.matmul %114, %116, %cst_40 {dimension_numbers = #tpu.dot_dimension_numbers<[1], [0], [0], [1], [0, 0, 1, 1], [], []>} : vector<64x64xbf16>, vector<64x8xbf16>, vector<64x8xf32> -> vector<64x8xf32>
    %118 = vector.extract_strided_slice %49 {offsets = [0, 24], sizes = [64, 8], strides = [1, 1]} : vector<64x32xf32> to vector<64x8xf32>
    %119 = arith.truncf %118 : vector<64x8xf32> to vector<64x8xbf16>
    %120 = vector.extract_strided_slice %50 {offsets = [0, 24], sizes = [64, 8], strides = [1, 1]} : vector<64x32xf32> to vector<64x8xf32>
    %121 = arith.truncf %120 : vector<64x8xf32> to vector<64x8xbf16>
    %cst_41 = arith.constant dense<0.000000e+00> : vector<64x64xf32>
    %122 = tpu.matmul %119, %121, %cst_41 {dimension_numbers = #tpu.dot_dimension_numbers<[1], [1], [0], [0], [0, 0, 1, 0], [], []>} : vector<64x8xbf16>, vector<64x8xbf16>, vector<64x64xf32> -> vector<64x64xf32>
    %cst_42 = arith.constant 0.353553385 : f32
    %123 = vector.broadcast %cst_42 : f32 to vector<64x64xf32>
    %124 = arith.mulf %122, %123 : vector<64x64xf32>
    %125 = arith.addf %124, %15 : vector<64x64xf32>
    %cst_43 = arith.constant dense<0xFF800000> : vector<64xf32>
    %126 = vector.multi_reduction <maximumf>, %125, %cst_43 [1] : vector<64x64xf32> to vector<64xf32>
    %127 = vector.shape_cast %126 : vector<64xf32> to vector<64x1xf32>
    %128 = vector.broadcast %127 : vector<64x1xf32> to vector<64x64xf32>
    %129 = arith.subf %125, %128 : vector<64x64xf32>
    %130 = math.exp %129 : vector<64x64xf32>
    %cst_44 = arith.constant dense<0.000000e+00> : vector<64xf32>
    %131 = vector.multi_reduction <add>, %130, %cst_44 [1] : vector<64x64xf32> to vector<64xf32>
    %132 = vector.shape_cast %131 : vector<64xf32> to vector<64x1xf32>
    %133 = tpu.reciprocal %132 {approx = true} : vector<64x1xf32> -> vector<64x1xf32>
    %134 = vector.broadcast %133 : vector<64x1xf32> to vector<64x64xf32>
    %135 = arith.mulf %130, %134 : vector<64x64xf32>
    %136 = arith.truncf %135 : vector<64x64xf32> to vector<64x64xbf16>
    %137 = vector.extract_strided_slice %51 {offsets = [0, 24], sizes = [64, 8], strides = [1, 1]} : vector<64x32xf32> to vector<64x8xf32>
    %138 = arith.truncf %137 : vector<64x8xf32> to vector<64x8xbf16>
    %cst_45 = arith.constant dense<0.000000e+00> : vector<64x8xf32>
    %139 = tpu.matmul %136, %138, %cst_45 {dimension_numbers = #tpu.dot_dimension_numbers<[1], [0], [0], [1], [0, 0, 1, 1], [], []>} : vector<64x64xbf16>, vector<64x8xbf16>, vector<64x8xf32> -> vector<64x8xf32>
    %140 = tpu.concatenate %73, %95, %117, %139 in 1 : vector<64x8xf32>, vector<64x8xf32>, vector<64x8xf32>, vector<64x8xf32> -> vector<64x32xf32>
    %141 = arith.truncf %140 : vector<64x32xf32> to vector<64x32xbf16>
    %cst_46 = arith.constant dense<0.000000e+00> : vector<64x32xf32>
    %142 = tpu.matmul %141, %17, %cst_46 {dimension_numbers = #tpu.dot_dimension_numbers<[1], [0], [0], [1], [0, 0, 1, 1], [], []>} : vector<64x32xbf16>, vector<32x32xbf16>, vector<64x32xf32> -> vector<64x32xf32>
    %143 = arith.addf %3, %142 : vector<64x32xf32>
    %144 = vector.extract_strided_slice %0 {offsets = [3, 0], sizes = [1, 32], strides = [1, 1]} : vector<13x128xf32> to vector<1x32xf32>
    %145 = vector.broadcast %144 : vector<1x32xf32> to vector<64x32xf32>
    %146 = arith.addf %143, %145 : vector<64x32xf32>
    %147 = vector.extract_strided_slice %0 {offsets = [4, 0], sizes = [1, 32], strides = [1, 1]} : vector<13x128xf32> to vector<1x32xf32>
    %148 = vector.extract_strided_slice %0 {offsets = [5, 0], sizes = [1, 32], strides = [1, 1]} : vector<13x128xf32> to vector<1x32xf32>
    %cst_47 = arith.constant dense<0.000000e+00> : vector<64xf32>
    %149 = vector.multi_reduction <add>, %146, %cst_47 [1] : vector<64x32xf32> to vector<64xf32>
    %150 = vector.shape_cast %149 : vector<64xf32> to vector<64x1xf32>
    %cst_48 = arith.constant 3.200000e+01 : f32
    %151 = vector.broadcast %cst_48 : f32 to vector<64x1xf32>
    %152 = arith.divf %150, %151 : vector<64x1xf32>
    %153 = vector.broadcast %152 : vector<64x1xf32> to vector<64x32xf32>
    %154 = arith.subf %146, %153 : vector<64x32xf32>
    %155 = arith.mulf %154, %154 : vector<64x32xf32>
    %cst_49 = arith.constant dense<0.000000e+00> : vector<64xf32>
    %156 = vector.multi_reduction <add>, %155, %cst_49 [1] : vector<64x32xf32> to vector<64xf32>
    %157 = vector.shape_cast %156 : vector<64xf32> to vector<64x1xf32>
    %cst_50 = arith.constant 3.200000e+01 : f32
    %158 = vector.broadcast %cst_50 : f32 to vector<64x1xf32>
    %159 = arith.divf %157, %158 : vector<64x1xf32>
    %160 = vector.broadcast %152 : vector<64x1xf32> to vector<64x32xf32>
    %161 = arith.subf %146, %160 : vector<64x32xf32>
    %cst_51 = arith.constant 9.99999974E-6 : f32
    %162 = vector.broadcast %cst_51 : f32 to vector<64x1xf32>
    %163 = arith.addf %159, %162 : vector<64x1xf32>
    %164 = math.rsqrt %163 : vector<64x1xf32>
    %165 = vector.broadcast %164 : vector<64x1xf32> to vector<64x32xf32>
    %166 = arith.mulf %161, %165 : vector<64x32xf32>
    %167 = vector.broadcast %147 : vector<1x32xf32> to vector<64x32xf32>
    %168 = arith.mulf %166, %167 : vector<64x32xf32>
    %169 = vector.broadcast %148 : vector<1x32xf32> to vector<64x32xf32>
    %170 = arith.addf %168, %169 : vector<64x32xf32>
    %171 = arith.truncf %170 : vector<64x32xf32> to vector<64x32xbf16>
    %cst_52 = arith.constant dense<0.000000e+00> : vector<64x128xf32>
    %172 = tpu.matmul %171, %18, %cst_52 {dimension_numbers = #tpu.dot_dimension_numbers<[1], [0], [0], [1], [0, 0, 1, 1], [], []>} : vector<64x32xbf16>, vector<32x128xbf16>, vector<64x128xf32> -> vector<64x128xf32>
    %173 = vector.extract_strided_slice %0 {offsets = [6, 0], sizes = [1, 128], strides = [1, 1]} : vector<13x128xf32> to vector<1x128xf32>
    %174 = vector.broadcast %173 : vector<1x128xf32> to vector<64x128xf32>
    %175 = arith.addf %172, %174 : vector<64x128xf32>
    %176 = arith.mulf %175, %175 : vector<64x128xf32>
    %177 = arith.mulf %175, %176 : vector<64x128xf32>
    %cst_53 = arith.constant 4.471500e-02 : f32
    %178 = vector.broadcast %cst_53 : f32 to vector<64x128xf32>
    %179 = arith.mulf %178, %177 : vector<64x128xf32>
    %180 = arith.addf %175, %179 : vector<64x128xf32>
    %cst_54 = arith.constant 0.797884583 : f32
    %181 = vector.broadcast %cst_54 : f32 to vector<64x128xf32>
    %182 = arith.mulf %181, %180 : vector<64x128xf32>
    %183 = math.tanh %182 : vector<64x128xf32>
    %cst_55 = arith.constant 1.000000e+00 : f32
    %184 = vector.broadcast %cst_55 : f32 to vector<64x128xf32>
    %185 = arith.addf %184, %183 : vector<64x128xf32>
    %cst_56 = arith.constant 5.000000e-01 : f32
    %186 = vector.broadcast %cst_56 : f32 to vector<64x128xf32>
    %187 = arith.mulf %186, %185 : vector<64x128xf32>
    %188 = arith.mulf %175, %187 : vector<64x128xf32>
    %189 = arith.truncf %188 : vector<64x128xf32> to vector<64x128xbf16>
    %cst_57 = arith.constant dense<0.000000e+00> : vector<64x32xf32>
    %190 = tpu.matmul %189, %19, %cst_57 {dimension_numbers = #tpu.dot_dimension_numbers<[1], [0], [0], [1], [0, 0, 1, 1], [], []>} : vector<64x128xbf16>, vector<128x32xbf16>, vector<64x32xf32> -> vector<64x32xf32>
    %191 = arith.addf %146, %190 : vector<64x32xf32>
    %192 = vector.extract_strided_slice %0 {offsets = [7, 0], sizes = [1, 32], strides = [1, 1]} : vector<13x128xf32> to vector<1x32xf32>
    %193 = vector.broadcast %192 : vector<1x32xf32> to vector<64x32xf32>
    %194 = arith.addf %191, %193 : vector<64x32xf32>
    %195 = vector.extract_strided_slice %0 {offsets = [8, 0], sizes = [1, 32], strides = [1, 1]} : vector<13x128xf32> to vector<1x32xf32>
    %196 = vector.extract_strided_slice %0 {offsets = [9, 0], sizes = [1, 32], strides = [1, 1]} : vector<13x128xf32> to vector<1x32xf32>
    %cst_58 = arith.constant dense<0.000000e+00> : vector<64xf32>
    %197 = vector.multi_reduction <add>, %194, %cst_58 [1] : vector<64x32xf32> to vector<64xf32>
    %198 = vector.shape_cast %197 : vector<64xf32> to vector<64x1xf32>
    %cst_59 = arith.constant 3.200000e+01 : f32
    %199 = vector.broadcast %cst_59 : f32 to vector<64x1xf32>
    %200 = arith.divf %198, %199 : vector<64x1xf32>
    %201 = vector.broadcast %200 : vector<64x1xf32> to vector<64x32xf32>
    %202 = arith.subf %194, %201 : vector<64x32xf32>
    %203 = arith.mulf %202, %202 : vector<64x32xf32>
    %cst_60 = arith.constant dense<0.000000e+00> : vector<64xf32>
    %204 = vector.multi_reduction <add>, %203, %cst_60 [1] : vector<64x32xf32> to vector<64xf32>
    %205 = vector.shape_cast %204 : vector<64xf32> to vector<64x1xf32>
    %cst_61 = arith.constant 3.200000e+01 : f32
    %206 = vector.broadcast %cst_61 : f32 to vector<64x1xf32>
    %207 = arith.divf %205, %206 : vector<64x1xf32>
    %208 = vector.broadcast %200 : vector<64x1xf32> to vector<64x32xf32>
    %209 = arith.subf %194, %208 : vector<64x32xf32>
    %cst_62 = arith.constant 9.99999974E-6 : f32
    %210 = vector.broadcast %cst_62 : f32 to vector<64x1xf32>
    %211 = arith.addf %207, %210 : vector<64x1xf32>
    %212 = math.rsqrt %211 : vector<64x1xf32>
    %213 = vector.broadcast %212 : vector<64x1xf32> to vector<64x32xf32>
    %214 = arith.mulf %209, %213 : vector<64x32xf32>
    %215 = vector.broadcast %195 : vector<1x32xf32> to vector<64x32xf32>
    %216 = arith.mulf %214, %215 : vector<64x32xf32>
    %217 = vector.broadcast %196 : vector<1x32xf32> to vector<64x32xf32>
    %218 = arith.addf %216, %217 : vector<64x32xf32>
    %c0_i32 = arith.constant 0 : i32
    %219 = arith.cmpi eq, %arg0, %c0_i32 : i32
    %220 = arith.extui %219 : i1 to i32
    %c0_i32_63 = arith.constant 0 : i32
    %221 = arith.cmpi ne, %220, %c0_i32_63 : i32
    scf.if %221 {
      %c0_65 = arith.constant 0 : index
      %c0_66 = arith.constant 0 : index
      %225 = vector.load %arg12[%c0_65, %c0_66] : memref<32x128xbf16, #tpu.memory_space<vmem>>, vector<32x128xbf16>
      %226 = arith.truncf %218 : vector<64x32xf32> to vector<64x32xbf16>
      %cst_67 = arith.constant dense<0.000000e+00> : vector<64x128xf32>
      %227 = tpu.matmul %226, %225, %cst_67 {dimension_numbers = #tpu.dot_dimension_numbers<[1], [0], [0], [1], [0, 0, 1, 1], [], []>} : vector<64x32xbf16>, vector<32x128xbf16>, vector<64x128xf32> -> vector<64x128xf32>
      %228 = vector.extract_strided_slice %0 {offsets = [10, 0], sizes = [1, 128], strides = [1, 1]} : vector<13x128xf32> to vector<1x128xf32>
      %229 = vector.broadcast %228 : vector<1x128xf32> to vector<64x128xf32>
      %230 = arith.addf %227, %229 : vector<64x128xf32>
      %cst_68 = arith.constant dense<0xFF800000> : vector<64xf32>
      %231 = vector.multi_reduction <maximumf>, %230, %cst_68 [1] : vector<64x128xf32> to vector<64xf32>
      %232 = vector.shape_cast %231 : vector<64xf32> to vector<64x1xf32>
      %233 = vector.broadcast %232 : vector<64x1xf32> to vector<64x128xf32>
      %234 = arith.subf %230, %233 : vector<64x128xf32>
      %235 = math.exp %234 : vector<64x128xf32>
      %cst_69 = arith.constant dense<0.000000e+00> : vector<64xf32>
      %236 = vector.multi_reduction <add>, %235, %cst_69 [1] : vector<64x128xf32> to vector<64xf32>
      %237 = vector.shape_cast %236 : vector<64xf32> to vector<64x1xf32>
      %238 = math.log %237 : vector<64x1xf32>
      %239 = arith.addf %238, %232 : vector<64x1xf32>
      %240 = vector.broadcast %239 : vector<64x1xf32> to vector<64x128xf32>
      %241 = arith.subf %240, %230 : vector<64x128xf32>
      %c0_70 = arith.constant 0 : index
      %c0_71 = arith.constant 0 : index
      %242 = vector.load %arg4[%c0_70, %c0_71] : memref<64x128xf32, #tpu.memory_space<vmem>>, vector<64x128xf32>
      %243 = arith.mulf %241, %242 : vector<64x128xf32>
      %cst_72 = arith.constant dense<0.000000e+00> : vector<128xf32>
      %244 = vector.multi_reduction <add>, %243, %cst_72 [0] : vector<64x128xf32> to vector<128xf32>
      %245 = vector.shape_cast %244 : vector<128xf32> to vector<1x128xf32>
      %c0_73 = arith.constant 0 : index
      %c0_74 = arith.constant 0 : index
      %c0_75 = arith.constant 0 : index
      %246 = vector.load %arg15[%c0_73, %c0_74, %c0_75] : memref<1x1x128xf32, #tpu.memory_space<vmem>>, vector<1x1x128xf32>
      %247 = vector.shape_cast %246 : vector<1x1x128xf32> to vector<1x128xf32>
      %248 = vector.shape_cast %245 : vector<1x128xf32> to vector<1x1x128xf32>
      tpu.vector_store %arg15[%c0_73, %c0_74, %c0_75], %248 {strides = array<i32>} : memref<1x1x128xf32, #tpu.memory_space<vmem>>, vector<1x1x128xf32>,
    } else {
    }
    %c1_i32 = arith.constant 1 : i32
    %222 = arith.cmpi eq, %arg0, %c1_i32 : i32
    %223 = arith.extui %222 : i1 to i32
    %c0_i32_64 = arith.constant 0 : i32
    %224 = arith.cmpi ne, %223, %c0_i32_64 : i32
    scf.if %224 {
      %c0_65 = arith.constant 0 : index
      %c0_66 = arith.constant 0 : index
      %225 = vector.load %arg5[%c0_65, %c0_66] : memref<4x64xf32, #tpu.memory_space<vmem>>, vector<4x64xf32>
      %226 = arith.truncf %225 : vector<4x64xf32> to vector<4x64xbf16>
      %227 = arith.truncf %218 : vector<64x32xf32> to vector<64x32xbf16>
      %cst_67 = arith.constant dense<0.000000e+00> : vector<4x32xf32>
      %228 = tpu.matmul %226, %227, %cst_67 {dimension_numbers = #tpu.dot_dimension_numbers<[1], [0], [0], [1], [0, 0, 1, 1], [], []>} : vector<4x64xbf16>, vector<64x32xbf16>, vector<4x32xf32> -> vector<4x32xf32>
      %c0_68 = arith.constant 0 : index
      %c0_69 = arith.constant 0 : index
      %229 = vector.load %arg13[%c0_68, %c0_69] : memref<32x32xbf16, #tpu.memory_space<vmem>>, vector<32x32xbf16>
      %230 = arith.truncf %228 : vector<4x32xf32> to vector<4x32xbf16>
      %cst_70 = arith.constant dense<0.000000e+00> : vector<4x32xf32>
      %231 = tpu.matmul %230, %229, %cst_70 {dimension_numbers = #tpu.dot_dimension_numbers<[1], [0], [0], [1], [0, 0, 1, 1], [], []>} : vector<4x32xbf16>, vector<32x32xbf16>, vector<4x32xf32> -> vector<4x32xf32>
      %232 = vector.extract_strided_slice %0 {offsets = [11, 0], sizes = [1, 32], strides = [1, 1]} : vector<13x128xf32> to vector<1x32xf32>
      %233 = vector.broadcast %232 : vector<1x32xf32> to vector<4x32xf32>
      %234 = arith.addf %231, %233 : vector<4x32xf32>
      %cst_71 = arith.constant 0.000000e+00 : f32
      %235 = vector.broadcast %cst_71 : f32 to vector<4x32xf32>
      %236 = arith.maximumf %234, %235 : vector<4x32xf32>
      %c0_72 = arith.constant 0 : index
      %c0_73 = arith.constant 0 : index
      %237 = vector.load %arg14[%c0_72, %c0_73] : memref<32x128xbf16, #tpu.memory_space<vmem>>, vector<32x128xbf16>
      %238 = arith.truncf %236 : vector<4x32xf32> to vector<4x32xbf16>
      %cst_74 = arith.constant dense<0.000000e+00> : vector<4x128xf32>
      %239 = tpu.matmul %238, %237, %cst_74 {dimension_numbers = #tpu.dot_dimension_numbers<[1], [0], [0], [1], [0, 0, 1, 1], [], []>} : vector<4x32xbf16>, vector<32x128xbf16>, vector<4x128xf32> -> vector<4x128xf32>
      %240 = vector.extract_strided_slice %0 {offsets = [12, 0], sizes = [1, 128], strides = [1, 1]} : vector<13x128xf32> to vector<1x128xf32>
      %241 = vector.broadcast %240 : vector<1x128xf32> to vector<4x128xf32>
      %242 = arith.addf %239, %241 : vector<4x128xf32>
      %cst_75 = arith.constant dense<0xFF800000> : vector<4xf32>
      %243 = vector.multi_reduction <maximumf>, %242, %cst_75 [1] : vector<4x128xf32> to vector<4xf32>
      %244 = vector.shape_cast %243 : vector<4xf32> to vector<4x1xf32>
      %245 = vector.broadcast %244 : vector<4x1xf32> to vector<4x128xf32>
      %246 = arith.subf %242, %245 : vector<4x128xf32>
      %247 = math.exp %246 : vector<4x128xf32>
      %cst_76 = arith.constant dense<0.000000e+00> : vector<4xf32>
      %248 = vector.multi_reduction <add>, %247, %cst_76 [1] : vector<4x128xf32> to vector<4xf32>
      %249 = vector.shape_cast %248 : vector<4xf32> to vector<4x1xf32>
      %250 = math.log %249 : vector<4x1xf32>
      %251 = arith.addf %250, %244 : vector<4x1xf32>
      %252 = vector.broadcast %251 : vector<4x1xf32> to vector<4x128xf32>
      %253 = arith.subf %252, %242 : vector<4x128xf32>
      %c0_77 = arith.constant 0 : index
      %c0_78 = arith.constant 0 : index
      %254 = vector.load %arg6[%c0_77, %c0_78] : memref<4x128xf32, #tpu.memory_space<vmem>>, vector<4x128xf32>
      %255 = arith.mulf %253, %254 : vector<4x128xf32>
      %cst_79 = arith.constant dense<0.000000e+00> : vector<128xf32>
      %256 = vector.multi_reduction <add>, %255, %cst_79 [0] : vector<4x128xf32> to vector<128xf32>
      %257 = vector.shape_cast %256 : vector<128xf32> to vector<1x128xf32>
      %c0_80 = arith.constant 0 : index
      %c0_81 = arith.constant 0 : index
      %c0_82 = arith.constant 0 : index
      %258 = vector.load %arg15[%c0_80, %c0_81, %c0_82] : memref<1x1x128xf32, #tpu.memory_space<vmem>>, vector<1x1x128xf32>
      %259 = vector.shape_cast %258 : vector<1x1x128xf32> to vector<1x128xf32>
      %260 = vector.shape_cast %257 : vector<1x128xf32> to vector<1x1x128xf32>
      tpu.vector_store %arg15[%c0_80, %c0_81, %c0_82], %260 {strides = array<i32>} : memref<1x1x128xf32, #tpu.memory_space<vmem>>, vector<1x1x128xf32>,
    } else {
    }
    return
  }
  func.func @transform_0(%arg0: i32) -> (i32, i32, i32) {
    %c0_i32 = arith.constant 0 : i32
    %c0_i32_0 = arith.constant 0 : i32
    %c0_i32_1 = arith.constant 0 : i32
    return %arg0, %c0_i32, %c0_i32_0 : i32, i32, i32
  }
  func.func @transform_1(%arg0: i32) -> (i32, i32, i32) {
    %c0_i32 = arith.constant 0 : i32
    %c0_i32_0 = arith.constant 0 : i32
    %c0_i32_1 = arith.constant 0 : i32
    return %arg0, %c0_i32, %c0_i32_0 : i32, i32, i32
  }
  func.func @transform_2(%arg0: i32) -> (i32, i32) {
    %c0_i32 = arith.constant 0 : i32
    %c0_i32_0 = arith.constant 0 : i32
    %c0_i32_1 = arith.constant 0 : i32
    return %c0_i32, %c0_i32_0 : i32, i32
  }
  func.func @transform_3(%arg0: i32) -> (i32, i32) {
    %c0_i32 = arith.constant 0 : i32
    %c0_i32_0 = arith.constant 0 : i32
    %c0_i32_1 = arith.constant 0 : i32
    return %c0_i32, %c0_i32_0 : i32, i32
  }
  func.func @transform_4(%arg0: i32) -> (i32, i32) {
    %c0_i32 = arith.constant 0 : i32
    %c0_i32_0 = arith.constant 0 : i32
    %c0_i32_1 = arith.constant 0 : i32
    return %c0_i32, %c0_i32_0 : i32, i32
  }
  func.func @transform_5(%arg0: i32) -> (i32, i32) {
    %c0_i32 = arith.constant 0 : i32
    %c0_i32_0 = arith.constant 0 : i32
    %c0_i32_1 = arith.constant 0 : i32
    return %c0_i32, %c0_i32_0 : i32, i32
  }
  func.func @transform_6(%arg0: i32) -> (i32, i32) {
    %c0_i32 = arith.constant 0 : i32
    %c0_i32_0 = arith.constant 0 : i32
    %c0_i32_1 = arith.constant 0 : i32
    return %c0_i32, %c0_i32_0 : i32, i32
  }
  func.func @transform_7(%arg0: i32) -> (i32, i32) {
    %c0_i32 = arith.constant 0 : i32
    %c0_i32_0 = arith.constant 0 : i32
    %c0_i32_1 = arith.constant 0 : i32
    return %c0_i32, %c0_i32_0 : i32, i32
  }
  func.func @transform_8(%arg0: i32) -> (i32, i32) {
    %c0_i32 = arith.constant 0 : i32
    %c0_i32_0 = arith.constant 0 : i32
    %c0_i32_1 = arith.constant 0 : i32
    return %c0_i32, %c0_i32_0 : i32, i32
  }
  func.func @transform_9(%arg0: i32) -> (i32, i32) {
    %c0_i32 = arith.constant 0 : i32
    %c0_i32_0 = arith.constant 0 : i32
    %c0_i32_1 = arith.constant 0 : i32
    return %c0_i32, %c0_i32_0 : i32, i32
  }
  func.func @transform_10(%arg0: i32) -> (i32, i32) {
    %c0_i32 = arith.constant 0 : i32
    %c0_i32_0 = arith.constant 0 : i32
    %c0_i32_1 = arith.constant 0 : i32
    return %c0_i32, %c0_i32_0 : i32, i32
  }
  func.func @transform_11(%arg0: i32) -> (i32, i32) {
    %c0_i32 = arith.constant 0 : i32
    %c0_i32_0 = arith.constant 0 : i32
    %c0_i32_1 = arith.constant 0 : i32
    return %c0_i32, %c0_i32_0 : i32, i32
  }
  func.func @transform_12(%arg0: i32) -> (i32, i32) {
    %c0_i32 = arith.constant 0 : i32
    %c0_i32_0 = arith.constant 0 : i32
    %c0_i32_1 = arith.constant 0 : i32
    return %c0_i32, %c0_i32_0 : i32, i32
  }
  func.func @transform_13(%arg0: i32) -> (i32, i32) {
    %c0_i32 = arith.constant 0 : i32
    %c0_i32_0 = arith.constant 0 : i32
    %c0_i32_1 = arith.constant 0 : i32
    return %c0_i32, %c0_i32_0 : i32, i32
  }
  func.func @transform_14(%arg0: i32) -> (i32, i32, i32) {
    %c0_i32 = arith.constant 0 : i32
    %c0_i32_0 = arith.constant 0 : i32
    %c0_i32_1 = arith.constant 0 : i32
    return %arg0, %c0_i32, %c0_i32_0 : i32, i32, i32
  }
}

</mosaic_0001>

<llo_original>
// kernel: eq.71
$region0: #{eq.71}
  %s0 = inlined_call_operand.vmem [shape: s32[2,8], index: 0, kind: input, shape index: {}]
  %s1 = inlined_call_operand.vmem [shape: s32[16], index: 1, kind: output, shape index: {}]
  $region1: #{eq.71} parent=0
    #allocation0 [shape = 'u8[4096]{0}', space=vmem, size = 0x1000, scoped, tag = 'scoped mem for output reshape']
    #allocation1 [shape = 'u8[4096]{0}', space=vmem, size = 0x1000, scoped, tag = 'scoped mem for input reshape']
    %s3 = ssub.s32 4, 1
    %v4 = vld [vmem:[%s0] sm:%s3]
    %5 = vst [vmem:[#allocation1] sm:%s3] %v4
    %v6 = vld [vmem:[#allocation1] sm:$0x1]
    %vm7 = vcmask 64512
    %8 = vst.msk [vmem:[#allocation0] sm:$0x1] %vm7, %v6
    %s9 = scalar_lea.vmem [#allocation1], 1
    %v10 = vld [vmem:[%s9] sm:$0x1]
    %11 = vrot.lane.b32.xlu0 %v10, 8
    %v12 = vpop.permute.xlu0 %11
    %vm13 = vcmask 130112
    %14 = vst.msk [vmem:[#allocation0] sm:$0x1] %vm13, %v12
    %s16 = ssub.s32 2, 1
    %v17 = vld [vmem:[#allocation0] sm:%s16]
    %s19 = ssub.s32 2, 1
    %20 = vst [vmem:[%s1] sm:%s19] %v17

// kernel: eq.64
$region0: #{eq.64}
  %s0 = inlined_call_operand.vmem [shape: s32[2,5], index: 0, kind: input, shape index: {}]
  %s1 = inlined_call_operand.vmem [shape: s32[10], index: 1, kind: output, shape index: {}]
  $region1: #{eq.64} parent=0
    #allocation0 [shape = 'u8[4096]{0}', space=vmem, size = 0x1000, scoped, tag = 'scoped mem for output reshape']
    #allocation1 [shape = 'u8[4096]{0}', space=vmem, size = 0x1000, scoped, tag = 'scoped mem for input reshape']
    %s3 = ssub.s32 4, 1
    %v4 = vld [vmem:[%s0] sm:%s3]
    %5 = vst [vmem:[#allocation1] sm:%s3] %v4
    %v6 = vld [vmem:[#allocation1] sm:$0x1]
    %vm7 = vcmask 39936
    %8 = vst.msk [vmem:[#allocation0] sm:$0x1] %vm7, %v6
    %s9 = scalar_lea.vmem [#allocation1], 1
    %v10 = vld [vmem:[%s9] sm:$0x1]
    %11 = vrot.lane.b32.xlu0 %v10, 5
    %v12 = vpop.permute.xlu0 %11
    %vm13 = vcmask 80936
    %14 = vst.msk [vmem:[#allocation0] sm:$0x1] %vm13, %v12
    %s16 = ssub.s32 2, 1
    %v17 = vld [vmem:[#allocation0] sm:%s16]
    %s19 = ssub.s32 2, 1
    %20 = vst [vmem:[%s1] sm:%s19] %v17

// kernel: lt.6
$region0: #{lt.6}
  #allocation0 [shape = 's32[1]{0}', space=sflag, size = 0x4, scoped, tag = 'scoped memory for lt.6']
  %s0 = inlined_call_operand.<no memory space> [shape: s32[], index: 0, kind: input, shape index: {}]
  %s1 = inlined_call_operand.vmem [shape: s32[4,8], index: 1, kind: output, shape index: {}]
  %v2 = vstv %s0
  %3 = vst [vmem:[%s1] sm:$0xf] %v2

// kernel: forward.2
$region0: #{forward.2}
  #allocation0 [shape = 'u32[]', space=smem, size = 0x4, offset = 0x4, fixed_abs, tag = 'smem constant byte address 0x4 - core index']
  #allocation1 [shape = 'u32[72,128]{1,0:T(1,128)}', space=vmem, size = 0x9000, scoped, tag = 'internal scratch']
  %s0 = inlined_call_operand.vmem [shape: bf16[10,32], index: 0, kind: input, shape index: {}]
  %s1 = inlined_call_operand.vmem [shape: f32[8,32], index: 1, kind: input, shape index: {}]
  %s2 = inlined_call_operand.vmem [shape: f32[10,10], index: 2, kind: input, shape index: {}]
  %s3 = inlined_call_operand.vmem [shape: f32[16,10], index: 3, kind: input, shape index: {}]
  %s4 = inlined_call_operand.vmem [shape: f32[22,128], index: 4, kind: input, shape index: {}]
  %s5 = inlined_call_operand.vmem [shape: bf16[32,96], index: 5, kind: input, shape index: {}]
  %s6 = inlined_call_operand.vmem [shape: bf16[32,32], index: 6, kind: input, shape index: {}]
  %s7 = inlined_call_operand.vmem [shape: bf16[32,128], index: 7, kind: input, shape index: {}]
  %s8 = inlined_call_operand.vmem [shape: bf16[128,32], index: 8, kind: input, shape index: {}]
  %s9 = inlined_call_operand.vmem [shape: bf16[32,32], index: 9, kind: input, shape index: {}]
  %s10 = inlined_call_operand.vmem [shape: bf16[32,64], index: 10, kind: input, shape index: {}]
  %s11 = inlined_call_operand.vmem [shape: bf16[32,32], index: 11, kind: input, shape index: {}]
  %s12 = inlined_call_operand.vmem [shape: bf16[32,128], index: 12, kind: input, shape index: {}]
  %s13 = inlined_call_operand.vmem [shape: bf16[128,32], index: 13, kind: input, shape index: {}]
  %s14 = inlined_call_operand.vmem [shape: bf16[32,32], index: 14, kind: input, shape index: {}]
  %s15 = inlined_call_operand.vmem [shape: bf16[16,32], index: 15, kind: output, shape index: {}]
  %s16 = sld [smem:[#allocation0]]
  $region70: #{forward.2} parent=0
    _
  %s18 = ssub.s32 1, %s16
  %s19 = scalar_select 0, %s18, %s16
  // Predicated region
  $region2: #{forward.2} parent=0 // pred_check
    _
  $region3: #{forward.2} parent=0 // pred_check_branch
    %21 = sbr.rel (0) target = $region5
  $region4: #{forward.2} parent=0 // pred_region
    _
  $region5: #{forward.2} parent=0 // pred_fallthru
    _
  // Predicated region
  $region6: #{forward.2} parent=0 // pred_check
    _
  $region7: #{forward.2} parent=0 // pred_check_branch
    %23 = sbr.rel (0) target = $region9
  $region8: #{forward.2} parent=0 // pred_region
    _
  $region9: #{forward.2} parent=0 // pred_fallthru
    _
  // Predicated region
  $region10: #{forward.2} parent=0 // pred_check
    _
  $region11: #{forward.2} parent=0 // pred_check_branch
    %25 = sbr.rel (0) target = $region13
  $region12: #{forward.2} parent=0 // pred_region
    _
  $region13: #{forward.2} parent=0 // pred_fallthru
    _
  // Predicated region
  $region14: #{forward.2} parent=0 // pred_check
    _
  $region15: #{forward.2} parent=0 // pred_check_branch
    %27 = sbr.rel (0) target = $region17
  $region16: #{forward.2} parent=0 // pred_region
    _
  $region17: #{forward.2} parent=0 // pred_fallthru
    _
  // Predicated region
  $region18: #{forward.2} parent=0 // pred_check
    _
  $region19: #{forward.2} parent=0 // pred_check_branch
    %29 = sbr.rel (0) target = $region21
  $region20: #{forward.2} parent=0 // pred_region
    _
  $region21: #{forward.2} parent=0 // pred_fallthru
    _
  // Predicated region
  $region22: #{forward.2} parent=0 // pred_check
    _
  $region23: #{forward.2} parent=0 // pred_check_branch
    %31 = sbr.rel (0) target = $region25
  $region24: #{forward.2} parent=0 // pred_region
    _
  $region25: #{forward.2} parent=0 // pred_fallthru
    _
  // Predicated region
  $region26: #{forward.2} parent=0 // pred_check
    _
  $region27: #{forward.2} parent=0 // pred_check_branch
    %33 = sbr.rel (0) target = $region29
  $region28: #{forward.2} parent=0 // pred_region
    _
  $region29: #{forward.2} parent=0 // pred_fallthru
    _
  // Predicated region
  $region30: #{forward.2} parent=0 // pred_check
    _
  $region31: #{forward.2} parent=0 // pred_check_branch
    %35 = sbr.rel (0) target = $region33
  $region32: #{forward.2} parent=0 // pred_region
    _
  $region33: #{forward.2} parent=0 // pred_fallthru
    _
  // Predicated region
  $region34: #{forward.2} parent=0 // pred_check
    _
  $region35: #{forward.2} parent=0 // pred_check_branch
    %37 = sbr.rel (0) target = $region37
  $region36: #{forward.2} parent=0 // pred_region
    _
  $region37: #{forward.2} parent=0 // pred_fallthru
    _
  // Predicated region
  $region38: #{forward.2} parent=0 // pred_check
    _
  $region39: #{forward.2} parent=0 // pred_check_branch
    %39 = sbr.rel (0) target = $region41
  $region40: #{forward.2} parent=0 // pred_region
    _
  $region41: #{forward.2} parent=0 // pred_fallthru
    _
  // Predicated region
  $region42: #{forward.2} parent=0 // pred_check
    _
  $region43: #{forward.2} parent=0 // pred_check_branch
    %41 = sbr.rel (0) target = $region45
  $region44: #{forward.2} parent=0 // pred_region
    _
  $region45: #{forward.2} parent=0 // pred_fallthru
    _
  // Predicated region
  $region46: #{forward.2} parent=0 // pred_check
    _
  $region47: #{forward.2} parent=0 // pred_check_branch
    %43 = sbr.rel (0) target = $region49
  $region48: #{forward.2} parent=0 // pred_region
    _
  $region49: #{forward.2} parent=0 // pred_fallthru
    _
  // Predicated region
  $region50: #{forward.2} parent=0 // pred_check
    _
  $region51: #{forward.2} parent=0 // pred_check_branch
    %45 = sbr.rel (0) target = $region53
  $region52: #{forward.2} parent=0 // pred_region
    _
  $region53: #{forward.2} parent=0 // pred_fallthru
    _
  // Predicated region
  $region54: #{forward.2} parent=0 // pred_check
    _
  $region55: #{forward.2} parent=0 // pred_check_branch
    %47 = sbr.rel (0) target = $region57
  $region56: #{forward.2} parent=0 // pred_region
    _
  $region57: #{forward.2} parent=0 // pred_fallthru
    _
  // Predicated region
  $region58: #{forward.2} parent=0 // pred_check
    _
  $region59: #{forward.2} parent=0 // pred_check_branch
    %49 = sbr.rel (0) target = $region61
  $region60: #{forward.2} parent=0 // pred_region
    _
  $region61: #{forward.2} parent=0 // pred_fallthru
    _
  %v51 = vld [vmem:[%s4] sm:$0xff]
  %v52 = vld [vmem:[%s4 + $0x8] sm:$0xff]
  %v53 = vld [vmem:[%s4 + $0x10] sm:$0x3f]
  %v54 = vld [vmem:[%s0] sm:$0xf]
  %v55 = vld [vmem:[%s0 + $0x4] sm:$0x1]
  %v56 = vunpack.c.l.bf16 %v54
  %v57 = vunpack.c.l.bf16 %v55
  %v58 = vld [vmem:[%s2] sm:$0xff]
  %v59 = vld [vmem:[%s2 + $0x8] sm:$0x3]
  %v60 = vld [vmem:[%s5] sm:$0xf]
  %v61 = vld [vmem:[%s5 + $0x4] sm:$0xf]
  %v62 = vld [vmem:[%s5 + $0x8] sm:$0xf]
  %v63 = vld [vmem:[%s5 + $0xc] sm:$0xf]
  %v64 = vld [vmem:[%s6] sm:$0xf]
  %v65 = vld [vmem:[%s6 + $0x4] sm:$0xf]
  %v66 = vld [vmem:[%s6 + $0x8] sm:$0xf]
  %v67 = vld [vmem:[%s6 + $0xc] sm:$0xf]
  %v68 = vld [vmem:[%s7] sm:$0xf]
  %v69 = vld [vmem:[%s7 + $0x4] sm:$0xf]
  %v70 = vld [vmem:[%s7 + $0x8] sm:$0xf]
  %v71 = vld [vmem:[%s7 + $0xc] sm:$0xf]
  %v72 = vld [vmem:[%s8] sm:$0xf]
  %v73 = vld [vmem:[%s8 + $0x4] sm:$0xf]
  %v74 = vld [vmem:[%s8 + $0x8] sm:$0xf]
  %v75 = vld [vmem:[%s8 + $0xc] sm:$0xf]
  %v76 = vld [vmem:[%s8 + $0x10] sm:$0xf]
  %v77 = vld [vmem:[%s8 + $0x14] sm:$0xf]
  %v78 = vld [vmem:[%s8 + $0x18] sm:$0xf]
  %v79 = vld [vmem:[%s8 + $0x1c] sm:$0xf]
  %v80 = vld [vmem:[%s8 + $0x20] sm:$0xf]
  %v81 = vld [vmem:[%s8 + $0x24] sm:$0xf]
  %v82 = vld [vmem:[%s8 + $0x28] sm:$0xf]
  %v83 = vld [vmem:[%s8 + $0x2c] sm:$0xf]
  %v84 = vld [vmem:[%s8 + $0x30] sm:$0xf]
  %v85 = vld [vmem:[%s8 + $0x34] sm:$0xf]
  %v86 = vld [vmem:[%s8 + $0x38] sm:$0xf]
  %v87 = vld [vmem:[%s8 + $0x3c] sm:$0xf]
  %vm88 = vcmask 261120
  %v89 = vsel %vm88, %v56, 0.0
  %90 = vadd.xlane.f32.xlu0 %v89
  %v91 = vpop.xlane.xlu0 %90
  %vm92 = vcmask 254976
  %v93 = vsel %vm92, %v57, 0.0
  %94 = vadd.xlane.f32.xlu0 %v93
  %v95 = vpop.xlane.xlu0 %94
  %v96 = vrcp.pop 32.0
  %v97 = vmul.f32 32.0, %v96
  %v98 = vsub.f32 1.0, %v97
  %v99 = vmul.f32 %v96, %v98
  %v100 = vadd.f32 %v96, %v99
  %vm101 = vweird.f32 %v96
  %v102 = vsel %vm101, %v96, %v100
  %v103 = vmul.f32 %v91, %v102
  %v104 = vmul.f32 %v95, %v102
  %v105 = vsub.f32 %v56, %v103
  %v106 = vsub.f32 %v57, %v104
  %v107 = vmul.f32 %v105, %v105
  %v108 = vmul.f32 %v106, %v106
  %v109 = vsel %vm88, %v107, 0.0
  %110 = vadd.xlane.f32.xlu0 %v109
  %v111 = vpop.xlane.xlu0 %110
  %v112 = vsel %vm92, %v108, 0.0
  %113 = vadd.xlane.f32.xlu0 %v112
  %v114 = vpop.xlane.xlu0 %113
  %v115 = vmul.f32 %v111, %v102
  %v116 = vmul.f32 %v114, %v102
  %v117 = vadd.f32 %v115, 1e-06
  %v118 = vadd.f32 %v116, 1e-06
  %v119 = vrsqrt.pop %v117
  %v120 = vmul.f32 %v119, %v117
  %v121 = vmul.f32 %v120, %v119
  %v122 = vmul.f32 0.5, %v121
  %v123 = vsub.f32 1.5, %v122
  %v124 = vmul.f32 %v119, %v123
  %vm125 = vweird.f32 %v117
  %vm126 = vweird.f32 %v119
  %vm127 = vmor %vm125, %vm126
  %v128 = vsel %vm127, %v119, %v124
  %v129 = vrsqrt.pop %v118
  %v130 = vmul.f32 %v129, %v118
  %v131 = vmul.f32 %v130, %v129
  %v132 = vmul.f32 0.5, %v131
  %v133 = vsub.f32 1.5, %v132
  %v134 = vmul.f32 %v129, %v133
  %vm135 = vweird.f32 %v118
  %vm136 = vweird.f32 %v129
  %vm137 = vmor %vm135, %vm136
  %v138 = vsel %vm137, %v129, %v134
  %v139 = vmul.f32 %v105, %v128
  %v140 = vmul.f32 %v106, %v138
  %v141 = vperm.slane %v51, 0
  %v142 = vmul.f32 %v139, %v141
  %v143 = vmul.f32 %v140, %v141
  %v144 = vperm.slane %v51, 1
  %v145 = vadd.f32 %v142, %v144
  %v146 = vadd.f32 %v143, %v144
  %v147 = vpack.c.bf16 %v146, %v145
  %v148 = vperm.slane %v51, 2
  %v153 = vunpack.c.l.b16 %v60
  %v154 = vunpack.c.l.b16 %v61
  %v155 = vunpack.c.l.b16 %v62
  %v156 = vunpack.c.l.b16 %v63
  %v157 = vpack.c.b16 %v154, %v153
  %v158 = vpack.c.b16 %v156, %v155
  %v162 = vsel %vm88, %v147, 0
  %164 = vmatpush.bf16.msra.mxu0 0
  %165 = vmatpush.bf16.msra.mxu0 0
  %166 = vmatpush.bf16.msra.mxu0 0
  %167 = vmatpush.bf16.msra.mxu0 0
  %168 = vmatpush.bf16.msra.mxu0 0
  %169 = vmatpush.bf16.msra.mxu0 0
  %170 = vmatpush.bf16.msra.mxu0 %v158
  %171 = vmatpush.bf16.msra.mxu0 %v157
  %172 = vmatmul.bf16.gmra.mxu0 %v162
  %v173 = vpop.f32.mrf.mxu0
  %v174 = vadd.f32 %v148, %v173
  %v175 = vpop.f32.mrf.mxu0
  %v176 = vadd.f32 %v148, %v175
  %177 = vdwg.mxu0
  %v178 = vpack.c.bf16 %v176, %v174
  %180 = vrot.lane.b32.xlu0 %v178, 96
  %v181 = vpop.permute.xlu0 %180
  %vm182 = vcmask 64512
  %v184 = vsel %vm182, %v178, 0
  %v187 = vsel %vm182, %v181, 0
  %189 = vmatpush.bf16.xpose.msra.mxu0 0
  %190 = vmatpush.bf16.xpose.msra.mxu0 0
  %191 = vmatpush.bf16.xpose.msra.mxu0 0
  %192 = vmatpush.bf16.xpose.msra.mxu0 0
  %193 = vmatpush.bf16.xpose.msra.mxu0 0
  %194 = vmatpush.bf16.xpose.msra.mxu0 0
  %195 = vmatpush.bf16.xpose.msra.mxu0 0
  %196 = vmatpush.bf16.xpose.msra.mxu0 %v187
  %197 = vmatmul.bf16.gmra.mxu0 %v184
  %v198 = vpop.f32.mrf.mxu0
  %v199 = vadd.f32 0.0, %v198
  %v200 = vpop.f32.mrf.mxu0
  %v201 = vadd.f32 0.0, %v200
  %202 = vdwg.mxu0
  %v203 = vmul.f32 %v199, 0.35355338
  %v204 = vmul.f32 %v201, 0.35355338
  %v205 = vadd.f32 %v203, %v58
  %v206 = vadd.f32 %v204, %v59
  %vm207 = vcmask 80896
  %v208 = vsel %vm207, %v205, -inf
  %209 = vmax.xlane.f32.xlu0 %v208
  %v210 = vpop.xlane.xlu0 %209
  %vm211 = vcmask 74752
  %v212 = vsel %vm211, %v206, -inf
  %213 = vmax.xlane.f32.xlu0 %v212
  %v214 = vpop.xlane.xlu0 %213
  %v215 = vsub.f32 %v205, %v210
  %v216 = vsub.f32 %v206, %v214
  %v217 = vmul.f32 %v215, 1.442695
  %v218 = vpow.pop %v217
  %v219 = vmul.f32 %v216, 1.442695
  %v220 = vpow.pop %v219
  %v221 = vsel %vm207, %v218, 0.0
  %222 = vadd.xlane.f32.xlu0 %v221
  %v223 = vpop.xlane.xlu0 %222
  %v224 = vsel %vm211, %v220, 0.0
  %225 = vadd.xlane.f32.xlu0 %v224
  %v226 = vpop.xlane.xlu0 %225
  %v227 = vrcp.pop %v223
  %v228 = vrcp.pop %v226
  %v229 = vmul.f32 %v218, %v227
  %v230 = vmul.f32 %v220, %v228
  %v231 = vpack.c.bf16 %v230, %v229
  %232 = vrot.lane.b32.xlu0 %v178, 64
  %v233 = vpop.permute.xlu0 %232
  %v235 = vsel %vm207, %v231, 0
  %vm237 = vcmask 1044480
  %v239 = vsel %vm237, %v233, 0
  %241 = vmatpush.bf16.msra.mxu0 0
  %242 = vmatpush.bf16.msra.mxu0 0
  %243 = vmatpush.bf16.msra.mxu0 0
  %244 = vmatpush.bf16.msra.mxu0 0
  %245 = vmatpush.bf16.msra.mxu0 0
  %246 = vmatpush.bf16.msra.mxu0 0
  %247 = vmatpush.bf16.msra.mxu0 0
  %248 = vmatpush.bf16.msra.mxu0 %v239
  %249 = vmatmul.bf16.gmra.mxu0 %v235
  %v250 = vpop.f32.mrf.mxu0
  %v251 = vadd.f32 0.0, %v250
  %v252 = vpop.f32.mrf.mxu0
  %v253 = vadd.f32 0.0, %v252
  %254 = vdwg.mxu0
  %255 = vrot.lane.b32.xlu0 %v178, 120
  %v256 = vpop.permute.xlu0 %255
  %257 = vrot.lane.b32.xlu0 %v178, 88
  %v258 = vpop.permute.xlu0 %257
  %v260 = vsel %vm182, %v256, 0
  %v263 = vsel %vm182, %v258, 0
  %265 = vmatpush.bf16.xpose.msra.mxu0 0
  %266 = vmatpush.bf16.xpose.msra.mxu0 0
  %267 = vmatpush.bf16.xpose.msra.mxu0 0
  %268 = vmatpush.bf16.xpose.msra.mxu0 0
  %269 = vmatpush.bf16.xpose.msra.mxu0 0
  %270 = vmatpush.bf16.xpose.msra.mxu0 0
  %271 = vmatpush.bf16.xpose.msra.mxu0 0
  %272 = vmatpush.bf16.xpose.msra.mxu0 %v263
  %273 = vmatmul.bf16.gmra.mxu0 %v260
  %v274 = vpop.f32.mrf.mxu0
  %v275 = vadd.f32 0.0, %v274
  %v276 = vpop.f32.mrf.mxu0
  %v277 = vadd.f32 0.0, %v276
  %278 = vdwg.mxu0
  %v279 = vmul.f32 %v275, 0.35355338
  %v280 = vmul.f32 %v277, 0.35355338
  %v281 = vadd.f32 %v279, %v58
  %v282 = vadd.f32 %v280, %v59
  %v283 = vsel %vm207, %v281, -inf
  %284 = vmax.xlane.f32.xlu0 %v283
  %v285 = vpop.xlane.xlu0 %284
  %v286 = vsel %vm211, %v282, -inf
  %287 = vmax.xlane.f32.xlu0 %v286
  %v288 = vpop.xlane.xlu0 %287
  %v289 = vsub.f32 %v281, %v285
  %v290 = vsub.f32 %v282, %v288
  %v291 = vmul.f32 %v289, 1.442695
  %v292 = vpow.pop %v291
  %v293 = vmul.f32 %v290, 1.442695
  %v294 = vpow.pop %v293
  %v295 = vsel %vm207, %v292, 0.0
  %296 = vadd.xlane.f32.xlu0 %v295
  %v297 = vpop.xlane.xlu0 %296
  %v298 = vsel %vm211, %v294, 0.0
  %299 = vadd.xlane.f32.xlu0 %v298
  %v300 = vpop.xlane.xlu0 %299
  %v301 = vrcp.pop %v297
  %v302 = vrcp.pop %v300
  %v303 = vmul.f32 %v292, %v301
  %v304 = vmul.f32 %v294, %v302
  %v305 = vpack.c.bf16 %v304, %v303
  %306 = vrot.lane.b32.xlu0 %v178, 56
  %v307 = vpop.permute.xlu0 %306
  %v309 = vsel %vm207, %v305, 0
  %v312 = vsel %vm237, %v307, 0
  %314 = vmatpush.bf16.msra.mxu0 0
  %315 = vmatpush.bf16.msra.mxu0 0
  %316 = vmatpush.bf16.msra.mxu0 0
  %317 = vmatpush.bf16.msra.mxu0 0
  %318 = vmatpush.bf16.msra.mxu0 0
  %319 = vmatpush.bf16.msra.mxu0 0
  %320 = vmatpush.bf16.msra.mxu0 0
  %321 = vmatpush.bf16.msra.mxu0 %v312
  %322 = vmatmul.bf16.gmra.mxu0 %v309
  %v323 = vpop.f32.mrf.mxu0
  %v324 = vadd.f32 0.0, %v323
  %v325 = vpop.f32.mrf.mxu0
  %v326 = vadd.f32 0.0, %v325
  %327 = vdwg.mxu0
  %328 = vrot.lane.b32.xlu0 %v178, 112
  %v329 = vpop.permute.xlu0 %328
  %330 = vrot.lane.b32.xlu0 %v178, 80
  %v331 = vpop.permute.xlu0 %330
  %v333 = vsel %vm182, %v329, 0
  %v336 = vsel %vm182, %v331, 0
  %338 = vmatpush.bf16.xpose.msra.mxu0 0
  %339 = vmatpush.bf16.xpose.msra.mxu0 0
  %340 = vmatpush.bf16.xpose.msra.mxu0 0
  %341 = vmatpush.bf16.xpose.msra.mxu0 0
  %342 = vmatpush.bf16.xpose.msra.mxu0 0
  %343 = vmatpush.bf16.xpose.msra.mxu0 0
  %344 = vmatpush.bf16.xpose.msra.mxu0 0
  %345 = vmatpush.bf16.xpose.msra.mxu0 %v336
  %346 = vmatmul.bf16.gmra.mxu0 %v333
  %v347 = vpop.f32.mrf.mxu0
  %v348 = vadd.f32 0.0, %v347
  %v349 = vpop.f32.mrf.mxu0
  %v350 = vadd.f32 0.0, %v349
  %351 = vdwg.mxu0
  %v352 = vmul.f32 %v348, 0.35355338
  %v353 = vmul.f32 %v350, 0.35355338
  %v354 = vadd.f32 %v352, %v58
  %v355 = vadd.f32 %v353, %v59
  %v356 = vsel %vm207, %v354, -inf
  %357 = vmax.xlane.f32.xlu0 %v356
  %v358 = vpop.xlane.xlu0 %357
  %v359 = vsel %vm211, %v355, -inf
  %360 = vmax.xlane.f32.xlu0 %v359
  %v361 = vpop.xlane.xlu0 %360
  %v362 = vsub.f32 %v354, %v358
  %v363 = vsub.f32 %v355, %v361
  %v364 = vmul.f32 %v362, 1.442695
  %v365 = vpow.pop %v364
  %v366 = vmul.f32 %v363, 1.442695
  %v367 = vpow.pop %v366
  %v368 = vsel %vm207, %v365, 0.0
  %369 = vadd.xlane.f32.xlu0 %v368
  %v370 = vpop.xlane.xlu0 %369
  %v371 = vsel %vm211, %v367, 0.0
  %372 = vadd.xlane.f32.xlu0 %v371
  %v373 = vpop.xlane.xlu0 %372
  %v374 = vrcp.pop %v370
  %v375 = vrcp.pop %v373
  %v376 = vmul.f32 %v365, %v374
  %v377 = vmul.f32 %v367, %v375
  %v378 = vpack.c.bf16 %v377, %v376
  %379 = vrot.lane.b32.xlu0 %v178, 48
  %v380 = vpop.permute.xlu0 %379
  %v382 = vsel %vm207, %v378, 0
  %v385 = vsel %vm237, %v380, 0
  %387 = vmatpush.bf16.msra.mxu0 0
  %388 = vmatpush.bf16.msra.mxu0 0
  %389 = vmatpush.bf16.msra.mxu0 0
  %390 = vmatpush.bf16.msra.mxu0 0
  %391 = vmatpush.bf16.msra.mxu0 0
  %392 = vmatpush.bf16.msra.mxu0 0
  %393 = vmatpush.bf16.msra.mxu0 0
  %394 = vmatpush.bf16.msra.mxu0 %v385
  %395 = vmatmul.bf16.gmra.mxu0 %v382
  %v396 = vpop.f32.mrf.mxu0
  %v397 = vadd.f32 0.0, %v396
  %v398 = vpop.f32.mrf.mxu0
  %v399 = vadd.f32 0.0, %v398
  %400 = vdwg.mxu0
  %401 = vrot.lane.b32.xlu0 %v178, 104
  %v402 = vpop.permute.xlu0 %401
  %403 = vrot.lane.b32.xlu0 %v178, 72
  %v404 = vpop.permute.xlu0 %403
  %v406 = vsel %vm182, %v402, 0
  %v409 = vsel %vm182, %v404, 0
  %411 = vmatpush.bf16.xpose.msra.mxu0 0
  %412 = vmatpush.bf16.xpose.msra.mxu0 0
  %413 = vmatpush.bf16.xpose.msra.mxu0 0
  %414 = vmatpush.bf16.xpose.msra.mxu0 0
  %415 = vmatpush.bf16.xpose.msra.mxu0 0
  %416 = vmatpush.bf16.xpose.msra.mxu0 0
  %417 = vmatpush.bf16.xpose.msra.mxu0 0
  %418 = vmatpush.bf16.xpose.msra.mxu0 %v409
  %419 = vmatmul.bf16.gmra.mxu0 %v406
  %v420 = vpop.f32.mrf.mxu0
  %v421 = vadd.f32 0.0, %v420
  %v422 = vpop.f32.mrf.mxu0
  %v423 = vadd.f32 0.0, %v422
  %424 = vdwg.mxu0
  %v425 = vmul.f32 %v421, 0.35355338
  %v426 = vmul.f32 %v423, 0.35355338
  %v427 = vadd.f32 %v425, %v58
  %v428 = vadd.f32 %v426, %v59
  %v429 = vsel %vm207, %v427, -inf
  %430 = vmax.xlane.f32.xlu0 %v429
  %v431 = vpop.xlane.xlu0 %430
  %v432 = vsel %vm211, %v428, -inf
  %433 = vmax.xlane.f32.xlu0 %v432
  %v434 = vpop.xlane.xlu0 %433
  %v435 = vsub.f32 %v427, %v431
  %v436 = vsub.f32 %v428, %v434
  %v437 = vmul.f32 %v435, 1.442695
  %v438 = vpow.pop %v437
  %v439 = vmul.f32 %v436, 1.442695
  %v440 = vpow.pop %v439
  %v441 = vsel %vm207, %v438, 0.0
  %442 = vadd.xlane.f32.xlu0 %v441
  %v443 = vpop.xlane.xlu0 %442
  %v444 = vsel %vm211, %v440, 0.0
  %445 = vadd.xlane.f32.xlu0 %v444
  %v446 = vpop.xlane.xlu0 %445
  %v447 = vrcp.pop %v443
  %v448 = vrcp.pop %v446
  %v449 = vmul.f32 %v438, %v447
  %v450 = vmul.f32 %v440, %v448
  %v451 = vpack.c.bf16 %v450, %v449
  %452 = vrot.lane.b32.xlu0 %v178, 40
  %v453 = vpop.permute.xlu0 %452
  %v455 = vsel %vm207, %v451, 0
  %v458 = vsel %vm237, %v453, 0
  %460 = vmatpush.bf16.msra.mxu0 0
  %461 = vmatpush.bf16.msra.mxu0 0
  %462 = vmatpush.bf16.msra.mxu0 0
  %463 = vmatpush.bf16.msra.mxu0 0
  %464 = vmatpush.bf16.msra.mxu0 0
  %465 = vmatpush.bf16.msra.mxu0 0
  %466 = vmatpush.bf16.msra.mxu0 0
  %467 = vmatpush.bf16.msra.mxu0 %v458
  %468 = vmatmul.bf16.gmra.mxu0 %v455
  %v469 = vpop.f32.mrf.mxu0
  %v470 = vadd.f32 0.0, %v469
  %v471 = vpop.f32.mrf.mxu0
  %v472 = vadd.f32 0.0, %v471
  %473 = vdwg.mxu0
  %476 = vrot.lane.b32.xlu0 %v324, 8
  %v477 = vpop.permute.xlu0 %476
  %478 = vrot.lane.b32.xlu0 %v326, 8
  %v479 = vpop.permute.xlu0 %478
  %484 = vrot.lane.b32.xlu0 %v397, 16
  %v485 = vpop.permute.xlu0 %484
  %486 = vrot.lane.b32.xlu0 %v399, 16
  %v487 = vpop.permute.xlu0 %486
  %492 = vrot.lane.b32.xlu0 %v470, 24
  %v493 = vpop.permute.xlu0 %492
  %494 = vrot.lane.b32.xlu0 %v472, 24
  %v495 = vpop.permute.xlu0 %494
  %v498 = vsel %vm182, %v251, %v477
  %v499 = vsel %vm182, %v253, %v479
  %vm500 = vcmask 130048
  %v501 = vsel %vm500, %v498, %v485
  %v502 = vsel %vm500, %v499, %v487
  %vm503 = vcmask 195584
  %v504 = vsel %vm503, %v501, %v493
  %v505 = vsel %vm503, %v502, %v495
  %v506 = vpack.c.bf16 %v505, %v504
  %v511 = vunpack.c.l.b16 %v64
  %v512 = vunpack.c.l.b16 %v65
  %v513 = vunpack.c.l.b16 %v66
  %v514 = vunpack.c.l.b16 %v67
  %v515 = vpack.c.b16 %v512, %v511
  %v516 = vpack.c.b16 %v514, %v513
  %v520 = vsel %vm88, %v506, 0
  %522 = vmatpush.bf16.msra.mxu0 0
  %523 = vmatpush.bf16.msra.mxu0 0
  %524 = vmatpush.bf16.msra.mxu0 0
  %525 = vmatpush.bf16.msra.mxu0 0
  %526 = vmatpush.bf16.msra.mxu0 0
  %527 = vmatpush.bf16.msra.mxu0 0
  %528 = vmatpush.bf16.msra.mxu0 %v516
  %529 = vmatpush.bf16.msra.mxu0 %v515
  %530 = vmatmul.bf16.gmra.mxu0 %v520
  %v531 = vpop.f32.mrf.mxu0
  %v532 = vadd.f32 0.0, %v531
  %v533 = vpop.f32.mrf.mxu0
  %v534 = vadd.f32 0.0, %v533
  %535 = vdwg.mxu0
  %v536 = vadd.f32 %v56, %v532
  %v537 = vadd.f32 %v57, %v534
  %v538 = vperm.slane %v51, 3
  %v539 = vadd.f32 %v536, %v538
  %v540 = vadd.f32 %v537, %v538
  %v541 = vsel %vm88, %v539, 0.0
  %542 = vadd.xlane.f32.xlu0 %v541
  %v543 = vpop.xlane.xlu0 %542
  %v544 = vsel %vm92, %v540, 0.0
  %545 = vadd.xlane.f32.xlu0 %v544
  %v546 = vpop.xlane.xlu0 %545
  %v547 = vmul.f32 %v543, %v102
  %v548 = vmul.f32 %v546, %v102
  %v549 = vsub.f32 %v539, %v547
  %v550 = vsub.f32 %v540, %v548
  %v551 = vmul.f32 %v549, %v549
  %v552 = vmul.f32 %v550, %v550
  %v553 = vsel %vm88, %v551, 0.0
  %554 = vadd.xlane.f32.xlu0 %v553
  %v555 = vpop.xlane.xlu0 %554
  %v556 = vsel %vm92, %v552, 0.0
  %557 = vadd.xlane.f32.xlu0 %v556
  %v558 = vpop.xlane.xlu0 %557
  %v559 = vmul.f32 %v555, %v102
  %v560 = vmul.f32 %v558, %v102
  %v561 = vadd.f32 %v559, 1e-06
  %v562 = vadd.f32 %v560, 1e-06
  %v563 = vrsqrt.pop %v561
  %v564 = vmul.f32 %v563, %v561
  %v565 = vmul.f32 %v564, %v563
  %v566 = vmul.f32 0.5, %v565
  %v567 = vsub.f32 1.5, %v566
  %v568 = vmul.f32 %v563, %v567
  %vm569 = vweird.f32 %v561
  %vm570 = vweird.f32 %v563
  %vm571 = vmor %vm569, %vm570
  %v572 = vsel %vm571, %v563, %v568
  %v573 = vrsqrt.pop %v562
  %v574 = vmul.f32 %v573, %v562
  %v575 = vmul.f32 %v574, %v573
  %v576 = vmul.f32 0.5, %v575
  %v577 = vsub.f32 1.5, %v576
  %v578 = vmul.f32 %v573, %v577
  %vm579 = vweird.f32 %v562
  %vm580 = vweird.f32 %v573
  %vm581 = vmor %vm579, %vm580
  %v582 = vsel %vm581, %v573, %v578
  %v583 = vmul.f32 %v549, %v572
  %v584 = vmul.f32 %v550, %v582
  %v585 = vperm.slane %v51, 4
  %v586 = vmul.f32 %v583, %v585
  %v587 = vmul.f32 %v584, %v585
  %v588 = vperm.slane %v51, 5
  %v589 = vadd.f32 %v586, %v588
  %v590 = vadd.f32 %v587, %v588
  %v591 = vpack.c.bf16 %v590, %v589
  %v592 = vperm.slane %v51, 6
  %v597 = vunpack.c.l.b16 %v68
  %v598 = vunpack.c.l.b16 %v69
  %v599 = vunpack.c.l.b16 %v70
  %v600 = vunpack.c.l.b16 %v71
  %v601 = vpack.c.b16 %v598, %v597
  %v602 = vpack.c.b16 %v600, %v599
  %v606 = vsel %vm88, %v591, 0
  %608 = vmatpush.bf16.msra.mxu0 0
  %609 = vmatpush.bf16.msra.mxu0 0
  %610 = vmatpush.bf16.msra.mxu0 0
  %611 = vmatpush.bf16.msra.mxu0 0
  %612 = vmatpush.bf16.msra.mxu0 0
  %613 = vmatpush.bf16.msra.mxu0 0
  %614 = vmatpush.bf16.msra.mxu0 %v602
  %615 = vmatpush.bf16.msra.mxu0 %v601
  %616 = vmatmul.bf16.gmra.mxu0 %v606
  %v617 = vpop.f32.mrf.mxu0
  %v618 = vadd.f32 %v592, %v617
  %v619 = vpop.f32.mrf.mxu0
  %v620 = vadd.f32 %v592, %v619
  %621 = vdwg.mxu0
  %v622 = vmul.f32 %v618, %v618
  %v623 = vmul.f32 %v620, %v620
  %v624 = vmul.f32 %v618, %v622
  %v625 = vmul.f32 %v620, %v623
  %v626 = vmul.f32 %v624, 0.044715
  %v627 = vmul.f32 %v625, 0.044715
  %v628 = vadd.f32 %v618, %v626
  %v629 = vadd.f32 %v620, %v627
  %v630 = vmul.f32 %v628, 0.7978846
  %v631 = vmul.f32 %v629, 0.7978846
  %v632 = vtanh.pop %v630
  %v633 = vtanh.pop %v631
  %v634 = vadd.f32 %v632, 1.0
  %v635 = vadd.f32 %v633, 1.0
  %v636 = vmul.f32 %v634, 0.5
  %v637 = vmul.f32 %v635, 0.5
  %v638 = vmul.f32 %v618, %v636
  %v639 = vmul.f32 %v620, %v637
  %v640 = vpack.c.bf16 %v639, %v638
  %v657 = vunpack.c.l.b16 %v72
  %v658 = vunpack.c.l.b16 %v73
  %v659 = vunpack.c.l.b16 %v74
  %v660 = vunpack.c.l.b16 %v75
  %v661 = vunpack.c.l.b16 %v76
  %v662 = vunpack.c.l.b16 %v77
  %v663 = vunpack.c.l.b16 %v78
  %v664 = vunpack.c.l.b16 %v79
  %v665 = vunpack.c.l.b16 %v80
  %v666 = vunpack.c.l.b16 %v81
  %v667 = vunpack.c.l.b16 %v82
  %v668 = vunpack.c.l.b16 %v83
  %v669 = vunpack.c.l.b16 %v84
  %v670 = vunpack.c.l.b16 %v85
  %v671 = vunpack.c.l.b16 %v86
  %v672 = vunpack.c.l.b16 %v87
  %v673 = vpack.c.b16 %v658, %v657
  %v674 = vpack.c.b16 %v660, %v659
  %v675 = vpack.c.b16 %v662, %v661
  %v676 = vpack.c.b16 %v664, %v663
  %v677 = vpack.c.b16 %v666, %v665
  %v678 = vpack.c.b16 %v668, %v667
  %v679 = vpack.c.b16 %v670, %v669
  %v680 = vpack.c.b16 %v672, %v671
  %689 = vmatpush.bf16.msra.mxu0 %v680
  %690 = vmatpush.bf16.msra.mxu0 %v679
  %691 = vmatpush.bf16.msra.mxu0 %v678
  %692 = vmatpush.bf16.msra.mxu0 %v677
  %693 = vmatpush.bf16.msra.mxu0 %v676
  %694 = vmatpush.bf16.msra.mxu0 %v675
  %695 = vmatpush.bf16.msra.mxu0 %v674
  %696 = vmatpush.bf16.msra.mxu0 %v673
  %697 = vmatmul.bf16.gmra.mxu0 %v640
  %v698 = vpop.f32.mrf.mxu0
  %v699 = vadd.f32 0.0, %v698
  %v700 = vpop.f32.mrf.mxu0
  %v701 = vadd.f32 0.0, %v700
  %702 = vdwg.mxu0
  %v703 = vadd.f32 %v539, %v699
  %v704 = vadd.f32 %v540, %v701
  %v705 = vperm.slane %v51, 7
  %v706 = vadd.f32 %v703, %v705
  %v707 = vadd.f32 %v704, %v705
  %v708 = vsel %vm88, %v706, 0.0
  %709 = vadd.xlane.f32.xlu0 %v708
  %v710 = vpop.xlane.xlu0 %709
  %v711 = vsel %vm92, %v707, 0.0
  %712 = vadd.xlane.f32.xlu0 %v711
  %v713 = vpop.xlane.xlu0 %712
  %v714 = vmul.f32 %v710, %v102
  %v715 = vmul.f32 %v713, %v102
  %v716 = vsub.f32 %v706, %v714
  %v717 = vsub.f32 %v707, %v715
  %v718 = vmul.f32 %v716, %v716
  %v719 = vmul.f32 %v717, %v717
  %v720 = vsel %vm88, %v718, 0.0
  %721 = vadd.xlane.f32.xlu0 %v720
  %v722 = vpop.xlane.xlu0 %721
  %v723 = vsel %vm92, %v719, 0.0
  %724 = vadd.xlane.f32.xlu0 %v723
  %v725 = vpop.xlane.xlu0 %724
  %v726 = vmul.f32 %v722, %v102
  %v727 = vmul.f32 %v725, %v102
  %v728 = vadd.f32 %v726, 1e-06
  %v729 = vadd.f32 %v727, 1e-06
  %v730 = vrsqrt.pop %v728
  %v731 = vmul.f32 %v730, %v728
  %v732 = vmul.f32 %v731, %v730
  %v733 = vmul.f32 0.5, %v732
  %v734 = vsub.f32 1.5, %v733
  %v735 = vmul.f32 %v730, %v734
  %vm736 = vweird.f32 %v728
  %vm737 = vweird.f32 %v730
  %vm738 = vmor %vm736, %vm737
  %v739 = vsel %vm738, %v730, %v735
  %v740 = vrsqrt.pop %v729
  %v741 = vmul.f32 %v740, %v729
  %v742 = vmul.f32 %v741, %v740
  %v743 = vmul.f32 0.5, %v742
  %v744 = vsub.f32 1.5, %v743
  %v745 = vmul.f32 %v740, %v744
  %vm746 = vweird.f32 %v729
  %vm747 = vweird.f32 %v740
  %vm748 = vmor %vm746, %vm747
  %v749 = vsel %vm748, %v740, %v745
  %v750 = vmul.f32 %v716, %v739
  %v751 = vmul.f32 %v717, %v749
  %v752 = vperm.slane %v52, 0
  %v753 = vmul.f32 %v750, %v752
  %v754 = vmul.f32 %v751, %v752
  %v755 = vperm.slane %v52, 1
  %v756 = vadd.f32 %v753, %v755
  %v757 = vadd.f32 %v754, %v755
  %v758 = vld [vmem:[%s1] sm:$0xff]
  %v759 = vsel %vm88, %v758, 0.0
  %760 = vadd.xlane.f32.xlu0 %v759
  %v761 = vpop.xlane.xlu0 %760
  %v762 = vmul.f32 %v761, %v102
  %v763 = vsub.f32 %v758, %v762
  %v764 = vmul.f32 %v763, %v763
  %v765 = vsel %vm88, %v764, 0.0
  %766 = vadd.xlane.f32.xlu0 %v765
  %v767 = vpop.xlane.xlu0 %766
  %v768 = vmul.f32 %v767, %v102
  %v769 = vadd.f32 %v768, 1e-06
  %v770 = vrsqrt.pop %v769
  %v771 = vmul.f32 %v770, %v769
  %v772 = vmul.f32 %v771, %v770
  %v773 = vmul.f32 0.5, %v772
  %v774 = vsub.f32 1.5, %v773
  %v775 = vmul.f32 %v770, %v774
  %vm776 = vweird.f32 %v769
  %vm777 = vweird.f32 %v770
  %vm778 = vmor %vm776, %vm777
  %v779 = vsel %vm778, %v770, %v775
  %v780 = vmul.f32 %v763, %v779
  %v781 = vperm.slane %v52, 2
  %v782 = vmul.f32 %v780, %v781
  %v783 = vperm.slane %v52, 3
  %v784 = vadd.f32 %v782, %v783
  %v785 = vsel %vm88, %v756, 0.0
  %786 = vadd.xlane.f32.xlu0 %v785
  %v787 = vpop.xlane.xlu0 %786
  %v788 = vsel %vm92, %v757, 0.0
  %789 = vadd.xlane.f32.xlu0 %v788
  %v790 = vpop.xlane.xlu0 %789
  %v791 = vmul.f32 %v787, %v102
  %v792 = vmul.f32 %v790, %v102
  %v793 = vsub.f32 %v756, %v791
  %v794 = vsub.f32 %v757, %v792
  %v795 = vmul.f32 %v793, %v793
  %v796 = vmul.f32 %v794, %v794
  %v797 = vsel %vm88, %v795, 0.0
  %798 = vadd.xlane.f32.xlu0 %v797
  %v799 = vpop.xlane.xlu0 %798
  %v800 = vsel %vm92, %v796, 0.0
  %801 = vadd.xlane.f32.xlu0 %v800
  %v802 = vpop.xlane.xlu0 %801
  %v803 = vmul.f32 %v799, %v102
  %v804 = vmul.f32 %v802, %v102
  %v805 = vadd.f32 %v803, 1e-06
  %v806 = vadd.f32 %v804, 1e-06
  %v807 = vrsqrt.pop %v805
  %v808 = vmul.f32 %v807, %v805
  %v809 = vmul.f32 %v808, %v807
  %v810 = vmul.f32 0.5, %v809
  %v811 = vsub.f32 1.5, %v810
  %v812 = vmul.f32 %v807, %v811
  %vm813 = vweird.f32 %v805
  %vm814 = vweird.f32 %v807
  %vm815 = vmor %vm813, %vm814
  %v816 = vsel %vm815, %v807, %v812
  %v817 = vrsqrt.pop %v806
  %v818 = vmul.f32 %v817, %v806
  %v819 = vmul.f32 %v818, %v817
  %v820 = vmul.f32 0.5, %v819
  %v821 = vsub.f32 1.5, %v820
  %v822 = vmul.f32 %v817, %v821
  %vm823 = vweird.f32 %v806
  %vm824 = vweird.f32 %v817
  %vm825 = vmor %vm823, %vm824
  %v826 = vsel %vm825, %v817, %v822
  %v827 = vmul.f32 %v793, %v816
  %v828 = vmul.f32 %v794, %v826
  %v829 = vperm.slane %v52, 4
  %v830 = vmul.f32 %v827, %v829
  %v831 = vmul.f32 %v828, %v829
  %v832 = vperm.slane %v52, 5
  %v833 = vadd.f32 %v830, %v832
  %v834 = vadd.f32 %v831, %v832
  %v835 = vld [vmem:[%s9] sm:$0xf]
  %v836 = vld [vmem:[%s9 + $0x4] sm:$0xf]
  %v837 = vld [vmem:[%s9 + $0x8] sm:$0xf]
  %v838 = vld [vmem:[%s9 + $0xc] sm:$0xf]
  %v839 = vpack.c.bf16 %v784, %v784
  %v840 = vperm.slane %v52, 6
  %v845 = vunpack.c.l.b16 %v835
  %v846 = vunpack.c.l.b16 %v836
  %v847 = vunpack.c.l.b16 %v837
  %v848 = vunpack.c.l.b16 %v838
  %v849 = vpack.c.b16 %v846, %v845
  %v850 = vpack.c.b16 %v848, %v847
  %v854 = vsel %vm88, %v839, 0
  %856 = vmatpush.bf16.msra.mxu0 0
  %857 = vmatpush.bf16.msra.mxu0 0
  %858 = vmatpush.bf16.msra.mxu0 0
  %859 = vmatpush.bf16.msra.mxu0 0
  %860 = vmatpush.bf16.msra.mxu0 0
  %861 = vmatpush.bf16.msra.mxu0 0
  %862 = vmatpush.bf16.msra.mxu0 %v850
  %863 = vmatpush.bf16.msra.mxu0 %v849
  %864 = vmatmul.bf16.gmra.mxu0 %v854
  %v865 = vpop.f32.mrf.mxu0
  %v866 = vadd.f32 %v840, %v865
  %v867 = vpop.f32.mrf.mxu0
  %868 = vdwg.mxu0
  %v869 = vld [vmem:[%s10] sm:$0xf]
  %v870 = vld [vmem:[%s10 + $0x4] sm:$0xf]
  %v871 = vld [vmem:[%s10 + $0x8] sm:$0xf]
  %v872 = vld [vmem:[%s10 + $0xc] sm:$0xf]
  %v873 = vpack.c.bf16 %v834, %v833
  %v874 = vperm.slane %v52, 7
  %v879 = vunpack.c.l.b16 %v869
  %v880 = vunpack.c.l.b16 %v870
  %v881 = vunpack.c.l.b16 %v871
  %v882 = vunpack.c.l.b16 %v872
  %v883 = vpack.c.b16 %v880, %v879
  %v884 = vpack.c.b16 %v882, %v881
  %v888 = vsel %vm88, %v873, 0
  %890 = vmatpush.bf16.msra.mxu0 0
  %891 = vmatpush.bf16.msra.mxu0 0
  %892 = vmatpush.bf16.msra.mxu0 0
  %893 = vmatpush.bf16.msra.mxu0 0
  %894 = vmatpush.bf16.msra.mxu0 0
  %895 = vmatpush.bf16.msra.mxu0 0
  %896 = vmatpush.bf16.msra.mxu0 %v884
  %897 = vmatpush.bf16.msra.mxu0 %v883
  %898 = vmatmul.bf16.gmra.mxu0 %v888
  %v899 = vpop.f32.mrf.mxu0
  %v900 = vadd.f32 %v874, %v899
  %v901 = vpop.f32.mrf.mxu0
  %v902 = vadd.f32 %v874, %v901
  %903 = vdwg.mxu0
  %v904 = vld [vmem:[%s11] sm:$0xf]
  %v905 = vld [vmem:[%s11 + $0x4] sm:$0xf]
  %v906 = vld [vmem:[%s11 + $0x8] sm:$0xf]
  %v907 = vld [vmem:[%s11 + $0xc] sm:$0xf]
  %v908 = vld [vmem:[%s3] sm:$0xff]
  %v909 = vld [vmem:[%s3 + $0x8] sm:$0xff]
  %v910 = vpack.c.bf16 %v866, %v866
  %v911 = vpack.c.bf16 %v902, %v900
  %v913 = vsel %vm182, %v910, 0
  %v916 = vsel %vm182, %v911, 0
  %918 = vmatpush.bf16.xpose.msra.mxu0 0
  %919 = vmatpush.bf16.xpose.msra.mxu0 0
  %920 = vmatpush.bf16.xpose.msra.mxu0 0
  %921 = vmatpush.bf16.xpose.msra.mxu0 0
  %922 = vmatpush.bf16.xpose.msra.mxu0 0
  %923 = vmatpush.bf16.xpose.msra.mxu0 0
  %924 = vmatpush.bf16.xpose.msra.mxu0 0
  %925 = vmatpush.bf16.xpose.msra.mxu0 %v916
  %926 = vmatmul.bf16.gmra.mxu0 %v913
  %v927 = vpop.f32.mrf.mxu0
  %v928 = vadd.f32 0.0, %v927
  %v929 = vpop.f32.mrf.mxu0
  %v930 = vadd.f32 0.0, %v929
  %931 = vdwg.mxu0
  %v932 = vmul.f32 %v928, 0.35355338
  %v933 = vmul.f32 %v930, 0.35355338
  %v934 = vadd.f32 %v932, %v908
  %v935 = vadd.f32 %v933, %v909
  %v936 = vsel %vm207, %v934, -inf
  %937 = vmax.xlane.f32.xlu0 %v936
  %v938 = vpop.xlane.xlu0 %937
  %v939 = vsel %vm207, %v935, -inf
  %940 = vmax.xlane.f32.xlu0 %v939
  %v941 = vpop.xlane.xlu0 %940
  %v942 = vsub.f32 %v934, %v938
  %v943 = vsub.f32 %v935, %v941
  %v944 = vmul.f32 %v942, 1.442695
  %v945 = vpow.pop %v944
  %v946 = vmul.f32 %v943, 1.442695
  %v947 = vpow.pop %v946
  %v948 = vsel %vm207, %v945, 0.0
  %949 = vadd.xlane.f32.xlu0 %v948
  %v950 = vpop.xlane.xlu0 %949
  %v951 = vsel %vm207, %v947, 0.0
  %952 = vadd.xlane.f32.xlu0 %v951
  %v953 = vpop.xlane.xlu0 %952
  %v954 = vrcp.pop %v950
  %v955 = vrcp.pop %v953
  %v956 = vmul.f32 %v945, %v954
  %v957 = vmul.f32 %v947, %v955
  %v958 = vpack.c.bf16 %v957, %v956
  %960 = vrot.lane.b32.xlu0 %v911, 96
  %v961 = vpop.permute.xlu0 %960
  %v963 = vsel %vm207, %v958, 0
  %v966 = vsel %vm237, %v961, 0
  %968 = vmatpush.bf16.msra.mxu0 0
  %969 = vmatpush.bf16.msra.mxu0 0
  %970 = vmatpush.bf16.msra.mxu0 0
  %971 = vmatpush.bf16.msra.mxu0 0
  %972 = vmatpush.bf16.msra.mxu0 0
  %973 = vmatpush.bf16.msra.mxu0 0
  %974 = vmatpush.bf16.msra.mxu0 0
  %975 = vmatpush.bf16.msra.mxu0 %v966
  %976 = vmatmul.bf16.gmra.mxu0 %v963
  %v977 = vpop.f32.mrf.mxu0
  %v978 = vadd.f32 0.0, %v977
  %v979 = vpop.f32.mrf.mxu0
  %v980 = vadd.f32 0.0, %v979
  %981 = vdwg.mxu0
  %983 = vrot.lane.b32.xlu0 %v910, 120
  %v984 = vpop.permute.xlu0 %983
  %985 = vrot.lane.b32.xlu0 %v911, 120
  %v986 = vpop.permute.xlu0 %985
  %v988 = vsel %vm182, %v984, 0
  %v991 = vsel %vm182, %v986, 0
  %993 = vmatpush.bf16.xpose.msra.mxu0 0
  %994 = vmatpush.bf16.xpose.msra.mxu0 0
  %995 = vmatpush.bf16.xpose.msra.mxu0 0
  %996 = vmatpush.bf16.xpose.msra.mxu0 0
  %997 = vmatpush.bf16.xpose.msra.mxu0 0
  %998 = vmatpush.bf16.xpose.msra.mxu0 0
  %999 = vmatpush.bf16.xpose.msra.mxu0 0
  %1000 = vmatpush.bf16.xpose.msra.mxu0 %v991
  %1001 = vmatmul.bf16.gmra.mxu0 %v988
  %v1002 = vpop.f32.mrf.mxu0
  %v1003 = vadd.f32 0.0, %v1002
  %v1004 = vpop.f32.mrf.mxu0
  %v1005 = vadd.f32 0.0, %v1004
  %1006 = vdwg.mxu0
  %v1007 = vmul.f32 %v1003, 0.35355338
  %v1008 = vmul.f32 %v1005, 0.35355338
  %v1009 = vadd.f32 %v1007, %v908
  %v1010 = vadd.f32 %v1008, %v909
  %v1011 = vsel %vm207, %v1009, -inf
  %1012 = vmax.xlane.f32.xlu0 %v1011
  %v1013 = vpop.xlane.xlu0 %1012
  %v1014 = vsel %vm207, %v1010, -inf
  %1015 = vmax.xlane.f32.xlu0 %v1014
  %v1016 = vpop.xlane.xlu0 %1015
  %v1017 = vsub.f32 %v1009, %v1013
  %v1018 = vsub.f32 %v1010, %v1016
  %v1019 = vmul.f32 %v1017, 1.442695
  %v1020 = vpow.pop %v1019
  %v1021 = vmul.f32 %v1018, 1.442695
  %v1022 = vpow.pop %v1021
  %v1023 = vsel %vm207, %v1020, 0.0
  %1024 = vadd.xlane.f32.xlu0 %v1023
  %v1025 = vpop.xlane.xlu0 %1024
  %v1026 = vsel %vm207, %v1022, 0.0
  %1027 = vadd.xlane.f32.xlu0 %v1026
  %v1028 = vpop.xlane.xlu0 %1027
  %v1029 = vrcp.pop %v1025
  %v1030 = vrcp.pop %v1028
  %v1031 = vmul.f32 %v1020, %v1029
  %v1032 = vmul.f32 %v1022, %v1030
  %v1033 = vpack.c.bf16 %v1032, %v1031
  %1034 = vrot.lane.b32.xlu0 %v911, 88
  %v1035 = vpop.permute.xlu0 %1034
  %v1037 = vsel %vm207, %v1033, 0
  %v1040 = vsel %vm237, %v1035, 0
  %1042 = vmatpush.bf16.msra.mxu0 0
  %1043 = vmatpush.bf16.msra.mxu0 0
  %1044 = vmatpush.bf16.msra.mxu0 0
  %1045 = vmatpush.bf16.msra.mxu0 0
  %1046 = vmatpush.bf16.msra.mxu0 0
  %1047 = vmatpush.bf16.msra.mxu0 0
  %1048 = vmatpush.bf16.msra.mxu0 0
  %1049 = vmatpush.bf16.msra.mxu0 %v1040
  %1050 = vmatmul.bf16.gmra.mxu0 %v1037
  %v1051 = vpop.f32.mrf.mxu0
  %v1052 = vadd.f32 0.0, %v1051
  %v1053 = vpop.f32.mrf.mxu0
  %v1054 = vadd.f32 0.0, %v1053
  %1055 = vdwg.mxu0
  %1056 = vrot.lane.b32.xlu0 %v910, 112
  %v1057 = vpop.permute.xlu0 %1056
  %1058 = vrot.lane.b32.xlu0 %v911, 112
  %v1059 = vpop.permute.xlu0 %1058
  %v1061 = vsel %vm182, %v1057, 0
  %v1064 = vsel %vm182, %v1059, 0
  %1066 = vmatpush.bf16.xpose.msra.mxu0 0
  %1067 = vmatpush.bf16.xpose.msra.mxu0 0
  %1068 = vmatpush.bf16.xpose.msra.mxu0 0
  %1069 = vmatpush.bf16.xpose.msra.mxu0 0
  %1070 = vmatpush.bf16.xpose.msra.mxu0 0
  %1071 = vmatpush.bf16.xpose.msra.mxu0 0
  %1072 = vmatpush.bf16.xpose.msra.mxu0 0
  %1073 = vmatpush.bf16.xpose.msra.mxu0 %v1064
  %1074 = vmatmul.bf16.gmra.mxu0 %v1061
  %v1075 = vpop.f32.mrf.mxu0
  %v1076 = vadd.f32 0.0, %v1075
  %v1077 = vpop.f32.mrf.mxu0
  %v1078 = vadd.f32 0.0, %v1077
  %1079 = vdwg.mxu0
  %v1080 = vmul.f32 %v1076, 0.35355338
  %v1081 = vmul.f32 %v1078, 0.35355338
  %v1082 = vadd.f32 %v1080, %v908
  %v1083 = vadd.f32 %v1081, %v909
  %v1084 = vsel %vm207, %v1082, -inf
  %1085 = vmax.xlane.f32.xlu0 %v1084
  %v1086 = vpop.xlane.xlu0 %1085
  %v1087 = vsel %vm207, %v1083, -inf
  %1088 = vmax.xlane.f32.xlu0 %v1087
  %v1089 = vpop.xlane.xlu0 %1088
  %v1090 = vsub.f32 %v1082, %v1086
  %v1091 = vsub.f32 %v1083, %v1089
  %v1092 = vmul.f32 %v1090, 1.442695
  %v1093 = vpow.pop %v1092
  %v1094 = vmul.f32 %v1091, 1.442695
  %v1095 = vpow.pop %v1094
  %v1096 = vsel %vm207, %v1093, 0.0
  %1097 = vadd.xlane.f32.xlu0 %v1096
  %v1098 = vpop.xlane.xlu0 %1097
  %v1099 = vsel %vm207, %v1095, 0.0
  %1100 = vadd.xlane.f32.xlu0 %v1099
  %v1101 = vpop.xlane.xlu0 %1100
  %v1102 = vrcp.pop %v1098
  %v1103 = vrcp.pop %v1101
  %v1104 = vmul.f32 %v1093, %v1102
  %v1105 = vmul.f32 %v1095, %v1103
  %v1106 = vpack.c.bf16 %v1105, %v1104
  %1107 = vrot.lane.b32.xlu0 %v911, 80
  %v1108 = vpop.permute.xlu0 %1107
  %v1110 = vsel %vm207, %v1106, 0
  %v1113 = vsel %vm237, %v1108, 0
  %1115 = vmatpush.bf16.msra.mxu0 0
  %1116 = vmatpush.bf16.msra.mxu0 0
  %1117 = vmatpush.bf16.msra.mxu0 0
  %1118 = vmatpush.bf16.msra.mxu0 0
  %1119 = vmatpush.bf16.msra.mxu0 0
  %1120 = vmatpush.bf16.msra.mxu0 0
  %1121 = vmatpush.bf16.msra.mxu0 0
  %1122 = vmatpush.bf16.msra.mxu0 %v1113
  %1123 = vmatmul.bf16.gmra.mxu0 %v1110
  %v1124 = vpop.f32.mrf.mxu0
  %v1125 = vadd.f32 0.0, %v1124
  %v1126 = vpop.f32.mrf.mxu0
  %v1127 = vadd.f32 0.0, %v1126
  %1128 = vdwg.mxu0
  %1129 = vrot.lane.b32.xlu0 %v910, 104
  %v1130 = vpop.permute.xlu0 %1129
  %1131 = vrot.lane.b32.xlu0 %v911, 104
  %v1132 = vpop.permute.xlu0 %1131
  %v1134 = vsel %vm182, %v1130, 0
  %v1137 = vsel %vm182, %v1132, 0
  %1139 = vmatpush.bf16.xpose.msra.mxu0 0
  %1140 = vmatpush.bf16.xpose.msra.mxu0 0
  %1141 = vmatpush.bf16.xpose.msra.mxu0 0
  %1142 = vmatpush.bf16.xpose.msra.mxu0 0
  %1143 = vmatpush.bf16.xpose.msra.mxu0 0
  %1144 = vmatpush.bf16.xpose.msra.mxu0 0
  %1145 = vmatpush.bf16.xpose.msra.mxu0 0
  %1146 = vmatpush.bf16.xpose.msra.mxu0 %v1137
  %1147 = vmatmul.bf16.gmra.mxu0 %v1134
  %v1148 = vpop.f32.mrf.mxu0
  %v1149 = vadd.f32 0.0, %v1148
  %v1150 = vpop.f32.mrf.mxu0
  %v1151 = vadd.f32 0.0, %v1150
  %1152 = vdwg.mxu0
  %v1153 = vmul.f32 %v1149, 0.35355338
  %v1154 = vmul.f32 %v1151, 0.35355338
  %v1155 = vadd.f32 %v1153, %v908
  %v1156 = vadd.f32 %v1154, %v909
  %v1157 = vsel %vm207, %v1155, -inf
  %1158 = vmax.xlane.f32.xlu0 %v1157
  %v1159 = vpop.xlane.xlu0 %1158
  %v1160 = vsel %vm207, %v1156, -inf
  %1161 = vmax.xlane.f32.xlu0 %v1160
  %v1162 = vpop.xlane.xlu0 %1161
  %v1163 = vsub.f32 %v1155, %v1159
  %v1164 = vsub.f32 %v1156, %v1162
  %v1165 = vmul.f32 %v1163, 1.442695
  %v1166 = vpow.pop %v1165
  %v1167 = vmul.f32 %v1164, 1.442695
  %v1168 = vpow.pop %v1167
  %v1169 = vsel %vm207, %v1166, 0.0
  %1170 = vadd.xlane.f32.xlu0 %v1169
  %v1171 = vpop.xlane.xlu0 %1170
  %v1172 = vsel %vm207, %v1168, 0.0
  %1173 = vadd.xlane.f32.xlu0 %v1172
  %v1174 = vpop.xlane.xlu0 %1173
  %v1175 = vrcp.pop %v1171
  %v1176 = vrcp.pop %v1174
  %v1177 = vmul.f32 %v1166, %v1175
  %v1178 = vmul.f32 %v1168, %v1176
  %v1179 = vpack.c.bf16 %v1178, %v1177
  %1180 = vrot.lane.b32.xlu0 %v911, 72
  %v1181 = vpop.permute.xlu0 %1180
  %v1183 = vsel %vm207, %v1179, 0
  %v1186 = vsel %vm237, %v1181, 0
  %1188 = vmatpush.bf16.msra.mxu0 0
  %1189 = vmatpush.bf16.msra.mxu0 0
  %1190 = vmatpush.bf16.msra.mxu0 0
  %1191 = vmatpush.bf16.msra.mxu0 0
  %1192 = vmatpush.bf16.msra.mxu0 0
  %1193 = vmatpush.bf16.msra.mxu0 0
  %1194 = vmatpush.bf16.msra.mxu0 0
  %1195 = vmatpush.bf16.msra.mxu0 %v1186
  %1196 = vmatmul.bf16.gmra.mxu0 %v1183
  %v1197 = vpop.f32.mrf.mxu0
  %v1198 = vadd.f32 0.0, %v1197
  %v1199 = vpop.f32.mrf.mxu0
  %v1200 = vadd.f32 0.0, %v1199
  %1201 = vdwg.mxu0
  %1204 = vrot.lane.b32.xlu0 %v1052, 8
  %v1205 = vpop.permute.xlu0 %1204
  %1206 = vrot.lane.b32.xlu0 %v1054, 8
  %v1207 = vpop.permute.xlu0 %1206
  %1212 = vrot.lane.b32.xlu0 %v1125, 16
  %v1213 = vpop.permute.xlu0 %1212
  %1214 = vrot.lane.b32.xlu0 %v1127, 16
  %v1215 = vpop.permute.xlu0 %1214
  %1220 = vrot.lane.b32.xlu0 %v1198, 24
  %v1221 = vpop.permute.xlu0 %1220
  %1222 = vrot.lane.b32.xlu0 %v1200, 24
  %v1223 = vpop.permute.xlu0 %1222
  %v1226 = vsel %vm182, %v978, %v1205
  %v1227 = vsel %vm182, %v980, %v1207
  %v1228 = vsel %vm500, %v1226, %v1213
  %v1229 = vsel %vm500, %v1227, %v1215
  %v1230 = vsel %vm503, %v1228, %v1221
  %v1231 = vsel %vm503, %v1229, %v1223
  %v1232 = vpack.c.bf16 %v1231, %v1230
  %v1237 = vunpack.c.l.b16 %v904
  %v1238 = vunpack.c.l.b16 %v905
  %v1239 = vunpack.c.l.b16 %v906
  %v1240 = vunpack.c.l.b16 %v907
  %v1241 = vpack.c.b16 %v1238, %v1237
  %v1242 = vpack.c.b16 %v1240, %v1239
  %v1246 = vsel %vm88, %v1232, 0
  %1248 = vmatpush.bf16.msra.mxu0 0
  %1249 = vmatpush.bf16.msra.mxu0 0
  %1250 = vmatpush.bf16.msra.mxu0 0
  %1251 = vmatpush.bf16.msra.mxu0 0
  %1252 = vmatpush.bf16.msra.mxu0 0
  %1253 = vmatpush.bf16.msra.mxu0 0
  %1254 = vmatpush.bf16.msra.mxu0 %v1242
  %1255 = vmatpush.bf16.msra.mxu0 %v1241
  %1256 = vmatmul.bf16.gmra.mxu0 %v1246
  %v1257 = vpop.f32.mrf.mxu0
  %v1258 = vadd.f32 0.0, %v1257
  %v1259 = vpop.f32.mrf.mxu0
  %v1260 = vadd.f32 0.0, %v1259
  %1261 = vdwg.mxu0
  %v1262 = vadd.f32 %v758, %v1258
  %v1263 = vadd.f32 %v758, %v1260
  %v1264 = vperm.slane %v53, 0
  %v1265 = vadd.f32 %v1262, %v1264
  %v1266 = vadd.f32 %v1263, %v1264
  %v1267 = vsel %vm88, %v1265, 0.0
  %1268 = vadd.xlane.f32.xlu0 %v1267
  %v1269 = vpop.xlane.xlu0 %1268
  %v1270 = vsel %vm88, %v1266, 0.0
  %1271 = vadd.xlane.f32.xlu0 %v1270
  %v1272 = vpop.xlane.xlu0 %1271
  %v1273 = vmul.f32 %v1269, %v102
  %v1274 = vmul.f32 %v1272, %v102
  %v1275 = vsub.f32 %v1265, %v1273
  %v1276 = vsub.f32 %v1266, %v1274
  %v1277 = vmul.f32 %v1275, %v1275
  %v1278 = vmul.f32 %v1276, %v1276
  %v1279 = vsel %vm88, %v1277, 0.0
  %1280 = vadd.xlane.f32.xlu0 %v1279
  %v1281 = vpop.xlane.xlu0 %1280
  %v1282 = vsel %vm88, %v1278, 0.0
  %1283 = vadd.xlane.f32.xlu0 %v1282
  %v1284 = vpop.xlane.xlu0 %1283
  %v1285 = vmul.f32 %v1281, %v102
  %v1286 = vmul.f32 %v1284, %v102
  %v1287 = vadd.f32 %v1285, 1e-06
  %v1288 = vadd.f32 %v1286, 1e-06
  %v1289 = vrsqrt.pop %v1287
  %v1290 = vmul.f32 %v1289, %v1287
  %v1291 = vmul.f32 %v1290, %v1289
  %v1292 = vmul.f32 0.5, %v1291
  %v1293 = vsub.f32 1.5, %v1292
  %v1294 = vmul.f32 %v1289, %v1293
  %vm1295 = vweird.f32 %v1287
  %vm1296 = vweird.f32 %v1289
  %vm1297 = vmor %vm1295, %vm1296
  %v1298 = vsel %vm1297, %v1289, %v1294
  %v1299 = vrsqrt.pop %v1288
  %v1300 = vmul.f32 %v1299, %v1288
  %v1301 = vmul.f32 %v1300, %v1299
  %v1302 = vmul.f32 0.5, %v1301
  %v1303 = vsub.f32 1.5, %v1302
  %v1304 = vmul.f32 %v1299, %v1303
  %vm1305 = vweird.f32 %v1288
  %vm1306 = vweird.f32 %v1299
  %vm1307 = vmor %vm1305, %vm1306
  %v1308 = vsel %vm1307, %v1299, %v1304
  %v1309 = vmul.f32 %v1275, %v1298
  %v1310 = vmul.f32 %v1276, %v1308
  %v1311 = vperm.slane %v53, 1
  %v1312 = vmul.f32 %v1309, %v1311
  %v1313 = vmul.f32 %v1310, %v1311
  %v1314 = vperm.slane %v53, 2
  %v1315 = vadd.f32 %v1312, %v1314
  %v1316 = vadd.f32 %v1313, %v1314
  %v1317 = vld [vmem:[%s12] sm:$0xf]
  %v1318 = vld [vmem:[%s12 + $0x4] sm:$0xf]
  %v1319 = vld [vmem:[%s12 + $0x8] sm:$0xf]
  %v1320 = vld [vmem:[%s12 + $0xc] sm:$0xf]
  %v1321 = vpack.c.bf16 %v1316, %v1315
  %v1322 = vperm.slane %v53, 3
  %v1327 = vunpack.c.l.b16 %v1317
  %v1328 = vunpack.c.l.b16 %v1318
  %v1329 = vunpack.c.l.b16 %v1319
  %v1330 = vunpack.c.l.b16 %v1320
  %v1331 = vpack.c.b16 %v1328, %v1327
  %v1332 = vpack.c.b16 %v1330, %v1329
  %v1336 = vsel %vm88, %v1321, 0
  %1338 = vmatpush.bf16.msra.mxu0 0
  %1339 = vmatpush.bf16.msra.mxu0 0
  %1340 = vmatpush.bf16.msra.mxu0 0
  %1341 = vmatpush.bf16.msra.mxu0 0
  %1342 = vmatpush.bf16.msra.mxu0 0
  %1343 = vmatpush.bf16.msra.mxu0 0
  %1344 = vmatpush.bf16.msra.mxu0 %v1332
  %1345 = vmatpush.bf16.msra.mxu0 %v1331
  %1346 = vmatmul.bf16.gmra.mxu0 %v1336
  %v1347 = vpop.f32.mrf.mxu0
  %v1348 = vadd.f32 %v1322, %v1347
  %v1349 = vpop.f32.mrf.mxu0
  %v1350 = vadd.f32 %v1322, %v1349
  %1351 = vdwg.mxu0
  %v1352 = vmul.f32 %v1348, %v1348
  %v1353 = vmul.f32 %v1350, %v1350
  %v1354 = vmul.f32 %v1348, %v1352
  %v1355 = vmul.f32 %v1350, %v1353
  %v1356 = vmul.f32 %v1354, 0.044715
  %v1357 = vmul.f32 %v1355, 0.044715
  %v1358 = vadd.f32 %v1348, %v1356
  %v1359 = vadd.f32 %v1350, %v1357
  %v1360 = vmul.f32 %v1358, 0.7978846
  %v1361 = vmul.f32 %v1359, 0.7978846
  %v1362 = vtanh.pop %v1360
  %v1363 = vtanh.pop %v1361
  %v1364 = vadd.f32 %v1362, 1.0
  %v1365 = vadd.f32 %v1363, 1.0
  %v1366 = vmul.f32 %v1364, 0.5
  %v1367 = vmul.f32 %v1365, 0.5
  %v1368 = vmul.f32 %v1348, %v1366
  %v1369 = vmul.f32 %v1350, %v1367
  %v1370 = vld [vmem:[%s13] sm:$0xf]
  %v1371 = vld [vmem:[%s13 + $0x4] sm:$0xf]
  %v1372 = vld [vmem:[%s13 + $0x8] sm:$0xf]
  %v1373 = vld [vmem:[%s13 + $0xc] sm:$0xf]
  %v1374 = vld [vmem:[%s13 + $0x10] sm:$0xf]
  %v1375 = vld [vmem:[%s13 + $0x14] sm:$0xf]
  %v1376 = vld [vmem:[%s13 + $0x18] sm:$0xf]
  %v1377 = vld [vmem:[%s13 + $0x1c] sm:$0xf]
  %v1378 = vld [vmem:[%s13 + $0x20] sm:$0xf]
  %v1379 = vld [vmem:[%s13 + $0x24] sm:$0xf]
  %v1380 = vld [vmem:[%s13 + $0x28] sm:$0xf]
  %v1381 = vld [vmem:[%s13 + $0x2c] sm:$0xf]
  %v1382 = vld [vmem:[%s13 + $0x30] sm:$0xf]
  %v1383 = vld [vmem:[%s13 + $0x34] sm:$0xf]
  %v1384 = vld [vmem:[%s13 + $0x38] sm:$0xf]
  %v1385 = vld [vmem:[%s13 + $0x3c] sm:$0xf]
  %v1386 = vpack.c.bf16 %v1369, %v1368
  %v1403 = vunpack.c.l.b16 %v1370
  %v1404 = vunpack.c.l.b16 %v1371
  %v1405 = vunpack.c.l.b16 %v1372
  %v1406 = vunpack.c.l.b16 %v1373
  %v1407 = vunpack.c.l.b16 %v1374
  %v1408 = vunpack.c.l.b16 %v1375
  %v1409 = vunpack.c.l.b16 %v1376
  %v1410 = vunpack.c.l.b16 %v1377
  %v1411 = vunpack.c.l.b16 %v1378
  %v1412 = vunpack.c.l.b16 %v1379
  %v1413 = vunpack.c.l.b16 %v1380
  %v1414 = vunpack.c.l.b16 %v1381
  %v1415 = vunpack.c.l.b16 %v1382
  %v1416 = vunpack.c.l.b16 %v1383
  %v1417 = vunpack.c.l.b16 %v1384
  %v1418 = vunpack.c.l.b16 %v1385
  %v1419 = vpack.c.b16 %v1404, %v1403
  %v1420 = vpack.c.b16 %v1406, %v1405
  %v1421 = vpack.c.b16 %v1408, %v1407
  %v1422 = vpack.c.b16 %v1410, %v1409
  %v1423 = vpack.c.b16 %v1412, %v1411
  %v1424 = vpack.c.b16 %v1414, %v1413
  %v1425 = vpack.c.b16 %v1416, %v1415
  %v1426 = vpack.c.b16 %v1418, %v1417
  %1435 = vmatpush.bf16.msra.mxu0 %v1426
  %1436 = vmatpush.bf16.msra.mxu0 %v1425
  %1437 = vmatpush.bf16.msra.mxu0 %v1424
  %1438 = vmatpush.bf16.msra.mxu0 %v1423
  %1439 = vmatpush.bf16.msra.mxu0 %v1422
  %1440 = vmatpush.bf16.msra.mxu0 %v1421
  %1441 = vmatpush.bf16.msra.mxu0 %v1420
  %1442 = vmatpush.bf16.msra.mxu0 %v1419
  %1443 = vmatmul.bf16.gmra.mxu0 %v1386
  %v1444 = vpop.f32.mrf.mxu0
  %v1445 = vadd.f32 0.0, %v1444
  %v1446 = vpop.f32.mrf.mxu0
  %v1447 = vadd.f32 0.0, %v1446
  %1448 = vdwg.mxu0
  %v1449 = vadd.f32 %v1265, %v1445
  %v1450 = vadd.f32 %v1266, %v1447
  %v1451 = vperm.slane %v53, 4
  %v1452 = vadd.f32 %v1449, %v1451
  %v1453 = vadd.f32 %v1450, %v1451
  %v1454 = vld [vmem:[%s14] sm:$0xf]
  %v1455 = vld [vmem:[%s14 + $0x4] sm:$0xf]
  %v1456 = vld [vmem:[%s14 + $0x8] sm:$0xf]
  %v1457 = vld [vmem:[%s14 + $0xc] sm:$0xf]
  %v1458 = vpack.c.bf16 %v1453, %v1452
  %v1459 = vperm.slane %v53, 5
  %v1464 = vunpack.c.l.b16 %v1454
  %v1465 = vunpack.c.l.b16 %v1455
  %v1466 = vunpack.c.l.b16 %v1456
  %v1467 = vunpack.c.l.b16 %v1457
  %v1468 = vpack.c.b16 %v1465, %v1464
  %v1469 = vpack.c.b16 %v1467, %v1466
  %v1473 = vsel %vm88, %v1458, 0
  %1475 = vmatpush.bf16.msra.mxu0 0
  %1476 = vmatpush.bf16.msra.mxu0 0
  %1477 = vmatpush.bf16.msra.mxu0 0
  %1478 = vmatpush.bf16.msra.mxu0 0
  %1479 = vmatpush.bf16.msra.mxu0 0
  %1480 = vmatpush.bf16.msra.mxu0 0
  %1481 = vmatpush.bf16.msra.mxu0 %v1469
  %1482 = vmatpush.bf16.msra.mxu0 %v1468
  %1483 = vmatmul.bf16.gmra.mxu0 %v1473
  %v1484 = vpop.f32.mrf.mxu0
  %v1485 = vadd.f32 %v1459, %v1484
  %v1486 = vpop.f32.mrf.mxu0
  %v1487 = vadd.f32 %v1459, %v1486
  %1488 = vdwg.mxu0
  %v1489 = vpack.c.bf16 %v1485, %v1485
  %v1490 = vpack.c.bf16 %v1487, %v1487
  %vm1491 = vcmask 257024
  %1492 = vst.msk [vmem:[%s15] sm:$0xf] %vm1491, %v1489
  %1493 = vst.msk [vmem:[%s15 + $0x4] sm:$0xf] %vm1491, %v1490
  // Predicated region
  $region62: #{forward.2} parent=0 // pred_check
    _
  $region63: #{forward.2} parent=0 // pred_check_branch
    %1495 = sbr.rel (0) target = $region65
  $region64: #{forward.2} parent=0 // pred_region
    _
  $region65: #{forward.2} parent=0 // pred_fallthru
    _
  // Predicated region
  $region66: #{forward.2} parent=0 // pred_check
    _
  $region67: #{forward.2} parent=0 // pred_check_branch
    %1497 = sbr.rel (0) target = $region69
  $region68: #{forward.2} parent=0 // pred_region
    _
  $region69: #{forward.2} parent=0 // pred_fallthru
    _

// kernel: forward.3
$region0: #{forward.3}
  #allocation0 [shape = 'u32[]', space=smem, size = 0x4, offset = 0x4, fixed_abs, tag = 'smem constant byte address 0x4 - core index']
  #allocation1 [shape = 'u32[72,128]{1,0:T(1,128)}', space=vmem, size = 0x9000, scoped, tag = 'internal scratch']
  %s0 = inlined_call_operand.vmem [shape: bf16[2,64,32], index: 0, kind: input, shape index: {}]
  %s1 = inlined_call_operand.vmem [shape: f32[2,1,64], index: 1, kind: input, shape index: {}]
  %s2 = inlined_call_operand.vmem [shape: f32[64,64], index: 2, kind: input, shape index: {}]
  %s3 = inlined_call_operand.vmem [shape: f32[64,128], index: 3, kind: input, shape index: {}]
  %s4 = inlined_call_operand.vmem [shape: f32[4,64], index: 4, kind: input, shape index: {}]
  %s5 = inlined_call_operand.vmem [shape: f32[4,128], index: 5, kind: input, shape index: {}]
  %s6 = inlined_call_operand.vmem [shape: f32[13,128], index: 6, kind: input, shape index: {}]
  %s7 = inlined_call_operand.vmem [shape: bf16[32,96], index: 7, kind: input, shape index: {}]
  %s8 = inlined_call_operand.vmem [shape: bf16[32,32], index: 8, kind: input, shape index: {}]
  %s9 = inlined_call_operand.vmem [shape: bf16[32,128], index: 9, kind: input, shape index: {}]
  %s10 = inlined_call_operand.vmem [shape: bf16[128,32], index: 10, kind: input, shape index: {}]
  %s11 = inlined_call_operand.vmem [shape: bf16[32,128], index: 11, kind: input, shape index: {}]
  %s12 = inlined_call_operand.vmem [shape: bf16[32,32], index: 12, kind: input, shape index: {}]
  %s13 = inlined_call_operand.vmem [shape: bf16[32,128], index: 13, kind: input, shape index: {}]
  %s14 = inlined_call_operand.vmem [shape: f32[2,1,128], index: 14, kind: output, shape index: {}]
  %s15 = sld [smem:[#allocation0]]
  $region97: #{forward.3} parent=0
    _
  %s17 = ssub.s32 1, %s15
  %s18 = scalar_select 0, %s17, %s15
  loop: start=0, step=1, limit=4
  $region2: #{forward.3} parent=0 // loop_pre_header
    _
  $region3: #{forward.3} parent=0 // loop_header
    %s20 = sphi 0, %s24
    %p21 = scmp.ge.s32.totalorder %s20, 4
    %s30 = sphi 0, %s32
    %s33 = sphi 0, %s30
    %s34 = sphi 0, %s33
    %s50 = sphi 0, %s34
    %s56 = sphi 0, %s58
    %s59 = sphi 0, %s56
    %s60 = sphi 0, %s59
    %s76 = sphi 0, %s60
    %s80 = sphi 0, %s80
    %s82 = sphi 0, %s80
    %s83 = sphi 0, %s82
    %s97 = sphi 0, %s83
    %s101 = sphi 0, %s101
    %s103 = sphi 0, %s101
    %s104 = sphi 0, %s103
    %s118 = sphi 0, %s104
    %s122 = sphi 0, %s122
    %s124 = sphi 0, %s122
    %s125 = sphi 0, %s124
    %s139 = sphi 0, %s125
    %s143 = sphi 0, %s143
    %s145 = sphi 0, %s143
    %s146 = sphi 0, %s145
    %s160 = sphi 0, %s146
    %s164 = sphi 0, %s164
    %s166 = sphi 0, %s164
    %s167 = sphi 0, %s166
    %s181 = sphi 0, %s167
    %s185 = sphi 0, %s185
    %s187 = sphi 0, %s185
    %s188 = sphi 0, %s187
    %s202 = sphi 0, %s188
    %s206 = sphi 0, %s206
    %s208 = sphi 0, %s206
    %s209 = sphi 0, %s208
    %s223 = sphi 0, %s209
    %s227 = sphi 0, %s227
    %s229 = sphi 0, %s227
    %s230 = sphi 0, %s229
    %s244 = sphi 0, %s230
    %s248 = sphi 0, %s248
    %s250 = sphi 0, %s248
    %s251 = sphi 0, %s250
    %s265 = sphi 0, %s251
    %s269 = sphi 0, %s269
    %s271 = sphi 0, %s269
    %s272 = sphi 0, %s271
    %s286 = sphi 0, %s272
    %s290 = sphi 0, %s290
    %s292 = sphi 0, %s290
    %s293 = sphi 0, %s292
    %s307 = sphi 0, %s293
    %s311 = sphi 0, %s311
    %s313 = sphi 0, %s311
    %s314 = sphi 0, %s313
    %s328 = sphi 0, %s314
    %s334 = sphi 0, %s336
    %s337 = sphi 0, %s334
    %s338 = sphi 0, %s337
    %s354 = sphi 0, %s338
  $region4: #{forward.3} parent=0 // loop_header_branch
    %23 = sbr.rel (%p21) target = $region8
  $region5: #{forward.3} parent=0 // loop_body
    %s25 = ssub.s32 %s20, 1
    %s26 = ssub.s32 %s20, 2
    %s27 = sadd.s32 %s20, 1
    %s28 = ssub.s32 %s20, %s27
    %p29 = scmp.eq.s32.totalorder %s28, 0
    %s31 = sadd.s32 %s30, 1
    %s32 = scalar_select %p29, %s30, %s31
    %p35 = pneg %p29
    %p36 = scmp.eq.s32.totalorder %s20, 1
    %p37 = por %p35, %p36
    %p38 = scmp.ne.s32.totalorder %s30, %s33
    %p39 = scmp.eq.s32.totalorder %s20, 0
    %p40 = por %p38, %p39
    %p41 = scmp.ne.s32.totalorder %s30, %s33
    %p42 = scmp.eq.s32.totalorder %s25, 1
    %p43 = por %p41, %p42
    %p44 = scmp.ne.s32.totalorder %s33, %s34
    %p45 = scmp.eq.s32.totalorder %s25, 0
    %p46 = por %p44, %p45
    %p47 = scmp.ne.s32.totalorder %s33, %s34
    %p48 = scmp.eq.s32.totalorder %s26, 1
    %p49 = por %p47, %p48
    %p51 = scmp.ne.s32.totalorder %s34, %s50
    %p52 = scmp.eq.s32.totalorder %s26, 0
    %p53 = por %p51, %p52
    %s54 = ssub.s32 %s20, %s27
    %p55 = scmp.eq.s32.totalorder %s54, 0
    %s57 = sadd.s32 %s56, 1
    %s58 = scalar_select %p55, %s56, %s57
    %p61 = pneg %p55
    %p62 = scmp.eq.s32.totalorder %s20, 1
    %p63 = por %p61, %p62
    %p64 = scmp.ne.s32.totalorder %s56, %s59
    %p65 = scmp.eq.s32.totalorder %s20, 0
    %p66 = por %p64, %p65
    %p67 = scmp.ne.s32.totalorder %s56, %s59
    %p68 = scmp.eq.s32.totalorder %s25, 1
    %p69 = por %p67, %p68
    %p70 = scmp.ne.s32.totalorder %s59, %s60
    %p71 = scmp.eq.s32.totalorder %s25, 0
    %p72 = por %p70, %p71
    %p73 = scmp.ne.s32.totalorder %s59, %s60
    %p74 = scmp.eq.s32.totalorder %s26, 1
    %p75 = por %p73, %p74
    %p77 = scmp.ne.s32.totalorder %s60, %s76
    %p78 = scmp.eq.s32.totalorder %s26, 0
    %p79 = por %p77, %p78
    %s81 = sadd.s32 %s80, 1
    %p84 = scmp.eq.s32.totalorder %s20, 1
    %p85 = scmp.ne.s32.totalorder %s80, %s82
    %p86 = scmp.eq.s32.totalorder %s20, 0
    %p87 = por %p85, %p86
    %p88 = scmp.ne.s32.totalorder %s80, %s82
    %p89 = scmp.eq.s32.totalorder %s25, 1
    %p90 = por %p88, %p89
    %p91 = scmp.ne.s32.totalorder %s82, %s83
    %p92 = scmp.eq.s32.totalorder %s25, 0
    %p93 = por %p91, %p92
    %p94 = scmp.ne.s32.totalorder %s82, %s83
    %p95 = scmp.eq.s32.totalorder %s26, 1
    %p96 = por %p94, %p95
    %p98 = scmp.ne.s32.totalorder %s83, %s97
    %p99 = scmp.eq.s32.totalorder %s26, 0
    %p100 = por %p98, %p99
    %s102 = sadd.s32 %s101, 1
    %p105 = scmp.eq.s32.totalorder %s20, 1
    %p106 = scmp.ne.s32.totalorder %s101, %s103
    %p107 = scmp.eq.s32.totalorder %s20, 0
    %p108 = por %p106, %p107
    %p109 = scmp.ne.s32.totalorder %s101, %s103
    %p110 = scmp.eq.s32.totalorder %s25, 1
    %p111 = por %p109, %p110
    %p112 = scmp.ne.s32.totalorder %s103, %s104
    %p113 = scmp.eq.s32.totalorder %s25, 0
    %p114 = por %p112, %p113
    %p115 = scmp.ne.s32.totalorder %s103, %s104
    %p116 = scmp.eq.s32.totalorder %s26, 1
    %p117 = por %p115, %p116
    %p119 = scmp.ne.s32.totalorder %s104, %s118
    %p120 = scmp.eq.s32.totalorder %s26, 0
    %p121 = por %p119, %p120
    %s123 = sadd.s32 %s122, 1
    %p126 = scmp.eq.s32.totalorder %s20, 1
    %p127 = scmp.ne.s32.totalorder %s122, %s124
    %p128 = scmp.eq.s32.totalorder %s20, 0
    %p129 = por %p127, %p128
    %p130 = scmp.ne.s32.totalorder %s122, %s124
    %p131 = scmp.eq.s32.totalorder %s25, 1
    %p132 = por %p130, %p131
    %p133 = scmp.ne.s32.totalorder %s124, %s125
    %p134 = scmp.eq.s32.totalorder %s25, 0
    %p135 = por %p133, %p134
    %p136 = scmp.ne.s32.totalorder %s124, %s125
    %p137 = scmp.eq.s32.totalorder %s26, 1
    %p138 = por %p136, %p137
    %p140 = scmp.ne.s32.totalorder %s125, %s139
    %p141 = scmp.eq.s32.totalorder %s26, 0
    %p142 = por %p140, %p141
    %s144 = sadd.s32 %s143, 1
    %p147 = scmp.eq.s32.totalorder %s20, 1
    %p148 = scmp.ne.s32.totalorder %s143, %s145
    %p149 = scmp.eq.s32.totalorder %s20, 0
    %p150 = por %p148, %p149
    %p151 = scmp.ne.s32.totalorder %s143, %s145
    %p152 = scmp.eq.s32.totalorder %s25, 1
    %p153 = por %p151, %p152
    %p154 = scmp.ne.s32.totalorder %s145, %s146
    %p155 = scmp.eq.s32.totalorder %s25, 0
    %p156 = por %p154, %p155
    %p157 = scmp.ne.s32.totalorder %s145, %s146
    %p158 = scmp.eq.s32.totalorder %s26, 1
    %p159 = por %p157, %p158
    %p161 = scmp.ne.s32.totalorder %s146, %s160
    %p162 = scmp.eq.s32.totalorder %s26, 0
    %p163 = por %p161, %p162
    %s165 = sadd.s32 %s164, 1
    %p168 = scmp.eq.s32.totalorder %s20, 1
    %p169 = scmp.ne.s32.totalorder %s164, %s166
    %p170 = scmp.eq.s32.totalorder %s20, 0
    %p171 = por %p169, %p170
    %p172 = scmp.ne.s32.totalorder %s164, %s166
    %p173 = scmp.eq.s32.totalorder %s25, 1
    %p174 = por %p172, %p173
    %p175 = scmp.ne.s32.totalorder %s166, %s167
    %p176 = scmp.eq.s32.totalorder %s25, 0
    %p177 = por %p175, %p176
    %p178 = scmp.ne.s32.totalorder %s166, %s167
    %p179 = scmp.eq.s32.totalorder %s26, 1
    %p180 = por %p178, %p179
    %p182 = scmp.ne.s32.totalorder %s167, %s181
    %p183 = scmp.eq.s32.totalorder %s26, 0
    %p184 = por %p182, %p183
    %s186 = sadd.s32 %s185, 1
    %p189 = scmp.eq.s32.totalorder %s20, 1
    %p190 = scmp.ne.s32.totalorder %s185, %s187
    %p191 = scmp.eq.s32.totalorder %s20, 0
    %p192 = por %p190, %p191
    %p193 = scmp.ne.s32.totalorder %s185, %s187
    %p194 = scmp.eq.s32.totalorder %s25, 1
    %p195 = por %p193, %p194
    %p196 = scmp.ne.s32.totalorder %s187, %s188
    %p197 = scmp.eq.s32.totalorder %s25, 0
    %p198 = por %p196, %p197
    %p199 = scmp.ne.s32.totalorder %s187, %s188
    %p200 = scmp.eq.s32.totalorder %s26, 1
    %p201 = por %p199, %p200
    %p203 = scmp.ne.s32.totalorder %s188, %s202
    %p204 = scmp.eq.s32.totalorder %s26, 0
    %p205 = por %p203, %p204
    %s207 = sadd.s32 %s206, 1
    %p210 = scmp.eq.s32.totalorder %s20, 1
    %p211 = scmp.ne.s32.totalorder %s206, %s208
    %p212 = scmp.eq.s32.totalorder %s20, 0
    %p213 = por %p211, %p212
    %p214 = scmp.ne.s32.totalorder %s206, %s208
    %p215 = scmp.eq.s32.totalorder %s25, 1
    %p216 = por %p214, %p215
    %p217 = scmp.ne.s32.totalorder %s208, %s209
    %p218 = scmp.eq.s32.totalorder %s25, 0
    %p219 = por %p217, %p218
    %p220 = scmp.ne.s32.totalorder %s208, %s209
    %p221 = scmp.eq.s32.totalorder %s26, 1
    %p222 = por %p220, %p221
    %p224 = scmp.ne.s32.totalorder %s209, %s223
    %p225 = scmp.eq.s32.totalorder %s26, 0
    %p226 = por %p224, %p225
    %s228 = sadd.s32 %s227, 1
    %p231 = scmp.eq.s32.totalorder %s20, 1
    %p232 = scmp.ne.s32.totalorder %s227, %s229
    %p233 = scmp.eq.s32.totalorder %s20, 0
    %p234 = por %p232, %p233
    %p235 = scmp.ne.s32.totalorder %s227, %s229
    %p236 = scmp.eq.s32.totalorder %s25, 1
    %p237 = por %p235, %p236
    %p238 = scmp.ne.s32.totalorder %s229, %s230
    %p239 = scmp.eq.s32.totalorder %s25, 0
    %p240 = por %p238, %p239
    %p241 = scmp.ne.s32.totalorder %s229, %s230
    %p242 = scmp.eq.s32.totalorder %s26, 1
    %p243 = por %p241, %p242
    %p245 = scmp.ne.s32.totalorder %s230, %s244
    %p246 = scmp.eq.s32.totalorder %s26, 0
    %p247 = por %p245, %p246
    %s249 = sadd.s32 %s248, 1
    %p252 = scmp.eq.s32.totalorder %s20, 1
    %p253 = scmp.ne.s32.totalorder %s248, %s250
    %p254 = scmp.eq.s32.totalorder %s20, 0
    %p255 = por %p253, %p254
    %p256 = scmp.ne.s32.totalorder %s248, %s250
    %p257 = scmp.eq.s32.totalorder %s25, 1
    %p258 = por %p256, %p257
    %p259 = scmp.ne.s32.totalorder %s250, %s251
    %p260 = scmp.eq.s32.totalorder %s25, 0
    %p261 = por %p259, %p260
    %p262 = scmp.ne.s32.totalorder %s250, %s251
    %p263 = scmp.eq.s32.totalorder %s26, 1
    %p264 = por %p262, %p263
    %p266 = scmp.ne.s32.totalorder %s251, %s265
    %p267 = scmp.eq.s32.totalorder %s26, 0
    %p268 = por %p266, %p267
    %s270 = sadd.s32 %s269, 1
    %p273 = scmp.eq.s32.totalorder %s20, 1
    %p274 = scmp.ne.s32.totalorder %s269, %s271
    %p275 = scmp.eq.s32.totalorder %s20, 0
    %p276 = por %p274, %p275
    %p277 = scmp.ne.s32.totalorder %s269, %s271
    %p278 = scmp.eq.s32.totalorder %s25, 1
    %p279 = por %p277, %p278
    %p280 = scmp.ne.s32.totalorder %s271, %s272
    %p281 = scmp.eq.s32.totalorder %s25, 0
    %p282 = por %p280, %p281
    %p283 = scmp.ne.s32.totalorder %s271, %s272
    %p284 = scmp.eq.s32.totalorder %s26, 1
    %p285 = por %p283, %p284
    %p287 = scmp.ne.s32.totalorder %s272, %s286
    %p288 = scmp.eq.s32.totalorder %s26, 0
    %p289 = por %p287, %p288
    %s291 = sadd.s32 %s290, 1
    %p294 = scmp.eq.s32.totalorder %s20, 1
    %p295 = scmp.ne.s32.totalorder %s290, %s292
    %p296 = scmp.eq.s32.totalorder %s20, 0
    %p297 = por %p295, %p296
    %p298 = scmp.ne.s32.totalorder %s290, %s292
    %p299 = scmp.eq.s32.totalorder %s25, 1
    %p300 = por %p298, %p299
    %p301 = scmp.ne.s32.totalorder %s292, %s293
    %p302 = scmp.eq.s32.totalorder %s25, 0
    %p303 = por %p301, %p302
    %p304 = scmp.ne.s32.totalorder %s292, %s293
    %p305 = scmp.eq.s32.totalorder %s26, 1
    %p306 = por %p304, %p305
    %p308 = scmp.ne.s32.totalorder %s293, %s307
    %p309 = scmp.eq.s32.totalorder %s26, 0
    %p310 = por %p308, %p309
    %s312 = sadd.s32 %s311, 1
    %p315 = scmp.eq.s32.totalorder %s20, 1
    %p316 = scmp.ne.s32.totalorder %s311, %s313
    %p317 = scmp.eq.s32.totalorder %s20, 0
    %p318 = por %p316, %p317
    %p319 = scmp.ne.s32.totalorder %s311, %s313
    %p320 = scmp.eq.s32.totalorder %s25, 1
    %p321 = por %p319, %p320
    %p322 = scmp.ne.s32.totalorder %s313, %s314
    %p323 = scmp.eq.s32.totalorder %s25, 0
    %p324 = por %p322, %p323
    %p325 = scmp.ne.s32.totalorder %s313, %s314
    %p326 = scmp.eq.s32.totalorder %s26, 1
    %p327 = por %p325, %p326
    %p329 = scmp.ne.s32.totalorder %s314, %s328
    %p330 = scmp.eq.s32.totalorder %s26, 0
    %p331 = por %p329, %p330
    %s332 = ssub.s32 %s20, %s27
    %p333 = scmp.eq.s32.totalorder %s332, 0
    %s335 = sadd.s32 %s334, 1
    %s336 = scalar_select %p333, %s334, %s335
    %p339 = pneg %p333
    %p340 = scmp.eq.s32.totalorder %s20, 1
    %p341 = por %p339, %p340
    %p342 = scmp.ne.s32.totalorder %s334, %s337
    %p343 = scmp.eq.s32.totalorder %s20, 0
    %p344 = por %p342, %p343
    %p345 = scmp.ne.s32.totalorder %s334, %s337
    %p346 = scmp.eq.s32.totalorder %s25, 1
    %p347 = por %p345, %p346
    %p348 = scmp.ne.s32.totalorder %s337, %s338
    %p349 = scmp.eq.s32.totalorder %s25, 0
    %p350 = por %p348, %p349
    %p351 = scmp.ne.s32.totalorder %s337, %s338
    %p352 = scmp.eq.s32.totalorder %s26, 1
    %p353 = por %p351, %p352
    %p355 = scmp.ne.s32.totalorder %s338, %s354
    %p356 = scmp.eq.s32.totalorder %s26, 0
    %p357 = por %p355, %p356
    %p358 = scmp.le.s32.totalorder 1, %s20
    %p359 = scmp.lt.s32.totalorder %s20, 3
    %p360 = pnand %p358, %p359
    %p361 = pneg %p360
    // Predicated region
    $region9: #{forward.3} parent=5 // pred_check
      _
    $region10: #{forward.3} parent=5 // pred_check_branch
      %363 = sbr.rel (%p360) target = $region12
    $region11: #{forward.3} parent=5 // pred_region
      %s364 = ssub.s32 %s20, 1
      // Predicated region
      $region13: #{forward.3} parent=11 // pred_check
        %p365 = pneg %p93
      $region14: #{forward.3} parent=11 // pred_check_branch
        %367 = sbr.rel (%p365) target = $region16
      $region15: #{forward.3} parent=11 // pred_region
        _
      $region16: #{forward.3} parent=11 // pred_fallthru
        _
      // Predicated region
      $region17: #{forward.3} parent=11 // pred_check
        %p368 = pneg %p114
      $region18: #{forward.3} parent=11 // pred_check_branch
        %370 = sbr.rel (%p368) target = $region20
      $region19: #{forward.3} parent=11 // pred_region
        _
      $region20: #{forward.3} parent=11 // pred_fallthru
        _
      // Predicated region
      $region21: #{forward.3} parent=11 // pred_check
        %p371 = pneg %p135
      $region22: #{forward.3} parent=11 // pred_check_branch
        %373 = sbr.rel (%p371) target = $region24
      $region23: #{forward.3} parent=11 // pred_region
        _
      $region24: #{forward.3} parent=11 // pred_fallthru
        _
      // Predicated region
      $region25: #{forward.3} parent=11 // pred_check
        %p374 = pneg %p156
      $region26: #{forward.3} parent=11 // pred_check_branch
        %376 = sbr.rel (%p374) target = $region28
      $region27: #{forward.3} parent=11 // pred_region
        _
      $region28: #{forward.3} parent=11 // pred_fallthru
        _
      // Predicated region
      $region29: #{forward.3} parent=11 // pred_check
        %p377 = pneg %p177
      $region30: #{forward.3} parent=11 // pred_check_branch
        %379 = sbr.rel (%p377) target = $region32
      $region31: #{forward.3} parent=11 // pred_region
        _
      $region32: #{forward.3} parent=11 // pred_fallthru
        _
      // Predicated region
      $region33: #{forward.3} parent=11 // pred_check
        %p380 = pneg %p198
      $region34: #{forward.3} parent=11 // pred_check_branch
        %382 = sbr.rel (%p380) target = $region36
      $region35: #{forward.3} parent=11 // pred_region
        _
      $region36: #{forward.3} parent=11 // pred_fallthru
        _
      // Predicated region
      $region37: #{forward.3} parent=11 // pred_check
        %p383 = pneg %p219
      $region38: #{forward.3} parent=11 // pred_check_branch
        %385 = sbr.rel (%p383) target = $region40
      $region39: #{forward.3} parent=11 // pred_region
        _
      $region40: #{forward.3} parent=11 // pred_fallthru
        _
      // Predicated region
      $region41: #{forward.3} parent=11 // pred_check
        %p386 = pneg %p240
      $region42: #{forward.3} parent=11 // pred_check_branch
        %388 = sbr.rel (%p386) target = $region44
      $region43: #{forward.3} parent=11 // pred_region
        _
      $region44: #{forward.3} parent=11 // pred_fallthru
        _
      // Predicated region
      $region45: #{forward.3} parent=11 // pred_check
        %p389 = pneg %p261
      $region46: #{forward.3} parent=11 // pred_check_branch
        %391 = sbr.rel (%p389) target = $region48
      $region47: #{forward.3} parent=11 // pred_region
        _
      $region48: #{forward.3} parent=11 // pred_fallthru
        _
      // Predicated region
      $region49: #{forward.3} parent=11 // pred_check
        %p392 = pneg %p282
      $region50: #{forward.3} parent=11 // pred_check_branch
        %394 = sbr.rel (%p392) target = $region52
      $region51: #{forward.3} parent=11 // pred_region
        _
      $region52: #{forward.3} parent=11 // pred_fallthru
        _
      // Predicated region
      $region53: #{forward.3} parent=11 // pred_check
        %p395 = pneg %p303
      $region54: #{forward.3} parent=11 // pred_check_branch
        %397 = sbr.rel (%p395) target = $region56
      $region55: #{forward.3} parent=11 // pred_region
        _
      $region56: #{forward.3} parent=11 // pred_fallthru
        _
      // Predicated region
      $region57: #{forward.3} parent=11 // pred_check
        %p398 = pneg %p324
      $region58: #{forward.3} parent=11 // pred_check_branch
        %400 = sbr.rel (%p398) target = $region60
      $region59: #{forward.3} parent=11 // pred_region
        _
      $region60: #{forward.3} parent=11 // pred_fallthru
        _
    $region12: #{forward.3} parent=5 // pred_fallthru
      _
    %p401 = scmp.lt.s32.totalorder %s20, 2
    // Predicated region
    $region61: #{forward.3} parent=5 // pred_check
      %p402 = pneg %p401
    $region62: #{forward.3} parent=5 // pred_check_branch
      %404 = sbr.rel (%p402) target = $region64
    $region63: #{forward.3} parent=5 // pred_region
      // Predicated region
      $region65: #{forward.3} parent=63 // pred_check
        %p405 = pneg %p40
      $region66: #{forward.3} parent=63 // pred_check_branch
        %407 = sbr.rel (%p405) target = $region68
      $region67: #{forward.3} parent=63 // pred_region
        %p408 = scmp.lt.s32.totalorder %s20, 1
        %s409 = scalar_select %p408, %s20, 1
        %s410 = smul.addr %s409, 8
        %s411 = smul.addr %s410, 4
        %s412 = scalar_lea.vmem %s0, %s411
      $region68: #{forward.3} parent=63 // pred_fallthru
        _
      // Predicated region
      $region69: #{forward.3} parent=63 // pred_check
        %p413 = pneg %p66
      $region70: #{forward.3} parent=63 // pred_check_branch
        %415 = sbr.rel (%p413) target = $region72
      $region71: #{forward.3} parent=63 // pred_region
        %p416 = scmp.lt.s32.totalorder %s20, 1
        %s417 = scalar_select %p416, %s20, 1
        %s418 = scalar_lea.vmem %s1, %s417
      $region72: #{forward.3} parent=63 // pred_fallthru
        _
    $region64: #{forward.3} parent=5 // pred_fallthru
      _
    %p419 = scmp.le.s32.totalorder 1, %s20
    %p420 = scmp.lt.s32.totalorder %s20, 3
    %p421 = pnand %p419, %p420
    %p422 = pneg %p421
    // Predicated region
    $region73: #{forward.3} parent=5 // pred_check
      _
    $region74: #{forward.3} parent=5 // pred_check_branch
      %424 = sbr.rel (%p421) target = $region76
    $region75: #{forward.3} parent=5 // pred_region
      %s425 = ssub.s32 %s20, 1
      %p426 = scmp.lt.s32.totalorder %s25, 1
      %s427 = scalar_select %p426, %s25, 1
      %s428 = smul.addr %s427, 8
      %s429 = smul.addr %s428, 4
      %s430 = scalar_lea.vmem %s0, %s429
      %p431 = pneg %p46
      %p432 = pneg %p43
      %p433 = scmp.lt.s32.totalorder %s25, 1
      %s434 = scalar_select %p433, %s25, 1
      %s435 = scalar_lea.vmem %s1, %s434
      %p436 = pneg %p72
      %p437 = pneg %p69
      %p438 = pneg %p93
      %p439 = pneg %p90
      %p440 = pneg %p114
      %p441 = pneg %p111
      %p442 = pneg %p135
      %p443 = pneg %p132
      %p444 = pneg %p156
      %p445 = pneg %p153
      %p446 = pneg %p177
      %p447 = pneg %p174
      %p448 = pneg %p198
      %p449 = pneg %p195
      %p450 = pneg %p219
      %p451 = pneg %p216
      %p452 = pneg %p240
      %p453 = pneg %p237
      %p454 = pneg %p261
      %p455 = pneg %p258
      %p456 = pneg %p282
      %p457 = pneg %p279
      %p458 = pneg %p303
      %p459 = pneg %p300
      %p460 = pneg %p324
      %p461 = pneg %p321
      %p462 = pneg %p350
      %p463 = pneg %p347
      %p464 = scmp.lt.s32.totalorder %s25, 1
      %s465 = scalar_select %p464, %s25, 1
      %s466 = scalar_lea.vmem %s14, %s465
      %p467 = scmp.lt.s32.totalorder %s25, 1
      %s468 = scalar_select %p467, %s25, 1
      %s469 = smul.addr %s468, 8
      %s470 = smul.addr %s469, 4
      %s471 = scalar_lea.vmem %s0, %s470
      %p472 = scmp.lt.s32.totalorder %s25, 1
      %s473 = scalar_select %p472, %s25, 1
      %s474 = scalar_lea.vmem %s1, %s473
      %p475 = scmp.lt.s32.totalorder %s25, 1
      %s476 = scalar_select %p475, %s25, 1
      %s477 = scalar_lea.vmem %s14, %s476
      %v479 = vld [vmem:[%s6] sm:$0xff]
      %v480 = vld [vmem:[%s6 + $0x8] sm:$0x1f]
      %v481 = vld [vmem:[%s471] sm:$0xf]
      %v482 = vld [vmem:[%s471 + $0x4] sm:$0xf]
      %v483 = vld [vmem:[%s471 + $0x8] sm:$0xf]
      %v484 = vld [vmem:[%s471 + $0xc] sm:$0xf]
      %v485 = vld [vmem:[%s471 + $0x10] sm:$0xf]
      %v486 = vld [vmem:[%s471 + $0x14] sm:$0xf]
      %v487 = vld [vmem:[%s471 + $0x18] sm:$0xf]
      %v488 = vld [vmem:[%s471 + $0x1c] sm:$0xf]
      %v489 = vunpack.c.l.bf16 %v481
      %v490 = vunpack.c.l.bf16 %v482
      %v491 = vunpack.c.l.bf16 %v483
      %v492 = vunpack.c.l.bf16 %v484
      %v493 = vunpack.c.l.bf16 %v485
      %v494 = vunpack.c.l.bf16 %v486
      %v495 = vunpack.c.l.bf16 %v487
      %v496 = vunpack.c.l.bf16 %v488
      %v497 = vld [vmem:[%s2] sm:$0xff]
      %v498 = vld [vmem:[%s2 + $0x8] sm:$0xff]
      %v499 = vld [vmem:[%s2 + $0x10] sm:$0xff]
      %v500 = vld [vmem:[%s2 + $0x18] sm:$0xff]
      %v501 = vld [vmem:[%s2 + $0x20] sm:$0xff]
      %v502 = vld [vmem:[%s2 + $0x28] sm:$0xff]
      %v503 = vld [vmem:[%s2 + $0x30] sm:$0xff]
      %v504 = vld [vmem:[%s2 + $0x38] sm:$0xff]
      %vm505 = vcmp.gt.f32.partialorder %v497, 0.5
      %vm506 = vcmp.gt.f32.partialorder %v498, 0.5
      %vm507 = vcmp.gt.f32.partialorder %v499, 0.5
      %vm508 = vcmp.gt.f32.partialorder %v500, 0.5
      %vm509 = vcmp.gt.f32.partialorder %v501, 0.5
      %vm510 = vcmp.gt.f32.partialorder %v502, 0.5
      %vm511 = vcmp.gt.f32.partialorder %v503, 0.5
      %vm512 = vcmp.gt.f32.partialorder %v504, 0.5
      %v513 = vld [vmem:[%s474] sm:$0x1]
      %vm514 = vcmp.gt.f32.partialorder %v513, 0.5
      %v515 = vsel %vm514, 1, 0
      %v516 = vperm.slane %v515, 0
      %vm517 = vcmp.eq.s32.totalorder %v516, 1
      %vm518 = vmand %vm505, %vm517
      %vm519 = vmand %vm506, %vm517
      %vm520 = vmand %vm507, %vm517
      %vm521 = vmand %vm508, %vm517
      %vm522 = vmand %vm509, %vm517
      %vm523 = vmand %vm510, %vm517
      %vm524 = vmand %vm511, %vm517
      %vm525 = vmand %vm512, %vm517
      %v526 = vsel %vm518, 0.0, -1e+09
      %v527 = vsel %vm519, 0.0, -1e+09
      %v528 = vsel %vm520, 0.0, -1e+09
      %v529 = vsel %vm521, 0.0, -1e+09
      %v530 = vsel %vm522, 0.0, -1e+09
      %v531 = vsel %vm523, 0.0, -1e+09
      %v532 = vsel %vm524, 0.0, -1e+09
      %v533 = vsel %vm525, 0.0, -1e+09
      %v534 = vld [vmem:[%s7] sm:$0xf]
      %v535 = vld [vmem:[%s7 + $0x4] sm:$0xf]
      %v536 = vld [vmem:[%s7 + $0x8] sm:$0xf]
      %v537 = vld [vmem:[%s7 + $0xc] sm:$0xf]
      %v538 = vld [vmem:[%s8] sm:$0xf]
      %v539 = vld [vmem:[%s8 + $0x4] sm:$0xf]
      %v540 = vld [vmem:[%s8 + $0x8] sm:$0xf]
      %v541 = vld [vmem:[%s8 + $0xc] sm:$0xf]
      %v542 = vld [vmem:[%s9] sm:$0xf]
      %v543 = vld [vmem:[%s9 + $0x4] sm:$0xf]
      %v544 = vld [vmem:[%s9 + $0x8] sm:$0xf]
      %v545 = vld [vmem:[%s9 + $0xc] sm:$0xf]
      %v546 = vld [vmem:[%s10] sm:$0xf]
      %v547 = vld [vmem:[%s10 + $0x4] sm:$0xf]
      %v548 = vld [vmem:[%s10 + $0x8] sm:$0xf]
      %v549 = vld [vmem:[%s10 + $0xc] sm:$0xf]
      %v550 = vld [vmem:[%s10 + $0x10] sm:$0xf]
      %v551 = vld [vmem:[%s10 + $0x14] sm:$0xf]
      %v552 = vld [vmem:[%s10 + $0x18] sm:$0xf]
      %v553 = vld [vmem:[%s10 + $0x1c] sm:$0xf]
      %v554 = vld [vmem:[%s10 + $0x20] sm:$0xf]
      %v555 = vld [vmem:[%s10 + $0x24] sm:$0xf]
      %v556 = vld [vmem:[%s10 + $0x28] sm:$0xf]
      %v557 = vld [vmem:[%s10 + $0x2c] sm:$0xf]
      %v558 = vld [vmem:[%s10 + $0x30] sm:$0xf]
      %v559 = vld [vmem:[%s10 + $0x34] sm:$0xf]
      %v560 = vld [vmem:[%s10 + $0x38] sm:$0xf]
      %v561 = vld [vmem:[%s10 + $0x3c] sm:$0xf]
      %vm562 = vcmask 261120
      %v563 = vsel %vm562, %v489, 0.0
      %564 = vadd.xlane.f32.xlu0 %v563
      %v565 = vpop.xlane.xlu0 %564
      %v566 = vsel %vm562, %v490, 0.0
      %567 = vadd.xlane.f32.xlu0 %v566
      %v568 = vpop.xlane.xlu0 %567
      %v569 = vsel %vm562, %v491, 0.0
      %570 = vadd.xlane.f32.xlu0 %v569
      %v571 = vpop.xlane.xlu0 %570
      %v572 = vsel %vm562, %v492, 0.0
      %573 = vadd.xlane.f32.xlu0 %v572
      %v574 = vpop.xlane.xlu0 %573
      %v575 = vsel %vm562, %v493, 0.0
      %576 = vadd.xlane.f32.xlu0 %v575
      %v577 = vpop.xlane.xlu0 %576
      %v578 = vsel %vm562, %v494, 0.0
      %579 = vadd.xlane.f32.xlu0 %v578
      %v580 = vpop.xlane.xlu0 %579
      %v581 = vsel %vm562, %v495, 0.0
      %582 = vadd.xlane.f32.xlu0 %v581
      %v583 = vpop.xlane.xlu0 %582
      %v584 = vsel %vm562, %v496, 0.0
      %585 = vadd.xlane.f32.xlu0 %v584
      %v586 = vpop.xlane.xlu0 %585
      %v587 = vrcp.pop 32.0
      %v588 = vmul.f32 32.0, %v587
      %v589 = vsub.f32 1.0, %v588
      %v590 = vmul.f32 %v587, %v589
      %v591 = vadd.f32 %v587, %v590
      %vm592 = vweird.f32 %v587
      %v593 = vsel %vm592, %v587, %v591
      %v594 = vmul.f32 %v565, %v593
      %v595 = vmul.f32 %v568, %v593
      %v596 = vmul.f32 %v571, %v593
      %v597 = vmul.f32 %v574, %v593
      %v598 = vmul.f32 %v577, %v593
      %v599 = vmul.f32 %v580, %v593
      %v600 = vmul.f32 %v583, %v593
      %v601 = vmul.f32 %v586, %v593
      %v602 = vsub.f32 %v489, %v594
      %v603 = vsub.f32 %v490, %v595
      %v604 = vsub.f32 %v491, %v596
      %v605 = vsub.f32 %v492, %v597
      %v606 = vsub.f32 %v493, %v598
      %v607 = vsub.f32 %v494, %v599
      %v608 = vsub.f32 %v495, %v600
      %v609 = vsub.f32 %v496, %v601
      %v610 = vmul.f32 %v602, %v602
      %v611 = vmul.f32 %v603, %v603
      %v612 = vmul.f32 %v604, %v604
      %v613 = vmul.f32 %v605, %v605
      %v614 = vmul.f32 %v606, %v606
      %v615 = vmul.f32 %v607, %v607
      %v616 = vmul.f32 %v608, %v608
      %v617 = vmul.f32 %v609, %v609
      %v618 = vsel %vm562, %v610, 0.0
      %619 = vadd.xlane.f32.xlu0 %v618
      %v620 = vpop.xlane.xlu0 %619
      %v621 = vsel %vm562, %v611, 0.0
      %622 = vadd.xlane.f32.xlu0 %v621
      %v623 = vpop.xlane.xlu0 %622
      %v624 = vsel %vm562, %v612, 0.0
      %625 = vadd.xlane.f32.xlu0 %v624
      %v626 = vpop.xlane.xlu0 %625
      %v627 = vsel %vm562, %v613, 0.0
      %628 = vadd.xlane.f32.xlu0 %v627
      %v629 = vpop.xlane.xlu0 %628
      %v630 = vsel %vm562, %v614, 0.0
      %631 = vadd.xlane.f32.xlu0 %v630
      %v632 = vpop.xlane.xlu0 %631
      %v633 = vsel %vm562, %v615, 0.0
      %634 = vadd.xlane.f32.xlu0 %v633
      %v635 = vpop.xlane.xlu0 %634
      %v636 = vsel %vm562, %v616, 0.0
      %637 = vadd.xlane.f32.xlu0 %v636
      %v638 = vpop.xlane.xlu0 %637
      %v639 = vsel %vm562, %v617, 0.0
      %640 = vadd.xlane.f32.xlu0 %v639
      %v641 = vpop.xlane.xlu0 %640
      %v642 = vmul.f32 %v620, %v593
      %v643 = vmul.f32 %v623, %v593
      %v644 = vmul.f32 %v626, %v593
      %v645 = vmul.f32 %v629, %v593
      %v646 = vmul.f32 %v632, %v593
      %v647 = vmul.f32 %v635, %v593
      %v648 = vmul.f32 %v638, %v593
      %v649 = vmul.f32 %v641, %v593
      %v650 = vadd.f32 %v642, 1e-05
      %v651 = vadd.f32 %v643, 1e-05
      %v652 = vadd.f32 %v644, 1e-05
      %v653 = vadd.f32 %v645, 1e-05
      %v654 = vadd.f32 %v646, 1e-05
      %v655 = vadd.f32 %v647, 1e-05
      %v656 = vadd.f32 %v648, 1e-05
      %v657 = vadd.f32 %v649, 1e-05
      %v658 = vrsqrt.pop %v650
      %v659 = vmul.f32 %v658, %v650
      %v660 = vmul.f32 %v659, %v658
      %v661 = vmul.f32 0.5, %v660
      %v662 = vsub.f32 1.5, %v661
      %v663 = vmul.f32 %v658, %v662
      %vm664 = vweird.f32 %v650
      %vm665 = vweird.f32 %v658
      %vm666 = vmor %vm664, %vm665
      %v667 = vsel %vm666, %v658, %v663
      %v668 = vrsqrt.pop %v651
      %v669 = vmul.f32 %v668, %v651
      %v670 = vmul.f32 %v669, %v668
      %v671 = vmul.f32 0.5, %v670
      %v672 = vsub.f32 1.5, %v671
      %v673 = vmul.f32 %v668, %v672
      %vm674 = vweird.f32 %v651
      %vm675 = vweird.f32 %v668
      %vm676 = vmor %vm674, %vm675
      %v677 = vsel %vm676, %v668, %v673
      %v678 = vrsqrt.pop %v652
      %v679 = vmul.f32 %v678, %v652
      %v680 = vmul.f32 %v679, %v678
      %v681 = vmul.f32 0.5, %v680
      %v682 = vsub.f32 1.5, %v681
      %v683 = vmul.f32 %v678, %v682
      %vm684 = vweird.f32 %v652
      %vm685 = vweird.f32 %v678
      %vm686 = vmor %vm684, %vm685
      %v687 = vsel %vm686, %v678, %v683
      %v688 = vrsqrt.pop %v653
      %v689 = vmul.f32 %v688, %v653
      %v690 = vmul.f32 %v689, %v688
      %v691 = vmul.f32 0.5, %v690
      %v692 = vsub.f32 1.5, %v691
      %v693 = vmul.f32 %v688, %v692
      %vm694 = vweird.f32 %v653
      %vm695 = vweird.f32 %v688
      %vm696 = vmor %vm694, %vm695
      %v697 = vsel %vm696, %v688, %v693
      %v698 = vrsqrt.pop %v654
      %v699 = vmul.f32 %v698, %v654
      %v700 = vmul.f32 %v699, %v698
      %v701 = vmul.f32 0.5, %v700
      %v702 = vsub.f32 1.5, %v701
      %v703 = vmul.f32 %v698, %v702
      %vm704 = vweird.f32 %v654
      %vm705 = vweird.f32 %v698
      %vm706 = vmor %vm704, %vm705
      %v707 = vsel %vm706, %v698, %v703
      %v708 = vrsqrt.pop %v655
      %v709 = vmul.f32 %v708, %v655
      %v710 = vmul.f32 %v709, %v708
      %v711 = vmul.f32 0.5, %v710
      %v712 = vsub.f32 1.5, %v711
      %v713 = vmul.f32 %v708, %v712
      %vm714 = vweird.f32 %v655
      %vm715 = vweird.f32 %v708
      %vm716 = vmor %vm714, %vm715
      %v717 = vsel %vm716, %v708, %v713
      %v718 = vrsqrt.pop %v656
      %v719 = vmul.f32 %v718, %v656
      %v720 = vmul.f32 %v719, %v718
      %v721 = vmul.f32 0.5, %v720
      %v722 = vsub.f32 1.5, %v721
      %v723 = vmul.f32 %v718, %v722
      %vm724 = vweird.f32 %v656
      %vm725 = vweird.f32 %v718
      %vm726 = vmor %vm724, %vm725
      %v727 = vsel %vm726, %v718, %v723
      %v728 = vrsqrt.pop %v657
      %v729 = vmul.f32 %v728, %v657
      %v730 = vmul.f32 %v729, %v728
      %v731 = vmul.f32 0.5, %v730
      %v732 = vsub.f32 1.5, %v731
      %v733 = vmul.f32 %v728, %v732
      %vm734 = vweird.f32 %v657
      %vm735 = vweird.f32 %v728
      %vm736 = vmor %vm734, %vm735
      %v737 = vsel %vm736, %v728, %v733
      %v738 = vmul.f32 %v602, %v667
      %v739 = vmul.f32 %v603, %v677
      %v740 = vmul.f32 %v604, %v687
      %v741 = vmul.f32 %v605, %v697
      %v742 = vmul.f32 %v606, %v707
      %v743 = vmul.f32 %v607, %v717
      %v744 = vmul.f32 %v608, %v727
      %v745 = vmul.f32 %v609, %v737
      %v746 = vperm.slane %v479, 0
      %v747 = vmul.f32 %v738, %v746
      %v748 = vmul.f32 %v739, %v746
      %v749 = vmul.f32 %v740, %v746
      %v750 = vmul.f32 %v741, %v746
      %v751 = vmul.f32 %v742, %v746
      %v752 = vmul.f32 %v743, %v746
      %v753 = vmul.f32 %v744, %v746
      %v754 = vmul.f32 %v745, %v746
      %v755 = vperm.slane %v479, 1
      %v756 = vadd.f32 %v747, %v755
      %v757 = vadd.f32 %v748, %v755
      %v758 = vadd.f32 %v749, %v755
      %v759 = vadd.f32 %v750, %v755
      %v760 = vadd.f32 %v751, %v755
      %v761 = vadd.f32 %v752, %v755
      %v762 = vadd.f32 %v753, %v755
      %v763 = vadd.f32 %v754, %v755
      %v764 = vpack.c.bf16 %v757, %v756
      %v765 = vpack.c.bf16 %v759, %v758
      %v766 = vpack.c.bf16 %v761, %v760
      %v767 = vpack.c.bf16 %v763, %v762
      %v768 = vperm.slane %v479, 2
      %v773 = vunpack.c.l.b16 %v534
      %v774 = vunpack.c.l.b16 %v535
      %v775 = vunpack.c.l.b16 %v536
      %v776 = vunpack.c.l.b16 %v537
      %v777 = vpack.c.b16 %v774, %v773
      %v778 = vpack.c.b16 %v776, %v775
      %v782 = vsel %vm562, %v764, 0
      %v785 = vsel %vm562, %v765, 0
      %v788 = vsel %vm562, %v766, 0
      %v791 = vsel %vm562, %v767, 0
      %793 = vmatpush.bf16.msra.mxu0 0
      %794 = vmatpush.bf16.msra.mxu0 0
      %795 = vmatpush.bf16.msra.mxu0 0
      %796 = vmatpush.bf16.msra.mxu0 0
      %797 = vmatpush.bf16.msra.mxu0 0
      %798 = vmatpush.bf16.msra.mxu0 0
      %799 = vmatpush.bf16.msra.mxu0 %v778
      %800 = vmatpush.bf16.msra.mxu0 %v777
      %801 = vmatmul.bf16.gmra.mxu0 %v782
      %v802 = vpop.f32.mrf.mxu0
      %v803 = vadd.f32 %v768, %v802
      %v804 = vpop.f32.mrf.mxu0
      %v805 = vadd.f32 %v768, %v804
      %806 = vmatmul.bf16.gmra.mxu0 %v785
      %v807 = vpop.f32.mrf.mxu0
      %v808 = vadd.f32 %v768, %v807
      %v809 = vpop.f32.mrf.mxu0
      %v810 = vadd.f32 %v768, %v809
      %811 = vmatmul.bf16.gmra.mxu0 %v788
      %v812 = vpop.f32.mrf.mxu0
      %v813 = vadd.f32 %v768, %v812
      %v814 = vpop.f32.mrf.mxu0
      %v815 = vadd.f32 %v768, %v814
      %816 = vmatmul.bf16.gmra.mxu0 %v791
      %v817 = vpop.f32.mrf.mxu0
      %v818 = vadd.f32 %v768, %v817
      %v819 = vpop.f32.mrf.mxu0
      %v820 = vadd.f32 %v768, %v819
      %821 = vdwg.mxu0
      %v822 = vpack.c.bf16 %v805, %v803
      %v823 = vpack.c.bf16 %v810, %v808
      %v824 = vpack.c.bf16 %v815, %v813
      %v825 = vpack.c.bf16 %v820, %v818
      %830 = vrot.lane.b32.xlu0 %v822, 96
      %v831 = vpop.permute.xlu0 %830
      %832 = vrot.lane.b32.xlu0 %v823, 96
      %v833 = vpop.permute.xlu0 %832
      %834 = vrot.lane.b32.xlu0 %v824, 96
      %v835 = vpop.permute.xlu0 %834
      %836 = vrot.lane.b32.xlu0 %v825, 96
      %v837 = vpop.permute.xlu0 %836
      %vm838 = vcmask 64512
      %v840 = vsel %vm838, %v822, 0
      %v843 = vsel %vm838, %v823, 0
      %v846 = vsel %vm838, %v824, 0
      %v849 = vsel %vm838, %v825, 0
      %v852 = vsel %vm838, %v831, 0
      %v855 = vsel %vm838, %v833, 0
      %v858 = vsel %vm838, %v835, 0
      %v861 = vsel %vm838, %v837, 0
      %863 = vmatpush.bf16.xpose.msra.mxu0 0
      %864 = vmatpush.bf16.xpose.msra.mxu0 0
      %865 = vmatpush.bf16.xpose.msra.mxu0 0
      %866 = vmatpush.bf16.xpose.msra.mxu0 0
      %867 = vmatpush.bf16.xpose.msra.mxu0 %v861
      %868 = vmatpush.bf16.xpose.msra.mxu0 %v858
      %869 = vmatpush.bf16.xpose.msra.mxu0 %v855
      %870 = vmatpush.bf16.xpose.msra.mxu0 %v852
      %871 = vmatmul.bf16.gmra.mxu0 %v840
      %v872 = vpop.f32.mrf.mxu0
      %v873 = vadd.f32 0.0, %v872
      %v874 = vpop.f32.mrf.mxu0
      %v875 = vadd.f32 0.0, %v874
      %876 = vmatmul.bf16.gmra.mxu0 %v843
      %v877 = vpop.f32.mrf.mxu0
      %v878 = vadd.f32 0.0, %v877
      %v879 = vpop.f32.mrf.mxu0
      %v880 = vadd.f32 0.0, %v879
      %881 = vmatmul.bf16.gmra.mxu0 %v846
      %v882 = vpop.f32.mrf.mxu0
      %v883 = vadd.f32 0.0, %v882
      %v884 = vpop.f32.mrf.mxu0
      %v885 = vadd.f32 0.0, %v884
      %886 = vmatmul.bf16.gmra.mxu0 %v849
      %v887 = vpop.f32.mrf.mxu0
      %v888 = vadd.f32 0.0, %v887
      %v889 = vpop.f32.mrf.mxu0
      %v890 = vadd.f32 0.0, %v889
      %891 = vdwg.mxu0
      %v892 = vmul.f32 %v873, 0.35355338
      %v893 = vmul.f32 %v875, 0.35355338
      %v894 = vmul.f32 %v878, 0.35355338
      %v895 = vmul.f32 %v880, 0.35355338
      %v896 = vmul.f32 %v883, 0.35355338
      %v897 = vmul.f32 %v885, 0.35355338
      %v898 = vmul.f32 %v888, 0.35355338
      %v899 = vmul.f32 %v890, 0.35355338
      %v900 = vadd.f32 %v892, %v526
      %v901 = vadd.f32 %v893, %v527
      %v902 = vadd.f32 %v894, %v528
      %v903 = vadd.f32 %v895, %v529
      %v904 = vadd.f32 %v896, %v530
      %v905 = vadd.f32 %v897, %v531
      %v906 = vadd.f32 %v898, %v532
      %v907 = vadd.f32 %v899, %v533
      %vm908 = vcmask 523264
      %v909 = vsel %vm908, %v900, -inf
      %910 = vmax.xlane.f32.xlu0 %v909
      %v911 = vpop.xlane.xlu0 %910
      %v912 = vsel %vm908, %v901, -inf
      %913 = vmax.xlane.f32.xlu0 %v912
      %v914 = vpop.xlane.xlu0 %913
      %v915 = vsel %vm908, %v902, -inf
      %916 = vmax.xlane.f32.xlu0 %v915
      %v917 = vpop.xlane.xlu0 %916
      %v918 = vsel %vm908, %v903, -inf
      %919 = vmax.xlane.f32.xlu0 %v918
      %v920 = vpop.xlane.xlu0 %919
      %v921 = vsel %vm908, %v904, -inf
      %922 = vmax.xlane.f32.xlu0 %v921
      %v923 = vpop.xlane.xlu0 %922
      %v924 = vsel %vm908, %v905, -inf
      %925 = vmax.xlane.f32.xlu0 %v924
      %v926 = vpop.xlane.xlu0 %925
      %v927 = vsel %vm908, %v906, -inf
      %928 = vmax.xlane.f32.xlu0 %v927
      %v929 = vpop.xlane.xlu0 %928
      %v930 = vsel %vm908, %v907, -inf
      %931 = vmax.xlane.f32.xlu0 %v930
      %v932 = vpop.xlane.xlu0 %931
      %v933 = vsub.f32 %v900, %v911
      %v934 = vsub.f32 %v901, %v914
      %v935 = vsub.f32 %v902, %v917
      %v936 = vsub.f32 %v903, %v920
      %v937 = vsub.f32 %v904, %v923
      %v938 = vsub.f32 %v905, %v926
      %v939 = vsub.f32 %v906, %v929
      %v940 = vsub.f32 %v907, %v932
      %v941 = vmul.f32 %v933, 1.442695
      %v942 = vpow.pop %v941
      %v943 = vmul.f32 %v934, 1.442695
      %v944 = vpow.pop %v943
      %v945 = vmul.f32 %v935, 1.442695
      %v946 = vpow.pop %v945
      %v947 = vmul.f32 %v936, 1.442695
      %v948 = vpow.pop %v947
      %v949 = vmul.f32 %v937, 1.442695
      %v950 = vpow.pop %v949
      %v951 = vmul.f32 %v938, 1.442695
      %v952 = vpow.pop %v951
      %v953 = vmul.f32 %v939, 1.442695
      %v954 = vpow.pop %v953
      %v955 = vmul.f32 %v940, 1.442695
      %v956 = vpow.pop %v955
      %v957 = vsel %vm908, %v942, 0.0
      %958 = vadd.xlane.f32.xlu0 %v957
      %v959 = vpop.xlane.xlu0 %958
      %v960 = vsel %vm908, %v944, 0.0
      %961 = vadd.xlane.f32.xlu0 %v960
      %v962 = vpop.xlane.xlu0 %961
      %v963 = vsel %vm908, %v946, 0.0
      %964 = vadd.xlane.f32.xlu0 %v963
      %v965 = vpop.xlane.xlu0 %964
      %v966 = vsel %vm908, %v948, 0.0
      %967 = vadd.xlane.f32.xlu0 %v966
      %v968 = vpop.xlane.xlu0 %967
      %v969 = vsel %vm908, %v950, 0.0
      %970 = vadd.xlane.f32.xlu0 %v969
      %v971 = vpop.xlane.xlu0 %970
      %v972 = vsel %vm908, %v952, 0.0
      %973 = vadd.xlane.f32.xlu0 %v972
      %v974 = vpop.xlane.xlu0 %973
      %v975 = vsel %vm908, %v954, 0.0
      %976 = vadd.xlane.f32.xlu0 %v975
      %v977 = vpop.xlane.xlu0 %976
      %v978 = vsel %vm908, %v956, 0.0
      %979 = vadd.xlane.f32.xlu0 %v978
      %v980 = vpop.xlane.xlu0 %979
      %v981 = vrcp.pop %v959
      %v982 = vrcp.pop %v962
      %v983 = vrcp.pop %v965
      %v984 = vrcp.pop %v968
      %v985 = vrcp.pop %v971
      %v986 = vrcp.pop %v974
      %v987 = vrcp.pop %v977
      %v988 = vrcp.pop %v980
      %v989 = vmul.f32 %v942, %v981
      %v990 = vmul.f32 %v944, %v982
      %v991 = vmul.f32 %v946, %v983
      %v992 = vmul.f32 %v948, %v984
      %v993 = vmul.f32 %v950, %v985
      %v994 = vmul.f32 %v952, %v986
      %v995 = vmul.f32 %v954, %v987
      %v996 = vmul.f32 %v956, %v988
      %v997 = vpack.c.bf16 %v990, %v989
      %v998 = vpack.c.bf16 %v992, %v991
      %v999 = vpack.c.bf16 %v994, %v993
      %v1000 = vpack.c.bf16 %v996, %v995
      %1001 = vrot.lane.b32.xlu0 %v822, 64
      %v1002 = vpop.permute.xlu0 %1001
      %1003 = vrot.lane.b32.xlu0 %v823, 64
      %v1004 = vpop.permute.xlu0 %1003
      %1005 = vrot.lane.b32.xlu0 %v824, 64
      %v1006 = vpop.permute.xlu0 %1005
      %1007 = vrot.lane.b32.xlu0 %v825, 64
      %v1008 = vpop.permute.xlu0 %1007
      %v1014 = vsel %vm908, %v997, 0
      %v1017 = vsel %vm908, %v998, 0
      %v1020 = vsel %vm908, %v999, 0
      %v1023 = vsel %vm908, %v1000, 0
      %1025 = vmatpush.bf16.msra.mxu0 0
      %1026 = vmatpush.bf16.msra.mxu0 0
      %1027 = vmatpush.bf16.msra.mxu0 0
      %1028 = vmatpush.bf16.msra.mxu0 0
      %1029 = vmatpush.bf16.msra.mxu0 %v1008
      %1030 = vmatpush.bf16.msra.mxu0 %v1006
      %1031 = vmatpush.bf16.msra.mxu0 %v1004
      %1032 = vmatpush.bf16.msra.mxu0 %v1002
      %1033 = vmatmul.bf16.gmra.mxu0 %v1014
      %v1034 = vpop.f32.mrf.mxu0
      %v1035 = vadd.f32 0.0, %v1034
      %v1036 = vpop.f32.mrf.mxu0
      %v1037 = vadd.f32 0.0, %v1036
      %1038 = vmatmul.bf16.gmra.mxu0 %v1017
      %v1039 = vpop.f32.mrf.mxu0
      %v1040 = vadd.f32 0.0, %v1039
      %v1041 = vpop.f32.mrf.mxu0
      %v1042 = vadd.f32 0.0, %v1041
      %1043 = vmatmul.bf16.gmra.mxu0 %v1020
      %v1044 = vpop.f32.mrf.mxu0
      %v1045 = vadd.f32 0.0, %v1044
      %v1046 = vpop.f32.mrf.mxu0
      %v1047 = vadd.f32 0.0, %v1046
      %1048 = vmatmul.bf16.gmra.mxu0 %v1023
      %v1049 = vpop.f32.mrf.mxu0
      %v1050 = vadd.f32 0.0, %v1049
      %v1051 = vpop.f32.mrf.mxu0
      %v1052 = vadd.f32 0.0, %v1051
      %1053 = vdwg.mxu0
      %1054 = vrot.lane.b32.xlu0 %v822, 120
      %v1055 = vpop.permute.xlu0 %1054
      %1056 = vrot.lane.b32.xlu0 %v823, 120
      %v1057 = vpop.permute.xlu0 %1056
      %1058 = vrot.lane.b32.xlu0 %v824, 120
      %v1059 = vpop.permute.xlu0 %1058
      %1060 = vrot.lane.b32.xlu0 %v825, 120
      %v1061 = vpop.permute.xlu0 %1060
      %1062 = vrot.lane.b32.xlu0 %v822, 88
      %v1063 = vpop.permute.xlu0 %1062
      %1064 = vrot.lane.b32.xlu0 %v823, 88
      %v1065 = vpop.permute.xlu0 %1064
      %1066 = vrot.lane.b32.xlu0 %v824, 88
      %v1067 = vpop.permute.xlu0 %1066
      %1068 = vrot.lane.b32.xlu0 %v825, 88
      %v1069 = vpop.permute.xlu0 %1068
      %v1071 = vsel %vm838, %v1055, 0
      %v1074 = vsel %vm838, %v1057, 0
      %v1077 = vsel %vm838, %v1059, 0
      %v1080 = vsel %vm838, %v1061, 0
      %v1083 = vsel %vm838, %v1063, 0
      %v1086 = vsel %vm838, %v1065, 0
      %v1089 = vsel %vm838, %v1067, 0
      %v1092 = vsel %vm838, %v1069, 0
      %1094 = vmatpush.bf16.xpose.msra.mxu0 0
      %1095 = vmatpush.bf16.xpose.msra.mxu0 0
      %1096 = vmatpush.bf16.xpose.msra.mxu0 0
      %1097 = vmatpush.bf16.xpose.msra.mxu0 0
      %1098 = vmatpush.bf16.xpose.msra.mxu0 %v1092
      %1099 = vmatpush.bf16.xpose.msra.mxu0 %v1089
      %1100 = vmatpush.bf16.xpose.msra.mxu0 %v1086
      %1101 = vmatpush.bf16.xpose.msra.mxu0 %v1083
      %1102 = vmatmul.bf16.gmra.mxu0 %v1071
      %v1103 = vpop.f32.mrf.mxu0
      %v1104 = vadd.f32 0.0, %v1103
      %v1105 = vpop.f32.mrf.mxu0
      %v1106 = vadd.f32 0.0, %v1105
      %1107 = vmatmul.bf16.gmra.mxu0 %v1074
      %v1108 = vpop.f32.mrf.mxu0
      %v1109 = vadd.f32 0.0, %v1108
      %v1110 = vpop.f32.mrf.mxu0
      %v1111 = vadd.f32 0.0, %v1110
      %1112 = vmatmul.bf16.gmra.mxu0 %v1077
      %v1113 = vpop.f32.mrf.mxu0
      %v1114 = vadd.f32 0.0, %v1113
      %v1115 = vpop.f32.mrf.mxu0
      %v1116 = vadd.f32 0.0, %v1115
      %1117 = vmatmul.bf16.gmra.mxu0 %v1080
      %v1118 = vpop.f32.mrf.mxu0
      %v1119 = vadd.f32 0.0, %v1118
      %v1120 = vpop.f32.mrf.mxu0
      %v1121 = vadd.f32 0.0, %v1120
      %1122 = vdwg.mxu0
      %v1123 = vmul.f32 %v1104, 0.35355338
      %v1124 = vmul.f32 %v1106, 0.35355338
      %v1125 = vmul.f32 %v1109, 0.35355338
      %v1126 = vmul.f32 %v1111, 0.35355338
      %v1127 = vmul.f32 %v1114, 0.35355338
      %v1128 = vmul.f32 %v1116, 0.35355338
      %v1129 = vmul.f32 %v1119, 0.35355338
      %v1130 = vmul.f32 %v1121, 0.35355338
      %v1131 = vadd.f32 %v1123, %v526
      %v1132 = vadd.f32 %v1124, %v527
      %v1133 = vadd.f32 %v1125, %v528
      %v1134 = vadd.f32 %v1126, %v529
      %v1135 = vadd.f32 %v1127, %v530
      %v1136 = vadd.f32 %v1128, %v531
      %v1137 = vadd.f32 %v1129, %v532
      %v1138 = vadd.f32 %v1130, %v533
      %v1139 = vsel %vm908, %v1131, -inf
      %1140 = vmax.xlane.f32.xlu0 %v1139
      %v1141 = vpop.xlane.xlu0 %1140
      %v1142 = vsel %vm908, %v1132, -inf
      %1143 = vmax.xlane.f32.xlu0 %v1142
      %v1144 = vpop.xlane.xlu0 %1143
      %v1145 = vsel %vm908, %v1133, -inf
      %1146 = vmax.xlane.f32.xlu0 %v1145
      %v1147 = vpop.xlane.xlu0 %1146
      %v1148 = vsel %vm908, %v1134, -inf
      %1149 = vmax.xlane.f32.xlu0 %v1148
      %v1150 = vpop.xlane.xlu0 %1149
      %v1151 = vsel %vm908, %v1135, -inf
      %1152 = vmax.xlane.f32.xlu0 %v1151
      %v1153 = vpop.xlane.xlu0 %1152
      %v1154 = vsel %vm908, %v1136, -inf
      %1155 = vmax.xlane.f32.xlu0 %v1154
      %v1156 = vpop.xlane.xlu0 %1155
      %v1157 = vsel %vm908, %v1137, -inf
      %1158 = vmax.xlane.f32.xlu0 %v1157
      %v1159 = vpop.xlane.xlu0 %1158
      %v1160 = vsel %vm908, %v1138, -inf
      %1161 = vmax.xlane.f32.xlu0 %v1160
      %v1162 = vpop.xlane.xlu0 %1161
      %v1163 = vsub.f32 %v1131, %v1141
      %v1164 = vsub.f32 %v1132, %v1144
      %v1165 = vsub.f32 %v1133, %v1147
      %v1166 = vsub.f32 %v1134, %v1150
      %v1167 = vsub.f32 %v1135, %v1153
      %v1168 = vsub.f32 %v1136, %v1156
      %v1169 = vsub.f32 %v1137, %v1159
      %v1170 = vsub.f32 %v1138, %v1162
      %v1171 = vmul.f32 %v1163, 1.442695
      %v1172 = vpow.pop %v1171
      %v1173 = vmul.f32 %v1164, 1.442695
      %v1174 = vpow.pop %v1173
      %v1175 = vmul.f32 %v1165, 1.442695
      %v1176 = vpow.pop %v1175
      %v1177 = vmul.f32 %v1166, 1.442695
      %v1178 = vpow.pop %v1177
      %v1179 = vmul.f32 %v1167, 1.442695
      %v1180 = vpow.pop %v1179
      %v1181 = vmul.f32 %v1168, 1.442695
      %v1182 = vpow.pop %v1181
      %v1183 = vmul.f32 %v1169, 1.442695
      %v1184 = vpow.pop %v1183
      %v1185 = vmul.f32 %v1170, 1.442695
      %v1186 = vpow.pop %v1185
      %v1187 = vsel %vm908, %v1172, 0.0
      %1188 = vadd.xlane.f32.xlu0 %v1187
      %v1189 = vpop.xlane.xlu0 %1188
      %v1190 = vsel %vm908, %v1174, 0.0
      %1191 = vadd.xlane.f32.xlu0 %v1190
      %v1192 = vpop.xlane.xlu0 %1191
      %v1193 = vsel %vm908, %v1176, 0.0
      %1194 = vadd.xlane.f32.xlu0 %v1193
      %v1195 = vpop.xlane.xlu0 %1194
      %v1196 = vsel %vm908, %v1178, 0.0
      %1197 = vadd.xlane.f32.xlu0 %v1196
      %v1198 = vpop.xlane.xlu0 %1197
      %v1199 = vsel %vm908, %v1180, 0.0
      %1200 = vadd.xlane.f32.xlu0 %v1199
      %v1201 = vpop.xlane.xlu0 %1200
      %v1202 = vsel %vm908, %v1182, 0.0
      %1203 = vadd.xlane.f32.xlu0 %v1202
      %v1204 = vpop.xlane.xlu0 %1203
      %v1205 = vsel %vm908, %v1184, 0.0
      %1206 = vadd.xlane.f32.xlu0 %v1205
      %v1207 = vpop.xlane.xlu0 %1206
      %v1208 = vsel %vm908, %v1186, 0.0
      %1209 = vadd.xlane.f32.xlu0 %v1208
      %v1210 = vpop.xlane.xlu0 %1209
      %v1211 = vrcp.pop %v1189
      %v1212 = vrcp.pop %v1192
      %v1213 = vrcp.pop %v1195
      %v1214 = vrcp.pop %v1198
      %v1215 = vrcp.pop %v1201
      %v1216 = vrcp.pop %v1204
      %v1217 = vrcp.pop %v1207
      %v1218 = vrcp.pop %v1210
      %v1219 = vmul.f32 %v1172, %v1211
      %v1220 = vmul.f32 %v1174, %v1212
      %v1221 = vmul.f32 %v1176, %v1213
      %v1222 = vmul.f32 %v1178, %v1214
      %v1223 = vmul.f32 %v1180, %v1215
      %v1224 = vmul.f32 %v1182, %v1216
      %v1225 = vmul.f32 %v1184, %v1217
      %v1226 = vmul.f32 %v1186, %v1218
      %v1227 = vpack.c.bf16 %v1220, %v1219
      %v1228 = vpack.c.bf16 %v1222, %v1221
      %v1229 = vpack.c.bf16 %v1224, %v1223
      %v1230 = vpack.c.bf16 %v1226, %v1225
      %1231 = vrot.lane.b32.xlu0 %v822, 56
      %v1232 = vpop.permute.xlu0 %1231
      %1233 = vrot.lane.b32.xlu0 %v823, 56
      %v1234 = vpop.permute.xlu0 %1233
      %1235 = vrot.lane.b32.xlu0 %v824, 56
      %v1236 = vpop.permute.xlu0 %1235
      %1237 = vrot.lane.b32.xlu0 %v825, 56
      %v1238 = vpop.permute.xlu0 %1237
      %v1244 = vsel %vm908, %v1227, 0
      %v1247 = vsel %vm908, %v1228, 0
      %v1250 = vsel %vm908, %v1229, 0
      %v1253 = vsel %vm908, %v1230, 0
      %1255 = vmatpush.bf16.msra.mxu0 0
      %1256 = vmatpush.bf16.msra.mxu0 0
      %1257 = vmatpush.bf16.msra.mxu0 0
      %1258 = vmatpush.bf16.msra.mxu0 0
      %1259 = vmatpush.bf16.msra.mxu0 %v1238
      %1260 = vmatpush.bf16.msra.mxu0 %v1236
      %1261 = vmatpush.bf16.msra.mxu0 %v1234
      %1262 = vmatpush.bf16.msra.mxu0 %v1232
      %1263 = vmatmul.bf16.gmra.mxu0 %v1244
      %v1264 = vpop.f32.mrf.mxu0
      %v1265 = vadd.f32 0.0, %v1264
      %v1266 = vpop.f32.mrf.mxu0
      %v1267 = vadd.f32 0.0, %v1266
      %1268 = vmatmul.bf16.gmra.mxu0 %v1247
      %v1269 = vpop.f32.mrf.mxu0
      %v1270 = vadd.f32 0.0, %v1269
      %v1271 = vpop.f32.mrf.mxu0
      %v1272 = vadd.f32 0.0, %v1271
      %1273 = vmatmul.bf16.gmra.mxu0 %v1250
      %v1274 = vpop.f32.mrf.mxu0
      %v1275 = vadd.f32 0.0, %v1274
      %v1276 = vpop.f32.mrf.mxu0
      %v1277 = vadd.f32 0.0, %v1276
      %1278 = vmatmul.bf16.gmra.mxu0 %v1253
      %v1279 = vpop.f32.mrf.mxu0
      %v1280 = vadd.f32 0.0, %v1279
      %v1281 = vpop.f32.mrf.mxu0
      %v1282 = vadd.f32 0.0, %v1281
      %1283 = vdwg.mxu0
      %1284 = vrot.lane.b32.xlu0 %v822, 112
      %v1285 = vpop.permute.xlu0 %1284
      %1286 = vrot.lane.b32.xlu0 %v823, 112
      %v1287 = vpop.permute.xlu0 %1286
      %1288 = vrot.lane.b32.xlu0 %v824, 112
      %v1289 = vpop.permute.xlu0 %1288
      %1290 = vrot.lane.b32.xlu0 %v825, 112
      %v1291 = vpop.permute.xlu0 %1290
      %1292 = vrot.lane.b32.xlu0 %v822, 80
      %v1293 = vpop.permute.xlu0 %1292
      %1294 = vrot.lane.b32.xlu0 %v823, 80
      %v1295 = vpop.permute.xlu0 %1294
      %1296 = vrot.lane.b32.xlu0 %v824, 80
      %v1297 = vpop.permute.xlu0 %1296
      %1298 = vrot.lane.b32.xlu0 %v825, 80
      %v1299 = vpop.permute.xlu0 %1298
      %v1301 = vsel %vm838, %v1285, 0
      %v1304 = vsel %vm838, %v1287, 0
      %v1307 = vsel %vm838, %v1289, 0
      %v1310 = vsel %vm838, %v1291, 0
      %v1313 = vsel %vm838, %v1293, 0
      %v1316 = vsel %vm838, %v1295, 0
      %v1319 = vsel %vm838, %v1297, 0
      %v1322 = vsel %vm838, %v1299, 0
      %1324 = vmatpush.bf16.xpose.msra.mxu0 0
      %1325 = vmatpush.bf16.xpose.msra.mxu0 0
      %1326 = vmatpush.bf16.xpose.msra.mxu0 0
      %1327 = vmatpush.bf16.xpose.msra.mxu0 0
      %1328 = vmatpush.bf16.xpose.msra.mxu0 %v1322
      %1329 = vmatpush.bf16.xpose.msra.mxu0 %v1319
      %1330 = vmatpush.bf16.xpose.msra.mxu0 %v1316
      %1331 = vmatpush.bf16.xpose.msra.mxu0 %v1313
      %1332 = vmatmul.bf16.gmra.mxu0 %v1301
      %v1333 = vpop.f32.mrf.mxu0
      %v1334 = vadd.f32 0.0, %v1333
      %v1335 = vpop.f32.mrf.mxu0
      %v1336 = vadd.f32 0.0, %v1335
      %1337 = vmatmul.bf16.gmra.mxu0 %v1304
      %v1338 = vpop.f32.mrf.mxu0
      %v1339 = vadd.f32 0.0, %v1338
      %v1340 = vpop.f32.mrf.mxu0
      %v1341 = vadd.f32 0.0, %v1340
      %1342 = vmatmul.bf16.gmra.mxu0 %v1307
      %v1343 = vpop.f32.mrf.mxu0
      %v1344 = vadd.f32 0.0, %v1343
      %v1345 = vpop.f32.mrf.mxu0
      %v1346 = vadd.f32 0.0, %v1345
      %1347 = vmatmul.bf16.gmra.mxu0 %v1310
      %v1348 = vpop.f32.mrf.mxu0
      %v1349 = vadd.f32 0.0, %v1348
      %v1350 = vpop.f32.mrf.mxu0
      %v1351 = vadd.f32 0.0, %v1350
      %1352 = vdwg.mxu0
      %v1353 = vmul.f32 %v1334, 0.35355338
      %v1354 = vmul.f32 %v1336, 0.35355338
      %v1355 = vmul.f32 %v1339, 0.35355338
      %v1356 = vmul.f32 %v1341, 0.35355338
      %v1357 = vmul.f32 %v1344, 0.35355338
      %v1358 = vmul.f32 %v1346, 0.35355338
      %v1359 = vmul.f32 %v1349, 0.35355338
      %v1360 = vmul.f32 %v1351, 0.35355338
      %v1361 = vadd.f32 %v1353, %v526
      %v1362 = vadd.f32 %v1354, %v527
      %v1363 = vadd.f32 %v1355, %v528
      %v1364 = vadd.f32 %v1356, %v529
      %v1365 = vadd.f32 %v1357, %v530
      %v1366 = vadd.f32 %v1358, %v531
      %v1367 = vadd.f32 %v1359, %v532
      %v1368 = vadd.f32 %v1360, %v533
      %v1369 = vsel %vm908, %v1361, -inf
      %1370 = vmax.xlane.f32.xlu0 %v1369
      %v1371 = vpop.xlane.xlu0 %1370
      %v1372 = vsel %vm908, %v1362, -inf
      %1373 = vmax.xlane.f32.xlu0 %v1372
      %v1374 = vpop.xlane.xlu0 %1373
      %v1375 = vsel %vm908, %v1363, -inf
      %1376 = vmax.xlane.f32.xlu0 %v1375
      %v1377 = vpop.xlane.xlu0 %1376
      %v1378 = vsel %vm908, %v1364, -inf
      %1379 = vmax.xlane.f32.xlu0 %v1378
      %v1380 = vpop.xlane.xlu0 %1379
      %v1381 = vsel %vm908, %v1365, -inf
      %1382 = vmax.xlane.f32.xlu0 %v1381
      %v1383 = vpop.xlane.xlu0 %1382
      %v1384 = vsel %vm908, %v1366, -inf
      %1385 = vmax.xlane.f32.xlu0 %v1384
      %v1386 = vpop.xlane.xlu0 %1385
      %v1387 = vsel %vm908, %v1367, -inf
      %1388 = vmax.xlane.f32.xlu0 %v1387
      %v1389 = vpop.xlane.xlu0 %1388
      %v1390 = vsel %vm908, %v1368, -inf
      %1391 = vmax.xlane.f32.xlu0 %v1390
      %v1392 = vpop.xlane.xlu0 %1391
      %v1393 = vsub.f32 %v1361, %v1371
      %v1394 = vsub.f32 %v1362, %v1374
      %v1395 = vsub.f32 %v1363, %v1377
      %v1396 = vsub.f32 %v1364, %v1380
      %v1397 = vsub.f32 %v1365, %v1383
      %v1398 = vsub.f32 %v1366, %v1386
      %v1399 = vsub.f32 %v1367, %v1389
      %v1400 = vsub.f32 %v1368, %v1392
      %v1401 = vmul.f32 %v1393, 1.442695
      %v1402 = vpow.pop %v1401
      %v1403 = vmul.f32 %v1394, 1.442695
      %v1404 = vpow.pop %v1403
      %v1405 = vmul.f32 %v1395, 1.442695
      %v1406 = vpow.pop %v1405
      %v1407 = vmul.f32 %v1396, 1.442695
      %v1408 = vpow.pop %v1407
      %v1409 = vmul.f32 %v1397, 1.442695
      %v1410 = vpow.pop %v1409
      %v1411 = vmul.f32 %v1398, 1.442695
      %v1412 = vpow.pop %v1411
      %v1413 = vmul.f32 %v1399, 1.442695
      %v1414 = vpow.pop %v1413
      %v1415 = vmul.f32 %v1400, 1.442695
      %v1416 = vpow.pop %v1415
      %v1417 = vsel %vm908, %v1402, 0.0
      %1418 = vadd.xlane.f32.xlu0 %v1417
      %v1419 = vpop.xlane.xlu0 %1418
      %v1420 = vsel %vm908, %v1404, 0.0
      %1421 = vadd.xlane.f32.xlu0 %v1420
      %v1422 = vpop.xlane.xlu0 %1421
      %v1423 = vsel %vm908, %v1406, 0.0
      %1424 = vadd.xlane.f32.xlu0 %v1423
      %v1425 = vpop.xlane.xlu0 %1424
      %v1426 = vsel %vm908, %v1408, 0.0
      %1427 = vadd.xlane.f32.xlu0 %v1426
      %v1428 = vpop.xlane.xlu0 %1427
      %v1429 = vsel %vm908, %v1410, 0.0
      %1430 = vadd.xlane.f32.xlu0 %v1429
      %v1431 = vpop.xlane.xlu0 %1430
      %v1432 = vsel %vm908, %v1412, 0.0
      %1433 = vadd.xlane.f32.xlu0 %v1432
      %v1434 = vpop.xlane.xlu0 %1433
      %v1435 = vsel %vm908, %v1414, 0.0
      %1436 = vadd.xlane.f32.xlu0 %v1435
      %v1437 = vpop.xlane.xlu0 %1436
      %v1438 = vsel %vm908, %v1416, 0.0
      %1439 = vadd.xlane.f32.xlu0 %v1438
      %v1440 = vpop.xlane.xlu0 %1439
      %v1441 = vrcp.pop %v1419
      %v1442 = vrcp.pop %v1422
      %v1443 = vrcp.pop %v1425
      %v1444 = vrcp.pop %v1428
      %v1445 = vrcp.pop %v1431
      %v1446 = vrcp.pop %v1434
      %v1447 = vrcp.pop %v1437
      %v1448 = vrcp.pop %v1440
      %v1449 = vmul.f32 %v1402, %v1441
      %v1450 = vmul.f32 %v1404, %v1442
      %v1451 = vmul.f32 %v1406, %v1443
      %v1452 = vmul.f32 %v1408, %v1444
      %v1453 = vmul.f32 %v1410, %v1445
      %v1454 = vmul.f32 %v1412, %v1446
      %v1455 = vmul.f32 %v1414, %v1447
      %v1456 = vmul.f32 %v1416, %v1448
      %v1457 = vpack.c.bf16 %v1450, %v1449
      %v1458 = vpack.c.bf16 %v1452, %v1451
      %v1459 = vpack.c.bf16 %v1454, %v1453
      %v1460 = vpack.c.bf16 %v1456, %v1455
      %1461 = vrot.lane.b32.xlu0 %v822, 48
      %v1462 = vpop.permute.xlu0 %1461
      %1463 = vrot.lane.b32.xlu0 %v823, 48
      %v1464 = vpop.permute.xlu0 %1463
      %1465 = vrot.lane.b32.xlu0 %v824, 48
      %v1466 = vpop.permute.xlu0 %1465
      %1467 = vrot.lane.b32.xlu0 %v825, 48
      %v1468 = vpop.permute.xlu0 %1467
      %v1474 = vsel %vm908, %v1457, 0
      %v1477 = vsel %vm908, %v1458, 0
      %v1480 = vsel %vm908, %v1459, 0
      %v1483 = vsel %vm908, %v1460, 0
      %1485 = vmatpush.bf16.msra.mxu0 0
      %1486 = vmatpush.bf16.msra.mxu0 0
      %1487 = vmatpush.bf16.msra.mxu0 0
      %1488 = vmatpush.bf16.msra.mxu0 0
      %1489 = vmatpush.bf16.msra.mxu0 %v1468
      %1490 = vmatpush.bf16.msra.mxu0 %v1466
      %1491 = vmatpush.bf16.msra.mxu0 %v1464
      %1492 = vmatpush.bf16.msra.mxu0 %v1462
      %1493 = vmatmul.bf16.gmra.mxu0 %v1474
      %v1494 = vpop.f32.mrf.mxu0
      %v1495 = vadd.f32 0.0, %v1494
      %v1496 = vpop.f32.mrf.mxu0
      %v1497 = vadd.f32 0.0, %v1496
      %1498 = vmatmul.bf16.gmra.mxu0 %v1477
      %v1499 = vpop.f32.mrf.mxu0
      %v1500 = vadd.f32 0.0, %v1499
      %v1501 = vpop.f32.mrf.mxu0
      %v1502 = vadd.f32 0.0, %v1501
      %1503 = vmatmul.bf16.gmra.mxu0 %v1480
      %v1504 = vpop.f32.mrf.mxu0
      %v1505 = vadd.f32 0.0, %v1504
      %v1506 = vpop.f32.mrf.mxu0
      %v1507 = vadd.f32 0.0, %v1506
      %1508 = vmatmul.bf16.gmra.mxu0 %v1483
      %v1509 = vpop.f32.mrf.mxu0
      %v1510 = vadd.f32 0.0, %v1509
      %v1511 = vpop.f32.mrf.mxu0
      %v1512 = vadd.f32 0.0, %v1511
      %1513 = vdwg.mxu0
      %1514 = vrot.lane.b32.xlu0 %v822, 104
      %v1515 = vpop.permute.xlu0 %1514
      %1516 = vrot.lane.b32.xlu0 %v823, 104
      %v1517 = vpop.permute.xlu0 %1516
      %1518 = vrot.lane.b32.xlu0 %v824, 104
      %v1519 = vpop.permute.xlu0 %1518
      %1520 = vrot.lane.b32.xlu0 %v825, 104
      %v1521 = vpop.permute.xlu0 %1520
      %1522 = vrot.lane.b32.xlu0 %v822, 72
      %v1523 = vpop.permute.xlu0 %1522
      %1524 = vrot.lane.b32.xlu0 %v823, 72
      %v1525 = vpop.permute.xlu0 %1524
      %1526 = vrot.lane.b32.xlu0 %v824, 72
      %v1527 = vpop.permute.xlu0 %1526
      %1528 = vrot.lane.b32.xlu0 %v825, 72
      %v1529 = vpop.permute.xlu0 %1528
      %v1531 = vsel %vm838, %v1515, 0
      %v1534 = vsel %vm838, %v1517, 0
      %v1537 = vsel %vm838, %v1519, 0
      %v1540 = vsel %vm838, %v1521, 0
      %v1543 = vsel %vm838, %v1523, 0
      %v1546 = vsel %vm838, %v1525, 0
      %v1549 = vsel %vm838, %v1527, 0
      %v1552 = vsel %vm838, %v1529, 0
      %1554 = vmatpush.bf16.xpose.msra.mxu0 0
      %1555 = vmatpush.bf16.xpose.msra.mxu0 0
      %1556 = vmatpush.bf16.xpose.msra.mxu0 0
      %1557 = vmatpush.bf16.xpose.msra.mxu0 0
      %1558 = vmatpush.bf16.xpose.msra.mxu0 %v1552
      %1559 = vmatpush.bf16.xpose.msra.mxu0 %v1549
      %1560 = vmatpush.bf16.xpose.msra.mxu0 %v1546
      %1561 = vmatpush.bf16.xpose.msra.mxu0 %v1543
      %1562 = vmatmul.bf16.gmra.mxu0 %v1531
      %v1563 = vpop.f32.mrf.mxu0
      %v1564 = vadd.f32 0.0, %v1563
      %v1565 = vpop.f32.mrf.mxu0
      %v1566 = vadd.f32 0.0, %v1565
      %1567 = vmatmul.bf16.gmra.mxu0 %v1534
      %v1568 = vpop.f32.mrf.mxu0
      %v1569 = vadd.f32 0.0, %v1568
      %v1570 = vpop.f32.mrf.mxu0
      %v1571 = vadd.f32 0.0, %v1570
      %1572 = vmatmul.bf16.gmra.mxu0 %v1537
      %v1573 = vpop.f32.mrf.mxu0
      %v1574 = vadd.f32 0.0, %v1573
      %v1575 = vpop.f32.mrf.mxu0
      %v1576 = vadd.f32 0.0, %v1575
      %1577 = vmatmul.bf16.gmra.mxu0 %v1540
      %v1578 = vpop.f32.mrf.mxu0
      %v1579 = vadd.f32 0.0, %v1578
      %v1580 = vpop.f32.mrf.mxu0
      %v1581 = vadd.f32 0.0, %v1580
      %1582 = vdwg.mxu0
      %v1583 = vmul.f32 %v1564, 0.35355338
      %v1584 = vmul.f32 %v1566, 0.35355338
      %v1585 = vmul.f32 %v1569, 0.35355338
      %v1586 = vmul.f32 %v1571, 0.35355338
      %v1587 = vmul.f32 %v1574, 0.35355338
      %v1588 = vmul.f32 %v1576, 0.35355338
      %v1589 = vmul.f32 %v1579, 0.35355338
      %v1590 = vmul.f32 %v1581, 0.35355338
      %v1591 = vadd.f32 %v1583, %v526
      %v1592 = vadd.f32 %v1584, %v527
      %v1593 = vadd.f32 %v1585, %v528
      %v1594 = vadd.f32 %v1586, %v529
      %v1595 = vadd.f32 %v1587, %v530
      %v1596 = vadd.f32 %v1588, %v531
      %v1597 = vadd.f32 %v1589, %v532
      %v1598 = vadd.f32 %v1590, %v533
      %v1599 = vsel %vm908, %v1591, -inf
      %1600 = vmax.xlane.f32.xlu0 %v1599
      %v1601 = vpop.xlane.xlu0 %1600
      %v1602 = vsel %vm908, %v1592, -inf
      %1603 = vmax.xlane.f32.xlu0 %v1602
      %v1604 = vpop.xlane.xlu0 %1603
      %v1605 = vsel %vm908, %v1593, -inf
      %1606 = vmax.xlane.f32.xlu0 %v1605
      %v1607 = vpop.xlane.xlu0 %1606
      %v1608 = vsel %vm908, %v1594, -inf
      %1609 = vmax.xlane.f32.xlu0 %v1608
      %v1610 = vpop.xlane.xlu0 %1609
      %v1611 = vsel %vm908, %v1595, -inf
      %1612 = vmax.xlane.f32.xlu0 %v1611
      %v1613 = vpop.xlane.xlu0 %1612
      %v1614 = vsel %vm908, %v1596, -inf
      %1615 = vmax.xlane.f32.xlu0 %v1614
      %v1616 = vpop.xlane.xlu0 %1615
      %v1617 = vsel %vm908, %v1597, -inf
      %1618 = vmax.xlane.f32.xlu0 %v1617
      %v1619 = vpop.xlane.xlu0 %1618
      %v1620 = vsel %vm908, %v1598, -inf
      %1621 = vmax.xlane.f32.xlu0 %v1620
      %v1622 = vpop.xlane.xlu0 %1621
      %v1623 = vsub.f32 %v1591, %v1601
      %v1624 = vsub.f32 %v1592, %v1604
      %v1625 = vsub.f32 %v1593, %v1607
      %v1626 = vsub.f32 %v1594, %v1610
      %v1627 = vsub.f32 %v1595, %v1613
      %v1628 = vsub.f32 %v1596, %v1616
      %v1629 = vsub.f32 %v1597, %v1619
      %v1630 = vsub.f32 %v1598, %v1622
      %v1631 = vmul.f32 %v1623, 1.442695
      %v1632 = vpow.pop %v1631
      %v1633 = vmul.f32 %v1624, 1.442695
      %v1634 = vpow.pop %v1633
      %v1635 = vmul.f32 %v1625, 1.442695
      %v1636 = vpow.pop %v1635
      %v1637 = vmul.f32 %v1626, 1.442695
      %v1638 = vpow.pop %v1637
      %v1639 = vmul.f32 %v1627, 1.442695
      %v1640 = vpow.pop %v1639
      %v1641 = vmul.f32 %v1628, 1.442695
      %v1642 = vpow.pop %v1641
      %v1643 = vmul.f32 %v1629, 1.442695
      %v1644 = vpow.pop %v1643
      %v1645 = vmul.f32 %v1630, 1.442695
      %v1646 = vpow.pop %v1645
      %v1647 = vsel %vm908, %v1632, 0.0
      %1648 = vadd.xlane.f32.xlu0 %v1647
      %v1649 = vpop.xlane.xlu0 %1648
      %v1650 = vsel %vm908, %v1634, 0.0
      %1651 = vadd.xlane.f32.xlu0 %v1650
      %v1652 = vpop.xlane.xlu0 %1651
      %v1653 = vsel %vm908, %v1636, 0.0
      %1654 = vadd.xlane.f32.xlu0 %v1653
      %v1655 = vpop.xlane.xlu0 %1654
      %v1656 = vsel %vm908, %v1638, 0.0
      %1657 = vadd.xlane.f32.xlu0 %v1656
      %v1658 = vpop.xlane.xlu0 %1657
      %v1659 = vsel %vm908, %v1640, 0.0
      %1660 = vadd.xlane.f32.xlu0 %v1659
      %v1661 = vpop.xlane.xlu0 %1660
      %v1662 = vsel %vm908, %v1642, 0.0
      %1663 = vadd.xlane.f32.xlu0 %v1662
      %v1664 = vpop.xlane.xlu0 %1663
      %v1665 = vsel %vm908, %v1644, 0.0
      %1666 = vadd.xlane.f32.xlu0 %v1665
      %v1667 = vpop.xlane.xlu0 %1666
      %v1668 = vsel %vm908, %v1646, 0.0
      %1669 = vadd.xlane.f32.xlu0 %v1668
      %v1670 = vpop.xlane.xlu0 %1669
      %v1671 = vrcp.pop %v1649
      %v1672 = vrcp.pop %v1652
      %v1673 = vrcp.pop %v1655
      %v1674 = vrcp.pop %v1658
      %v1675 = vrcp.pop %v1661
      %v1676 = vrcp.pop %v1664
      %v1677 = vrcp.pop %v1667
      %v1678 = vrcp.pop %v1670
      %v1679 = vmul.f32 %v1632, %v1671
      %v1680 = vmul.f32 %v1634, %v1672
      %v1681 = vmul.f32 %v1636, %v1673
      %v1682 = vmul.f32 %v1638, %v1674
      %v1683 = vmul.f32 %v1640, %v1675
      %v1684 = vmul.f32 %v1642, %v1676
      %v1685 = vmul.f32 %v1644, %v1677
      %v1686 = vmul.f32 %v1646, %v1678
      %v1687 = vpack.c.bf16 %v1680, %v1679
      %v1688 = vpack.c.bf16 %v1682, %v1681
      %v1689 = vpack.c.bf16 %v1684, %v1683
      %v1690 = vpack.c.bf16 %v1686, %v1685
      %1691 = vrot.lane.b32.xlu0 %v822, 40
      %v1692 = vpop.permute.xlu0 %1691
      %1693 = vrot.lane.b32.xlu0 %v823, 40
      %v1694 = vpop.permute.xlu0 %1693
      %1695 = vrot.lane.b32.xlu0 %v824, 40
      %v1696 = vpop.permute.xlu0 %1695
      %1697 = vrot.lane.b32.xlu0 %v825, 40
      %v1698 = vpop.permute.xlu0 %1697
      %v1704 = vsel %vm908, %v1687, 0
      %v1707 = vsel %vm908, %v1688, 0
      %v1710 = vsel %vm908, %v1689, 0
      %v1713 = vsel %vm908, %v1690, 0
      %1715 = vmatpush.bf16.msra.mxu0 0
      %1716 = vmatpush.bf16.msra.mxu0 0
      %1717 = vmatpush.bf16.msra.mxu0 0
      %1718 = vmatpush.bf16.msra.mxu0 0
      %1719 = vmatpush.bf16.msra.mxu0 %v1698
      %1720 = vmatpush.bf16.msra.mxu0 %v1696
      %1721 = vmatpush.bf16.msra.mxu0 %v1694
      %1722 = vmatpush.bf16.msra.mxu0 %v1692
      %1723 = vmatmul.bf16.gmra.mxu0 %v1704
      %v1724 = vpop.f32.mrf.mxu0
      %v1725 = vadd.f32 0.0, %v1724
      %v1726 = vpop.f32.mrf.mxu0
      %v1727 = vadd.f32 0.0, %v1726
      %1728 = vmatmul.bf16.gmra.mxu0 %v1707
      %v1729 = vpop.f32.mrf.mxu0
      %v1730 = vadd.f32 0.0, %v1729
      %v1731 = vpop.f32.mrf.mxu0
      %v1732 = vadd.f32 0.0, %v1731
      %1733 = vmatmul.bf16.gmra.mxu0 %v1710
      %v1734 = vpop.f32.mrf.mxu0
      %v1735 = vadd.f32 0.0, %v1734
      %v1736 = vpop.f32.mrf.mxu0
      %v1737 = vadd.f32 0.0, %v1736
      %1738 = vmatmul.bf16.gmra.mxu0 %v1713
      %v1739 = vpop.f32.mrf.mxu0
      %v1740 = vadd.f32 0.0, %v1739
      %v1741 = vpop.f32.mrf.mxu0
      %v1742 = vadd.f32 0.0, %v1741
      %1743 = vdwg.mxu0
      %1752 = vrot.lane.b32.xlu0 %v1265, 8
      %v1753 = vpop.permute.xlu0 %1752
      %1754 = vrot.lane.b32.xlu0 %v1267, 8
      %v1755 = vpop.permute.xlu0 %1754
      %1756 = vrot.lane.b32.xlu0 %v1270, 8
      %v1757 = vpop.permute.xlu0 %1756
      %1758 = vrot.lane.b32.xlu0 %v1272, 8
      %v1759 = vpop.permute.xlu0 %1758
      %1760 = vrot.lane.b32.xlu0 %v1275, 8
      %v1761 = vpop.permute.xlu0 %1760
      %1762 = vrot.lane.b32.xlu0 %v1277, 8
      %v1763 = vpop.permute.xlu0 %1762
      %1764 = vrot.lane.b32.xlu0 %v1280, 8
      %v1765 = vpop.permute.xlu0 %1764
      %1766 = vrot.lane.b32.xlu0 %v1282, 8
      %v1767 = vpop.permute.xlu0 %1766
      %1784 = vrot.lane.b32.xlu0 %v1495, 16
      %v1785 = vpop.permute.xlu0 %1784
      %1786 = vrot.lane.b32.xlu0 %v1497, 16
      %v1787 = vpop.permute.xlu0 %1786
      %1788 = vrot.lane.b32.xlu0 %v1500, 16
      %v1789 = vpop.permute.xlu0 %1788
      %1790 = vrot.lane.b32.xlu0 %v1502, 16
      %v1791 = vpop.permute.xlu0 %1790
      %1792 = vrot.lane.b32.xlu0 %v1505, 16
      %v1793 = vpop.permute.xlu0 %1792
      %1794 = vrot.lane.b32.xlu0 %v1507, 16
      %v1795 = vpop.permute.xlu0 %1794
      %1796 = vrot.lane.b32.xlu0 %v1510, 16
      %v1797 = vpop.permute.xlu0 %1796
      %1798 = vrot.lane.b32.xlu0 %v1512, 16
      %v1799 = vpop.permute.xlu0 %1798
      %1816 = vrot.lane.b32.xlu0 %v1725, 24
      %v1817 = vpop.permute.xlu0 %1816
      %1818 = vrot.lane.b32.xlu0 %v1727, 24
      %v1819 = vpop.permute.xlu0 %1818
      %1820 = vrot.lane.b32.xlu0 %v1730, 24
      %v1821 = vpop.permute.xlu0 %1820
      %1822 = vrot.lane.b32.xlu0 %v1732, 24
      %v1823 = vpop.permute.xlu0 %1822
      %1824 = vrot.lane.b32.xlu0 %v1735, 24
      %v1825 = vpop.permute.xlu0 %1824
      %1826 = vrot.lane.b32.xlu0 %v1737, 24
      %v1827 = vpop.permute.xlu0 %1826
      %1828 = vrot.lane.b32.xlu0 %v1740, 24
      %v1829 = vpop.permute.xlu0 %1828
      %1830 = vrot.lane.b32.xlu0 %v1742, 24
      %v1831 = vpop.permute.xlu0 %1830
      %v1840 = vsel %vm838, %v1035, %v1753
      %v1841 = vsel %vm838, %v1037, %v1755
      %v1842 = vsel %vm838, %v1040, %v1757
      %v1843 = vsel %vm838, %v1042, %v1759
      %v1844 = vsel %vm838, %v1045, %v1761
      %v1845 = vsel %vm838, %v1047, %v1763
      %v1846 = vsel %vm838, %v1050, %v1765
      %v1847 = vsel %vm838, %v1052, %v1767
      %vm1848 = vcmask 130048
      %v1849 = vsel %vm1848, %v1840, %v1785
      %v1850 = vsel %vm1848, %v1841, %v1787
      %v1851 = vsel %vm1848, %v1842, %v1789
      %v1852 = vsel %vm1848, %v1843, %v1791
      %v1853 = vsel %vm1848, %v1844, %v1793
      %v1854 = vsel %vm1848, %v1845, %v1795
      %v1855 = vsel %vm1848, %v1846, %v1797
      %v1856 = vsel %vm1848, %v1847, %v1799
      %vm1857 = vcmask 195584
      %v1858 = vsel %vm1857, %v1849, %v1817
      %v1859 = vsel %vm1857, %v1850, %v1819
      %v1860 = vsel %vm1857, %v1851, %v1821
      %v1861 = vsel %vm1857, %v1852, %v1823
      %v1862 = vsel %vm1857, %v1853, %v1825
      %v1863 = vsel %vm1857, %v1854, %v1827
      %v1864 = vsel %vm1857, %v1855, %v1829
      %v1865 = vsel %vm1857, %v1856, %v1831
      %v1866 = vpack.c.bf16 %v1859, %v1858
      %v1867 = vpack.c.bf16 %v1861, %v1860
      %v1868 = vpack.c.bf16 %v1863, %v1862
      %v1869 = vpack.c.bf16 %v1865, %v1864
      %v1874 = vunpack.c.l.b16 %v538
      %v1875 = vunpack.c.l.b16 %v539
      %v1876 = vunpack.c.l.b16 %v540
      %v1877 = vunpack.c.l.b16 %v541
      %v1878 = vpack.c.b16 %v1875, %v1874
      %v1879 = vpack.c.b16 %v1877, %v1876
      %v1883 = vsel %vm562, %v1866, 0
      %v1886 = vsel %vm562, %v1867, 0
      %v1889 = vsel %vm562, %v1868, 0
      %v1892 = vsel %vm562, %v1869, 0
      %1894 = vmatpush.bf16.msra.mxu0 0
      %1895 = vmatpush.bf16.msra.mxu0 0
      %1896 = vmatpush.bf16.msra.mxu0 0
      %1897 = vmatpush.bf16.msra.mxu0 0
      %1898 = vmatpush.bf16.msra.mxu0 0
      %1899 = vmatpush.bf16.msra.mxu0 0
      %1900 = vmatpush.bf16.msra.mxu0 %v1879
      %1901 = vmatpush.bf16.msra.mxu0 %v1878
      %1902 = vmatmul.bf16.gmra.mxu0 %v1883
      %v1903 = vpop.f32.mrf.mxu0
      %v1904 = vadd.f32 0.0, %v1903
      %v1905 = vpop.f32.mrf.mxu0
      %v1906 = vadd.f32 0.0, %v1905
      %1907 = vmatmul.bf16.gmra.mxu0 %v1886
      %v1908 = vpop.f32.mrf.mxu0
      %v1909 = vadd.f32 0.0, %v1908
      %v1910 = vpop.f32.mrf.mxu0
      %v1911 = vadd.f32 0.0, %v1910
      %1912 = vmatmul.bf16.gmra.mxu0 %v1889
      %v1913 = vpop.f32.mrf.mxu0
      %v1914 = vadd.f32 0.0, %v1913
      %v1915 = vpop.f32.mrf.mxu0
      %v1916 = vadd.f32 0.0, %v1915
      %1917 = vmatmul.bf16.gmra.mxu0 %v1892
      %v1918 = vpop.f32.mrf.mxu0
      %v1919 = vadd.f32 0.0, %v1918
      %v1920 = vpop.f32.mrf.mxu0
      %v1921 = vadd.f32 0.0, %v1920
      %1922 = vdwg.mxu0
      %v1923 = vadd.f32 %v489, %v1904
      %v1924 = vadd.f32 %v490, %v1906
      %v1925 = vadd.f32 %v491, %v1909
      %v1926 = vadd.f32 %v492, %v1911
      %v1927 = vadd.f32 %v493, %v1914
      %v1928 = vadd.f32 %v494, %v1916
      %v1929 = vadd.f32 %v495, %v1919
      %v1930 = vadd.f32 %v496, %v1921
      %v1931 = vperm.slane %v479, 3
      %v1932 = vadd.f32 %v1923, %v1931
      %v1933 = vadd.f32 %v1924, %v1931
      %v1934 = vadd.f32 %v1925, %v1931
      %v1935 = vadd.f32 %v1926, %v1931
      %v1936 = vadd.f32 %v1927, %v1931
      %v1937 = vadd.f32 %v1928, %v1931
      %v1938 = vadd.f32 %v1929, %v1931
      %v1939 = vadd.f32 %v1930, %v1931
      %v1940 = vsel %vm562, %v1932, 0.0
      %1941 = vadd.xlane.f32.xlu0 %v1940
      %v1942 = vpop.xlane.xlu0 %1941
      %v1943 = vsel %vm562, %v1933, 0.0
      %1944 = vadd.xlane.f32.xlu0 %v1943
      %v1945 = vpop.xlane.xlu0 %1944
      %v1946 = vsel %vm562, %v1934, 0.0
      %1947 = vadd.xlane.f32.xlu0 %v1946
      %v1948 = vpop.xlane.xlu0 %1947
      %v1949 = vsel %vm562, %v1935, 0.0
      %1950 = vadd.xlane.f32.xlu0 %v1949
      %v1951 = vpop.xlane.xlu0 %1950
      %v1952 = vsel %vm562, %v1936, 0.0
      %1953 = vadd.xlane.f32.xlu0 %v1952
      %v1954 = vpop.xlane.xlu0 %1953
      %v1955 = vsel %vm562, %v1937, 0.0
      %1956 = vadd.xlane.f32.xlu0 %v1955
      %v1957 = vpop.xlane.xlu0 %1956
      %v1958 = vsel %vm562, %v1938, 0.0
      %1959 = vadd.xlane.f32.xlu0 %v1958
      %v1960 = vpop.xlane.xlu0 %1959
      %v1961 = vsel %vm562, %v1939, 0.0
      %1962 = vadd.xlane.f32.xlu0 %v1961
      %v1963 = vpop.xlane.xlu0 %1962
      %v1964 = vmul.f32 %v1942, %v593
      %v1965 = vmul.f32 %v1945, %v593
      %v1966 = vmul.f32 %v1948, %v593
      %v1967 = vmul.f32 %v1951, %v593
      %v1968 = vmul.f32 %v1954, %v593
      %v1969 = vmul.f32 %v1957, %v593
      %v1970 = vmul.f32 %v1960, %v593
      %v1971 = vmul.f32 %v1963, %v593
      %v1972 = vsub.f32 %v1932, %v1964
      %v1973 = vsub.f32 %v1933, %v1965
      %v1974 = vsub.f32 %v1934, %v1966
      %v1975 = vsub.f32 %v1935, %v1967
      %v1976 = vsub.f32 %v1936, %v1968
      %v1977 = vsub.f32 %v1937, %v1969
      %v1978 = vsub.f32 %v1938, %v1970
      %v1979 = vsub.f32 %v1939, %v1971
      %v1980 = vmul.f32 %v1972, %v1972
      %v1981 = vmul.f32 %v1973, %v1973
      %v1982 = vmul.f32 %v1974, %v1974
      %v1983 = vmul.f32 %v1975, %v1975
      %v1984 = vmul.f32 %v1976, %v1976
      %v1985 = vmul.f32 %v1977, %v1977
      %v1986 = vmul.f32 %v1978, %v1978
      %v1987 = vmul.f32 %v1979, %v1979
      %v1988 = vsel %vm562, %v1980, 0.0
      %1989 = vadd.xlane.f32.xlu0 %v1988
      %v1990 = vpop.xlane.xlu0 %1989
      %v1991 = vsel %vm562, %v1981, 0.0
      %1992 = vadd.xlane.f32.xlu0 %v1991
      %v1993 = vpop.xlane.xlu0 %1992
      %v1994 = vsel %vm562, %v1982, 0.0
      %1995 = vadd.xlane.f32.xlu0 %v1994
      %v1996 = vpop.xlane.xlu0 %1995
      %v1997 = vsel %vm562, %v1983, 0.0
      %1998 = vadd.xlane.f32.xlu0 %v1997
      %v1999 = vpop.xlane.xlu0 %1998
      %v2000 = vsel %vm562, %v1984, 0.0
      %2001 = vadd.xlane.f32.xlu0 %v2000
      %v2002 = vpop.xlane.xlu0 %2001
      %v2003 = vsel %vm562, %v1985, 0.0
      %2004 = vadd.xlane.f32.xlu0 %v2003
      %v2005 = vpop.xlane.xlu0 %2004
      %v2006 = vsel %vm562, %v1986, 0.0
      %2007 = vadd.xlane.f32.xlu0 %v2006
      %v2008 = vpop.xlane.xlu0 %2007
      %v2009 = vsel %vm562, %v1987, 0.0
      %2010 = vadd.xlane.f32.xlu0 %v2009
      %v2011 = vpop.xlane.xlu0 %2010
      %v2012 = vmul.f32 %v1990, %v593
      %v2013 = vmul.f32 %v1993, %v593
      %v2014 = vmul.f32 %v1996, %v593
      %v2015 = vmul.f32 %v1999, %v593
      %v2016 = vmul.f32 %v2002, %v593
      %v2017 = vmul.f32 %v2005, %v593
      %v2018 = vmul.f32 %v2008, %v593
      %v2019 = vmul.f32 %v2011, %v593
      %v2020 = vadd.f32 %v2012, 1e-05
      %v2021 = vadd.f32 %v2013, 1e-05
      %v2022 = vadd.f32 %v2014, 1e-05
      %v2023 = vadd.f32 %v2015, 1e-05
      %v2024 = vadd.f32 %v2016, 1e-05
      %v2025 = vadd.f32 %v2017, 1e-05
      %v2026 = vadd.f32 %v2018, 1e-05
      %v2027 = vadd.f32 %v2019, 1e-05
      %v2028 = vrsqrt.pop %v2020
      %v2029 = vmul.f32 %v2028, %v2020
      %v2030 = vmul.f32 %v2029, %v2028
      %v2031 = vmul.f32 0.5, %v2030
      %v2032 = vsub.f32 1.5, %v2031
      %v2033 = vmul.f32 %v2028, %v2032
      %vm2034 = vweird.f32 %v2020
      %vm2035 = vweird.f32 %v2028
      %vm2036 = vmor %vm2034, %vm2035
      %v2037 = vsel %vm2036, %v2028, %v2033
      %v2038 = vrsqrt.pop %v2021
      %v2039 = vmul.f32 %v2038, %v2021
      %v2040 = vmul.f32 %v2039, %v2038
      %v2041 = vmul.f32 0.5, %v2040
      %v2042 = vsub.f32 1.5, %v2041
      %v2043 = vmul.f32 %v2038, %v2042
      %vm2044 = vweird.f32 %v2021
      %vm2045 = vweird.f32 %v2038
      %vm2046 = vmor %vm2044, %vm2045
      %v2047 = vsel %vm2046, %v2038, %v2043
      %v2048 = vrsqrt.pop %v2022
      %v2049 = vmul.f32 %v2048, %v2022
      %v2050 = vmul.f32 %v2049, %v2048
      %v2051 = vmul.f32 0.5, %v2050
      %v2052 = vsub.f32 1.5, %v2051
      %v2053 = vmul.f32 %v2048, %v2052
      %vm2054 = vweird.f32 %v2022
      %vm2055 = vweird.f32 %v2048
      %vm2056 = vmor %vm2054, %vm2055
      %v2057 = vsel %vm2056, %v2048, %v2053
      %v2058 = vrsqrt.pop %v2023
      %v2059 = vmul.f32 %v2058, %v2023
      %v2060 = vmul.f32 %v2059, %v2058
      %v2061 = vmul.f32 0.5, %v2060
      %v2062 = vsub.f32 1.5, %v2061
      %v2063 = vmul.f32 %v2058, %v2062
      %vm2064 = vweird.f32 %v2023
      %vm2065 = vweird.f32 %v2058
      %vm2066 = vmor %vm2064, %vm2065
      %v2067 = vsel %vm2066, %v2058, %v2063
      %v2068 = vrsqrt.pop %v2024
      %v2069 = vmul.f32 %v2068, %v2024
      %v2070 = vmul.f32 %v2069, %v2068
      %v2071 = vmul.f32 0.5, %v2070
      %v2072 = vsub.f32 1.5, %v2071
      %v2073 = vmul.f32 %v2068, %v2072
      %vm2074 = vweird.f32 %v2024
      %vm2075 = vweird.f32 %v2068
      %vm2076 = vmor %vm2074, %vm2075
      %v2077 = vsel %vm2076, %v2068, %v2073
      %v2078 = vrsqrt.pop %v2025
      %v2079 = vmul.f32 %v2078, %v2025
      %v2080 = vmul.f32 %v2079, %v2078
      %v2081 = vmul.f32 0.5, %v2080
      %v2082 = vsub.f32 1.5, %v2081
      %v2083 = vmul.f32 %v2078, %v2082
      %vm2084 = vweird.f32 %v2025
      %vm2085 = vweird.f32 %v2078
      %vm2086 = vmor %vm2084, %vm2085
      %v2087 = vsel %vm2086, %v2078, %v2083
      %v2088 = vrsqrt.pop %v2026
      %v2089 = vmul.f32 %v2088, %v2026
      %v2090 = vmul.f32 %v2089, %v2088
      %v2091 = vmul.f32 0.5, %v2090
      %v2092 = vsub.f32 1.5, %v2091
      %v2093 = vmul.f32 %v2088, %v2092
      %vm2094 = vweird.f32 %v2026
      %vm2095 = vweird.f32 %v2088
      %vm2096 = vmor %vm2094, %vm2095
      %v2097 = vsel %vm2096, %v2088, %v2093
      %v2098 = vrsqrt.pop %v2027
      %v2099 = vmul.f32 %v2098, %v2027
      %v2100 = vmul.f32 %v2099, %v2098
      %v2101 = vmul.f32 0.5, %v2100
      %v2102 = vsub.f32 1.5, %v2101
      %v2103 = vmul.f32 %v2098, %v2102
      %vm2104 = vweird.f32 %v2027
      %vm2105 = vweird.f32 %v2098
      %vm2106 = vmor %vm2104, %vm2105
      %v2107 = vsel %vm2106, %v2098, %v2103
      %v2108 = vmul.f32 %v1972, %v2037
      %v2109 = vmul.f32 %v1973, %v2047
      %v2110 = vmul.f32 %v1974, %v2057
      %v2111 = vmul.f32 %v1975, %v2067
      %v2112 = vmul.f32 %v1976, %v2077
      %v2113 = vmul.f32 %v1977, %v2087
      %v2114 = vmul.f32 %v1978, %v2097
      %v2115 = vmul.f32 %v1979, %v2107
      %v2116 = vperm.slane %v479, 4
      %v2117 = vmul.f32 %v2108, %v2116
      %v2118 = vmul.f32 %v2109, %v2116
      %v2119 = vmul.f32 %v2110, %v2116
      %v2120 = vmul.f32 %v2111, %v2116
      %v2121 = vmul.f32 %v2112, %v2116
      %v2122 = vmul.f32 %v2113, %v2116
      %v2123 = vmul.f32 %v2114, %v2116
      %v2124 = vmul.f32 %v2115, %v2116
      %v2125 = vperm.slane %v479, 5
      %v2126 = vadd.f32 %v2117, %v2125
      %v2127 = vadd.f32 %v2118, %v2125
      %v2128 = vadd.f32 %v2119, %v2125
      %v2129 = vadd.f32 %v2120, %v2125
      %v2130 = vadd.f32 %v2121, %v2125
      %v2131 = vadd.f32 %v2122, %v2125
      %v2132 = vadd.f32 %v2123, %v2125
      %v2133 = vadd.f32 %v2124, %v2125
      %v2134 = vpack.c.bf16 %v2127, %v2126
      %v2135 = vpack.c.bf16 %v2129, %v2128
      %v2136 = vpack.c.bf16 %v2131, %v2130
      %v2137 = vpack.c.bf16 %v2133, %v2132
      %v2138 = vperm.slane %v479, 6
      %v2143 = vunpack.c.l.b16 %v542
      %v2144 = vunpack.c.l.b16 %v543
      %v2145 = vunpack.c.l.b16 %v544
      %v2146 = vunpack.c.l.b16 %v545
      %v2147 = vpack.c.b16 %v2144, %v2143
      %v2148 = vpack.c.b16 %v2146, %v2145
      %v2152 = vsel %vm562, %v2134, 0
      %v2155 = vsel %vm562, %v2135, 0
      %v2158 = vsel %vm562, %v2136, 0
      %v2161 = vsel %vm562, %v2137, 0
      %2163 = vmatpush.bf16.msra.mxu0 0
      %2164 = vmatpush.bf16.msra.mxu0 0
      %2165 = vmatpush.bf16.msra.mxu0 0
      %2166 = vmatpush.bf16.msra.mxu0 0
      %2167 = vmatpush.bf16.msra.mxu0 0
      %2168 = vmatpush.bf16.msra.mxu0 0
      %2169 = vmatpush.bf16.msra.mxu0 %v2148
      %2170 = vmatpush.bf16.msra.mxu0 %v2147
      %2171 = vmatmul.bf16.gmra.mxu0 %v2152
      %v2172 = vpop.f32.mrf.mxu0
      %v2173 = vadd.f32 %v2138, %v2172
      %v2174 = vpop.f32.mrf.mxu0
      %v2175 = vadd.f32 %v2138, %v2174
      %2176 = vmatmul.bf16.gmra.mxu0 %v2155
      %v2177 = vpop.f32.mrf.mxu0
      %v2178 = vadd.f32 %v2138, %v2177
      %v2179 = vpop.f32.mrf.mxu0
      %v2180 = vadd.f32 %v2138, %v2179
      %2181 = vmatmul.bf16.gmra.mxu0 %v2158
      %v2182 = vpop.f32.mrf.mxu0
      %v2183 = vadd.f32 %v2138, %v2182
      %v2184 = vpop.f32.mrf.mxu0
      %v2185 = vadd.f32 %v2138, %v2184
      %2186 = vmatmul.bf16.gmra.mxu0 %v2161
      %v2187 = vpop.f32.mrf.mxu0
      %v2188 = vadd.f32 %v2138, %v2187
      %v2189 = vpop.f32.mrf.mxu0
      %v2190 = vadd.f32 %v2138, %v2189
      %2191 = vdwg.mxu0
      %v2192 = vmul.f32 %v2173, %v2173
      %v2193 = vmul.f32 %v2175, %v2175
      %v2194 = vmul.f32 %v2178, %v2178
      %v2195 = vmul.f32 %v2180, %v2180
      %v2196 = vmul.f32 %v2183, %v2183
      %v2197 = vmul.f32 %v2185, %v2185
      %v2198 = vmul.f32 %v2188, %v2188
      %v2199 = vmul.f32 %v2190, %v2190
      %v2200 = vmul.f32 %v2173, %v2192
      %v2201 = vmul.f32 %v2175, %v2193
      %v2202 = vmul.f32 %v2178, %v2194
      %v2203 = vmul.f32 %v2180, %v2195
      %v2204 = vmul.f32 %v2183, %v2196
      %v2205 = vmul.f32 %v2185, %v2197
      %v2206 = vmul.f32 %v2188, %v2198
      %v2207 = vmul.f32 %v2190, %v2199
      %v2208 = vmul.f32 %v2200, 0.044715
      %v2209 = vmul.f32 %v2201, 0.044715
      %v2210 = vmul.f32 %v2202, 0.044715
      %v2211 = vmul.f32 %v2203, 0.044715
      %v2212 = vmul.f32 %v2204, 0.044715
      %v2213 = vmul.f32 %v2205, 0.044715
      %v2214 = vmul.f32 %v2206, 0.044715
      %v2215 = vmul.f32 %v2207, 0.044715
      %v2216 = vadd.f32 %v2173, %v2208
      %v2217 = vadd.f32 %v2175, %v2209
      %v2218 = vadd.f32 %v2178, %v2210
      %v2219 = vadd.f32 %v2180, %v2211
      %v2220 = vadd.f32 %v2183, %v2212
      %v2221 = vadd.f32 %v2185, %v2213
      %v2222 = vadd.f32 %v2188, %v2214
      %v2223 = vadd.f32 %v2190, %v2215
      %v2224 = vmul.f32 %v2216, 0.7978846
      %v2225 = vmul.f32 %v2217, 0.7978846
      %v2226 = vmul.f32 %v2218, 0.7978846
      %v2227 = vmul.f32 %v2219, 0.7978846
      %v2228 = vmul.f32 %v2220, 0.7978846
      %v2229 = vmul.f32 %v2221, 0.7978846
      %v2230 = vmul.f32 %v2222, 0.7978846
      %v2231 = vmul.f32 %v2223, 0.7978846
      %v2232 = vtanh.pop %v2224
      %v2233 = vtanh.pop %v2225
      %v2234 = vtanh.pop %v2226
      %v2235 = vtanh.pop %v2227
      %v2236 = vtanh.pop %v2228
      %v2237 = vtanh.pop %v2229
      %v2238 = vtanh.pop %v2230
      %v2239 = vtanh.pop %v2231
      %v2240 = vadd.f32 %v2232, 1.0
      %v2241 = vadd.f32 %v2233, 1.0
      %v2242 = vadd.f32 %v2234, 1.0
      %v2243 = vadd.f32 %v2235, 1.0
      %v2244 = vadd.f32 %v2236, 1.0
      %v2245 = vadd.f32 %v2237, 1.0
      %v2246 = vadd.f32 %v2238, 1.0
      %v2247 = vadd.f32 %v2239, 1.0
      %v2248 = vmul.f32 %v2240, 0.5
      %v2249 = vmul.f32 %v2241, 0.5
      %v2250 = vmul.f32 %v2242, 0.5
      %v2251 = vmul.f32 %v2243, 0.5
      %v2252 = vmul.f32 %v2244, 0.5
      %v2253 = vmul.f32 %v2245, 0.5
      %v2254 = vmul.f32 %v2246, 0.5
      %v2255 = vmul.f32 %v2247, 0.5
      %v2256 = vmul.f32 %v2173, %v2248
      %v2257 = vmul.f32 %v2175, %v2249
      %v2258 = vmul.f32 %v2178, %v2250
      %v2259 = vmul.f32 %v2180, %v2251
      %v2260 = vmul.f32 %v2183, %v2252
      %v2261 = vmul.f32 %v2185, %v2253
      %v2262 = vmul.f32 %v2188, %v2254
      %v2263 = vmul.f32 %v2190, %v2255
      %v2264 = vpack.c.bf16 %v2257, %v2256
      %v2265 = vpack.c.bf16 %v2259, %v2258
      %v2266 = vpack.c.bf16 %v2261, %v2260
      %v2267 = vpack.c.bf16 %v2263, %v2262
      %v2284 = vunpack.c.l.b16 %v546
      %v2285 = vunpack.c.l.b16 %v547
      %v2286 = vunpack.c.l.b16 %v548
      %v2287 = vunpack.c.l.b16 %v549
      %v2288 = vunpack.c.l.b16 %v550
      %v2289 = vunpack.c.l.b16 %v551
      %v2290 = vunpack.c.l.b16 %v552
      %v2291 = vunpack.c.l.b16 %v553
      %v2292 = vunpack.c.l.b16 %v554
      %v2293 = vunpack.c.l.b16 %v555
      %v2294 = vunpack.c.l.b16 %v556
      %v2295 = vunpack.c.l.b16 %v557
      %v2296 = vunpack.c.l.b16 %v558
      %v2297 = vunpack.c.l.b16 %v559
      %v2298 = vunpack.c.l.b16 %v560
      %v2299 = vunpack.c.l.b16 %v561
      %v2300 = vpack.c.b16 %v2285, %v2284
      %v2301 = vpack.c.b16 %v2287, %v2286
      %v2302 = vpack.c.b16 %v2289, %v2288
      %v2303 = vpack.c.b16 %v2291, %v2290
      %v2304 = vpack.c.b16 %v2293, %v2292
      %v2305 = vpack.c.b16 %v2295, %v2294
      %v2306 = vpack.c.b16 %v2297, %v2296
      %v2307 = vpack.c.b16 %v2299, %v2298
      %2316 = vmatpush.bf16.msra.mxu0 %v2307
      %2317 = vmatpush.bf16.msra.mxu0 %v2306
      %2318 = vmatpush.bf16.msra.mxu0 %v2305
      %2319 = vmatpush.bf16.msra.mxu0 %v2304
      %2320 = vmatpush.bf16.msra.mxu0 %v2303
      %2321 = vmatpush.bf16.msra.mxu0 %v2302
      %2322 = vmatpush.bf16.msra.mxu0 %v2301
      %2323 = vmatpush.bf16.msra.mxu0 %v2300
      %2324 = vmatmul.bf16.gmra.mxu0 %v2264
      %v2325 = vpop.f32.mrf.mxu0
      %v2326 = vadd.f32 0.0, %v2325
      %v2327 = vpop.f32.mrf.mxu0
      %v2328 = vadd.f32 0.0, %v2327
      %2329 = vmatmul.bf16.gmra.mxu0 %v2265
      %v2330 = vpop.f32.mrf.mxu0
      %v2331 = vadd.f32 0.0, %v2330
      %v2332 = vpop.f32.mrf.mxu0
      %v2333 = vadd.f32 0.0, %v2332
      %2334 = vmatmul.bf16.gmra.mxu0 %v2266
      %v2335 = vpop.f32.mrf.mxu0
      %v2336 = vadd.f32 0.0, %v2335
      %v2337 = vpop.f32.mrf.mxu0
      %v2338 = vadd.f32 0.0, %v2337
      %2339 = vmatmul.bf16.gmra.mxu0 %v2267
      %v2340 = vpop.f32.mrf.mxu0
      %v2341 = vadd.f32 0.0, %v2340
      %v2342 = vpop.f32.mrf.mxu0
      %v2343 = vadd.f32 0.0, %v2342
      %2344 = vdwg.mxu0
      %v2345 = vadd.f32 %v1932, %v2326
      %v2346 = vadd.f32 %v1933, %v2328
      %v2347 = vadd.f32 %v1934, %v2331
      %v2348 = vadd.f32 %v1935, %v2333
      %v2349 = vadd.f32 %v1936, %v2336
      %v2350 = vadd.f32 %v1937, %v2338
      %v2351 = vadd.f32 %v1938, %v2341
      %v2352 = vadd.f32 %v1939, %v2343
      %v2353 = vperm.slane %v479, 7
      %v2354 = vadd.f32 %v2345, %v2353
      %v2355 = vadd.f32 %v2346, %v2353
      %v2356 = vadd.f32 %v2347, %v2353
      %v2357 = vadd.f32 %v2348, %v2353
      %v2358 = vadd.f32 %v2349, %v2353
      %v2359 = vadd.f32 %v2350, %v2353
      %v2360 = vadd.f32 %v2351, %v2353
      %v2361 = vadd.f32 %v2352, %v2353
      %v2362 = vsel %vm562, %v2354, 0.0
      %2363 = vadd.xlane.f32.xlu0 %v2362
      %v2364 = vpop.xlane.xlu0 %2363
      %v2365 = vsel %vm562, %v2355, 0.0
      %2366 = vadd.xlane.f32.xlu0 %v2365
      %v2367 = vpop.xlane.xlu0 %2366
      %v2368 = vsel %vm562, %v2356, 0.0
      %2369 = vadd.xlane.f32.xlu0 %v2368
      %v2370 = vpop.xlane.xlu0 %2369
      %v2371 = vsel %vm562, %v2357, 0.0
      %2372 = vadd.xlane.f32.xlu0 %v2371
      %v2373 = vpop.xlane.xlu0 %2372
      %v2374 = vsel %vm562, %v2358, 0.0
      %2375 = vadd.xlane.f32.xlu0 %v2374
      %v2376 = vpop.xlane.xlu0 %2375
      %v2377 = vsel %vm562, %v2359, 0.0
      %2378 = vadd.xlane.f32.xlu0 %v2377
      %v2379 = vpop.xlane.xlu0 %2378
      %v2380 = vsel %vm562, %v2360, 0.0
      %2381 = vadd.xlane.f32.xlu0 %v2380
      %v2382 = vpop.xlane.xlu0 %2381
      %v2383 = vsel %vm562, %v2361, 0.0
      %2384 = vadd.xlane.f32.xlu0 %v2383
      %v2385 = vpop.xlane.xlu0 %2384
      %v2386 = vmul.f32 %v2364, %v593
      %v2387 = vmul.f32 %v2367, %v593
      %v2388 = vmul.f32 %v2370, %v593
      %v2389 = vmul.f32 %v2373, %v593
      %v2390 = vmul.f32 %v2376, %v593
      %v2391 = vmul.f32 %v2379, %v593
      %v2392 = vmul.f32 %v2382, %v593
      %v2393 = vmul.f32 %v2385, %v593
      %v2394 = vsub.f32 %v2354, %v2386
      %v2395 = vsub.f32 %v2355, %v2387
      %v2396 = vsub.f32 %v2356, %v2388
      %v2397 = vsub.f32 %v2357, %v2389
      %v2398 = vsub.f32 %v2358, %v2390
      %v2399 = vsub.f32 %v2359, %v2391
      %v2400 = vsub.f32 %v2360, %v2392
      %v2401 = vsub.f32 %v2361, %v2393
      %v2402 = vmul.f32 %v2394, %v2394
      %v2403 = vmul.f32 %v2395, %v2395
      %v2404 = vmul.f32 %v2396, %v2396
      %v2405 = vmul.f32 %v2397, %v2397
      %v2406 = vmul.f32 %v2398, %v2398
      %v2407 = vmul.f32 %v2399, %v2399
      %v2408 = vmul.f32 %v2400, %v2400
      %v2409 = vmul.f32 %v2401, %v2401
      %v2410 = vsel %vm562, %v2402, 0.0
      %2411 = vadd.xlane.f32.xlu0 %v2410
      %v2412 = vpop.xlane.xlu0 %2411
      %v2413 = vsel %vm562, %v2403, 0.0
      %2414 = vadd.xlane.f32.xlu0 %v2413
      %v2415 = vpop.xlane.xlu0 %2414
      %v2416 = vsel %vm562, %v2404, 0.0
      %2417 = vadd.xlane.f32.xlu0 %v2416
      %v2418 = vpop.xlane.xlu0 %2417
      %v2419 = vsel %vm562, %v2405, 0.0
      %2420 = vadd.xlane.f32.xlu0 %v2419
      %v2421 = vpop.xlane.xlu0 %2420
      %v2422 = vsel %vm562, %v2406, 0.0
      %2423 = vadd.xlane.f32.xlu0 %v2422
      %v2424 = vpop.xlane.xlu0 %2423
      %v2425 = vsel %vm562, %v2407, 0.0
      %2426 = vadd.xlane.f32.xlu0 %v2425
      %v2427 = vpop.xlane.xlu0 %2426
      %v2428 = vsel %vm562, %v2408, 0.0
      %2429 = vadd.xlane.f32.xlu0 %v2428
      %v2430 = vpop.xlane.xlu0 %2429
      %v2431 = vsel %vm562, %v2409, 0.0
      %2432 = vadd.xlane.f32.xlu0 %v2431
      %v2433 = vpop.xlane.xlu0 %2432
      %v2434 = vmul.f32 %v2412, %v593
      %v2435 = vmul.f32 %v2415, %v593
      %v2436 = vmul.f32 %v2418, %v593
      %v2437 = vmul.f32 %v2421, %v593
      %v2438 = vmul.f32 %v2424, %v593
      %v2439 = vmul.f32 %v2427, %v593
      %v2440 = vmul.f32 %v2430, %v593
      %v2441 = vmul.f32 %v2433, %v593
      %v2442 = vadd.f32 %v2434, 1e-05
      %v2443 = vadd.f32 %v2435, 1e-05
      %v2444 = vadd.f32 %v2436, 1e-05
      %v2445 = vadd.f32 %v2437, 1e-05
      %v2446 = vadd.f32 %v2438, 1e-05
      %v2447 = vadd.f32 %v2439, 1e-05
      %v2448 = vadd.f32 %v2440, 1e-05
      %v2449 = vadd.f32 %v2441, 1e-05
      %v2450 = vrsqrt.pop %v2442
      %v2451 = vmul.f32 %v2450, %v2442
      %v2452 = vmul.f32 %v2451, %v2450
      %v2453 = vmul.f32 0.5, %v2452
      %v2454 = vsub.f32 1.5, %v2453
      %v2455 = vmul.f32 %v2450, %v2454
      %vm2456 = vweird.f32 %v2442
      %vm2457 = vweird.f32 %v2450
      %vm2458 = vmor %vm2456, %vm2457
      %v2459 = vsel %vm2458, %v2450, %v2455
      %v2460 = vrsqrt.pop %v2443
      %v2461 = vmul.f32 %v2460, %v2443
      %v2462 = vmul.f32 %v2461, %v2460
      %v2463 = vmul.f32 0.5, %v2462
      %v2464 = vsub.f32 1.5, %v2463
      %v2465 = vmul.f32 %v2460, %v2464
      %vm2466 = vweird.f32 %v2443
      %vm2467 = vweird.f32 %v2460
      %vm2468 = vmor %vm2466, %vm2467
      %v2469 = vsel %vm2468, %v2460, %v2465
      %v2470 = vrsqrt.pop %v2444
      %v2471 = vmul.f32 %v2470, %v2444
      %v2472 = vmul.f32 %v2471, %v2470
      %v2473 = vmul.f32 0.5, %v2472
      %v2474 = vsub.f32 1.5, %v2473
      %v2475 = vmul.f32 %v2470, %v2474
      %vm2476 = vweird.f32 %v2444
      %vm2477 = vweird.f32 %v2470
      %vm2478 = vmor %vm2476, %vm2477
      %v2479 = vsel %vm2478, %v2470, %v2475
      %v2480 = vrsqrt.pop %v2445
      %v2481 = vmul.f32 %v2480, %v2445
      %v2482 = vmul.f32 %v2481, %v2480
      %v2483 = vmul.f32 0.5, %v2482
      %v2484 = vsub.f32 1.5, %v2483
      %v2485 = vmul.f32 %v2480, %v2484
      %vm2486 = vweird.f32 %v2445
      %vm2487 = vweird.f32 %v2480
      %vm2488 = vmor %vm2486, %vm2487
      %v2489 = vsel %vm2488, %v2480, %v2485
      %v2490 = vrsqrt.pop %v2446
      %v2491 = vmul.f32 %v2490, %v2446
      %v2492 = vmul.f32 %v2491, %v2490
      %v2493 = vmul.f32 0.5, %v2492
      %v2494 = vsub.f32 1.5, %v2493
      %v2495 = vmul.f32 %v2490, %v2494
      %vm2496 = vweird.f32 %v2446
      %vm2497 = vweird.f32 %v2490
      %vm2498 = vmor %vm2496, %vm2497
      %v2499 = vsel %vm2498, %v2490, %v2495
      %v2500 = vrsqrt.pop %v2447
      %v2501 = vmul.f32 %v2500, %v2447
      %v2502 = vmul.f32 %v2501, %v2500
      %v2503 = vmul.f32 0.5, %v2502
      %v2504 = vsub.f32 1.5, %v2503
      %v2505 = vmul.f32 %v2500, %v2504
      %vm2506 = vweird.f32 %v2447
      %vm2507 = vweird.f32 %v2500
      %vm2508 = vmor %vm2506, %vm2507
      %v2509 = vsel %vm2508, %v2500, %v2505
      %v2510 = vrsqrt.pop %v2448
      %v2511 = vmul.f32 %v2510, %v2448
      %v2512 = vmul.f32 %v2511, %v2510
      %v2513 = vmul.f32 0.5, %v2512
      %v2514 = vsub.f32 1.5, %v2513
      %v2515 = vmul.f32 %v2510, %v2514
      %vm2516 = vweird.f32 %v2448
      %vm2517 = vweird.f32 %v2510
      %vm2518 = vmor %vm2516, %vm2517
      %v2519 = vsel %vm2518, %v2510, %v2515
      %v2520 = vrsqrt.pop %v2449
      %v2521 = vmul.f32 %v2520, %v2449
      %v2522 = vmul.f32 %v2521, %v2520
      %v2523 = vmul.f32 0.5, %v2522
      %v2524 = vsub.f32 1.5, %v2523
      %v2525 = vmul.f32 %v2520, %v2524
      %vm2526 = vweird.f32 %v2449
      %vm2527 = vweird.f32 %v2520
      %vm2528 = vmor %vm2526, %vm2527
      %v2529 = vsel %vm2528, %v2520, %v2525
      %v2530 = vmul.f32 %v2394, %v2459
      %v2531 = vmul.f32 %v2395, %v2469
      %v2532 = vmul.f32 %v2396, %v2479
      %v2533 = vmul.f32 %v2397, %v2489
      %v2534 = vmul.f32 %v2398, %v2499
      %v2535 = vmul.f32 %v2399, %v2509
      %v2536 = vmul.f32 %v2400, %v2519
      %v2537 = vmul.f32 %v2401, %v2529
      %v2538 = vperm.slane %v480, 0
      %v2539 = vmul.f32 %v2530, %v2538
      %v2540 = vmul.f32 %v2531, %v2538
      %v2541 = vmul.f32 %v2532, %v2538
      %v2542 = vmul.f32 %v2533, %v2538
      %v2543 = vmul.f32 %v2534, %v2538
      %v2544 = vmul.f32 %v2535, %v2538
      %v2545 = vmul.f32 %v2536, %v2538
      %v2546 = vmul.f32 %v2537, %v2538
      %v2547 = vperm.slane %v480, 1
      %v2548 = vadd.f32 %v2539, %v2547
      %v2549 = vadd.f32 %v2540, %v2547
      %v2550 = vadd.f32 %v2541, %v2547
      %v2551 = vadd.f32 %v2542, %v2547
      %v2552 = vadd.f32 %v2543, %v2547
      %v2553 = vadd.f32 %v2544, %v2547
      %v2554 = vadd.f32 %v2545, %v2547
      %v2555 = vadd.f32 %v2546, %v2547
      %p2556 = scmp.eq.s32.totalorder %s25, 0
      // Predicated region
      $region77: #{forward.3} parent=75 // pred_check
        %p2557 = pneg %p2556
      $region78: #{forward.3} parent=75 // pred_check_branch
        %2559 = sbr.rel (%p2557) target = $region80
      $region79: #{forward.3} parent=75 // pred_region
        %v2560 = vld [vmem:[%s11] sm:$0xf]
        %v2561 = vld [vmem:[%s11 + $0x4] sm:$0xf]
        %v2562 = vld [vmem:[%s11 + $0x8] sm:$0xf]
        %v2563 = vld [vmem:[%s11 + $0xc] sm:$0xf]
        %v2564 = vpack.c.bf16 %v2549, %v2548
        %v2565 = vpack.c.bf16 %v2551, %v2550
        %v2566 = vpack.c.bf16 %v2553, %v2552
        %v2567 = vpack.c.bf16 %v2555, %v2554
        %v2568 = vperm.slane %v480, 2
        %v2573 = vunpack.c.l.b16 %v2560
        %v2574 = vunpack.c.l.b16 %v2561
        %v2575 = vunpack.c.l.b16 %v2562
        %v2576 = vunpack.c.l.b16 %v2563
        %v2577 = vpack.c.b16 %v2574, %v2573
        %v2578 = vpack.c.b16 %v2576, %v2575
        %v2582 = vsel %vm562, %v2564, 0
        %v2585 = vsel %vm562, %v2565, 0
        %v2588 = vsel %vm562, %v2566, 0
        %v2591 = vsel %vm562, %v2567, 0
        %2593 = vmatpush.bf16.msra.mxu0 0
        %2594 = vmatpush.bf16.msra.mxu0 0
        %2595 = vmatpush.bf16.msra.mxu0 0
        %2596 = vmatpush.bf16.msra.mxu0 0
        %2597 = vmatpush.bf16.msra.mxu0 0
        %2598 = vmatpush.bf16.msra.mxu0 0
        %2599 = vmatpush.bf16.msra.mxu0 %v2578
        %2600 = vmatpush.bf16.msra.mxu0 %v2577
        %2601 = vmatmul.bf16.gmra.mxu0 %v2582
        %v2602 = vpop.f32.mrf.mxu0
        %v2603 = vadd.f32 %v2568, %v2602
        %v2604 = vpop.f32.mrf.mxu0
        %v2605 = vadd.f32 %v2568, %v2604
        %2606 = vmatmul.bf16.gmra.mxu0 %v2585
        %v2607 = vpop.f32.mrf.mxu0
        %v2608 = vadd.f32 %v2568, %v2607
        %v2609 = vpop.f32.mrf.mxu0
        %v2610 = vadd.f32 %v2568, %v2609
        %2611 = vmatmul.bf16.gmra.mxu0 %v2588
        %v2612 = vpop.f32.mrf.mxu0
        %v2613 = vadd.f32 %v2568, %v2612
        %v2614 = vpop.f32.mrf.mxu0
        %v2615 = vadd.f32 %v2568, %v2614
        %2616 = vmatmul.bf16.gmra.mxu0 %v2591
        %v2617 = vpop.f32.mrf.mxu0
        %v2618 = vadd.f32 %v2568, %v2617
        %v2619 = vpop.f32.mrf.mxu0
        %v2620 = vadd.f32 %v2568, %v2619
        %2621 = vdwg.mxu0
        %2622 = vmax.xlane.f32.xlu0 %v2603
        %v2623 = vpop.xlane.xlu0 %2622
        %2624 = vmax.xlane.f32.xlu0 %v2605
        %v2625 = vpop.xlane.xlu0 %2624
        %2626 = vmax.xlane.f32.xlu0 %v2608
        %v2627 = vpop.xlane.xlu0 %2626
        %2628 = vmax.xlane.f32.xlu0 %v2610
        %v2629 = vpop.xlane.xlu0 %2628
        %2630 = vmax.xlane.f32.xlu0 %v2613
        %v2631 = vpop.xlane.xlu0 %2630
        %2632 = vmax.xlane.f32.xlu0 %v2615
        %v2633 = vpop.xlane.xlu0 %2632
        %2634 = vmax.xlane.f32.xlu0 %v2618
        %v2635 = vpop.xlane.xlu0 %2634
        %2636 = vmax.xlane.f32.xlu0 %v2620
        %v2637 = vpop.xlane.xlu0 %2636
        %v2638 = vsub.f32 %v2603, %v2623
        %v2639 = vsub.f32 %v2605, %v2625
        %v2640 = vsub.f32 %v2608, %v2627
        %v2641 = vsub.f32 %v2610, %v2629
        %v2642 = vsub.f32 %v2613, %v2631
        %v2643 = vsub.f32 %v2615, %v2633
        %v2644 = vsub.f32 %v2618, %v2635
        %v2645 = vsub.f32 %v2620, %v2637
        %v2646 = vmul.f32 %v2638, 1.442695
        %v2647 = vpow.pop %v2646
        %v2648 = vmul.f32 %v2639, 1.442695
        %v2649 = vpow.pop %v2648
        %v2650 = vmul.f32 %v2640, 1.442695
        %v2651 = vpow.pop %v2650
        %v2652 = vmul.f32 %v2641, 1.442695
        %v2653 = vpow.pop %v2652
        %v2654 = vmul.f32 %v2642, 1.442695
        %v2655 = vpow.pop %v2654
        %v2656 = vmul.f32 %v2643, 1.442695
        %v2657 = vpow.pop %v2656
        %v2658 = vmul.f32 %v2644, 1.442695
        %v2659 = vpow.pop %v2658
        %v2660 = vmul.f32 %v2645, 1.442695
        %v2661 = vpow.pop %v2660
        %2662 = vadd.xlane.f32.xlu0 %v2647
        %v2663 = vpop.xlane.xlu0 %2662
        %2664 = vadd.xlane.f32.xlu0 %v2649
        %v2665 = vpop.xlane.xlu0 %2664
        %2666 = vadd.xlane.f32.xlu0 %v2651
        %v2667 = vpop.xlane.xlu0 %2666
        %2668 = vadd.xlane.f32.xlu0 %v2653
        %v2669 = vpop.xlane.xlu0 %2668
        %2670 = vadd.xlane.f32.xlu0 %v2655
        %v2671 = vpop.xlane.xlu0 %2670
        %2672 = vadd.xlane.f32.xlu0 %v2657
        %v2673 = vpop.xlane.xlu0 %2672
        %2674 = vadd.xlane.f32.xlu0 %v2659
        %v2675 = vpop.xlane.xlu0 %2674
        %2676 = vadd.xlane.f32.xlu0 %v2661
        %v2677 = vpop.xlane.xlu0 %2676
        %v2678 = vlog2.pop %v2663
        %v2679 = vmul.f32 %v2678, 0.6931472
        %v2680 = vlog2.pop %v2665
        %v2681 = vmul.f32 %v2680, 0.6931472
        %v2682 = vlog2.pop %v2667
        %v2683 = vmul.f32 %v2682, 0.6931472
        %v2684 = vlog2.pop %v2669
        %v2685 = vmul.f32 %v2684, 0.6931472
        %v2686 = vlog2.pop %v2671
        %v2687 = vmul.f32 %v2686, 0.6931472
        %v2688 = vlog2.pop %v2673
        %v2689 = vmul.f32 %v2688, 0.6931472
        %v2690 = vlog2.pop %v2675
        %v2691 = vmul.f32 %v2690, 0.6931472
        %v2692 = vlog2.pop %v2677
        %v2693 = vmul.f32 %v2692, 0.6931472
        %v2694 = vadd.f32 %v2679, %v2623
        %v2695 = vadd.f32 %v2681, %v2625
        %v2696 = vadd.f32 %v2683, %v2627
        %v2697 = vadd.f32 %v2685, %v2629
        %v2698 = vadd.f32 %v2687, %v2631
        %v2699 = vadd.f32 %v2689, %v2633
        %v2700 = vadd.f32 %v2691, %v2635
        %v2701 = vadd.f32 %v2693, %v2637
        %v2702 = vsub.f32 %v2694, %v2603
        %v2703 = vsub.f32 %v2695, %v2605
        %v2704 = vsub.f32 %v2696, %v2608
        %v2705 = vsub.f32 %v2697, %v2610
        %v2706 = vsub.f32 %v2698, %v2613
        %v2707 = vsub.f32 %v2699, %v2615
        %v2708 = vsub.f32 %v2700, %v2618
        %v2709 = vsub.f32 %v2701, %v2620
        %v2710 = vld [vmem:[%s3] sm:$0xff]
        %v2711 = vld [vmem:[%s3 + $0x8] sm:$0xff]
        %v2712 = vld [vmem:[%s3 + $0x10] sm:$0xff]
        %v2713 = vld [vmem:[%s3 + $0x18] sm:$0xff]
        %v2714 = vld [vmem:[%s3 + $0x20] sm:$0xff]
        %v2715 = vld [vmem:[%s3 + $0x28] sm:$0xff]
        %v2716 = vld [vmem:[%s3 + $0x30] sm:$0xff]
        %v2717 = vld [vmem:[%s3 + $0x38] sm:$0xff]
        %v2718 = vmul.f32 %v2702, %v2710
        %v2719 = vmul.f32 %v2703, %v2711
        %v2720 = vmul.f32 %v2704, %v2712
        %v2721 = vmul.f32 %v2705, %v2713
        %v2722 = vmul.f32 %v2706, %v2714
        %v2723 = vmul.f32 %v2707, %v2715
        %v2724 = vmul.f32 %v2708, %v2716
        %v2725 = vmul.f32 %v2709, %v2717
        %v2726 = vadd.f32 %v2718, %v2719
        %v2727 = vadd.f32 %v2726, %v2720
        %v2728 = vadd.f32 %v2727, %v2721
        %v2729 = vadd.f32 %v2728, %v2722
        %v2730 = vadd.f32 %v2729, %v2723
        %v2731 = vadd.f32 %v2730, %v2724
        %v2732 = vadd.f32 %v2731, %v2725
        %v2733 = vrot.slane %v2732, 4
        %v2734 = vadd.f32 %v2732, %v2733
        %v2735 = vrot.slane %v2734, 2
        %v2736 = vadd.f32 %v2734, %v2735
        %v2737 = vrot.slane %v2736, 1
        %v2738 = vadd.f32 %v2736, %v2737
        %2739 = vst [vmem:[%s477] sm:$0x1] %v2738
      $region80: #{forward.3} parent=75 // pred_fallthru
        _
      %p2740 = scmp.eq.s32.totalorder %s25, 1
      // Predicated region
      $region81: #{forward.3} parent=75 // pred_check
        %p2741 = pneg %p2740
      $region82: #{forward.3} parent=75 // pred_check_branch
        %2743 = sbr.rel (%p2741) target = $region84
      $region83: #{forward.3} parent=75 // pred_region
        %v2744 = vld [vmem:[%s4] sm:$0xf]
        %v2745 = vpack.c.bf16 %v2744, %v2744
        %v2746 = vpack.c.bf16 %v2549, %v2548
        %v2747 = vpack.c.bf16 %v2551, %v2550
        %v2748 = vpack.c.bf16 %v2553, %v2552
        %v2749 = vpack.c.bf16 %v2555, %v2554
        %v2751 = vsel %vm908, %v2745, 0
        %2753 = vmatpush.bf16.msra.mxu0 0
        %2754 = vmatpush.bf16.msra.mxu0 0
        %2755 = vmatpush.bf16.msra.mxu0 0
        %2756 = vmatpush.bf16.msra.mxu0 0
        %2757 = vmatpush.bf16.msra.mxu0 %v2749
        %2758 = vmatpush.bf16.msra.mxu0 %v2748
        %2759 = vmatpush.bf16.msra.mxu0 %v2747
        %2760 = vmatpush.bf16.msra.mxu0 %v2746
        %2761 = vmatmul.bf16.gmra.mxu0 %v2751
        %v2762 = vpop.f32.mrf.mxu0
        %v2763 = vadd.f32 0.0, %v2762
        %v2764 = vpop.f32.mrf.mxu0
        %2765 = vdwg.mxu0
        %v2766 = vld [vmem:[%s12] sm:$0xf]
        %v2767 = vld [vmem:[%s12 + $0x4] sm:$0xf]
        %v2768 = vld [vmem:[%s12 + $0x8] sm:$0xf]
        %v2769 = vld [vmem:[%s12 + $0xc] sm:$0xf]
        %v2770 = vpack.c.bf16 %v2763, %v2763
        %v2771 = vperm.slane %v480, 3
        %v2776 = vunpack.c.l.b16 %v2766
        %v2777 = vunpack.c.l.b16 %v2767
        %v2778 = vunpack.c.l.b16 %v2768
        %v2779 = vunpack.c.l.b16 %v2769
        %v2780 = vpack.c.b16 %v2777, %v2776
        %v2781 = vpack.c.b16 %v2779, %v2778
        %v2785 = vsel %vm562, %v2770, 0
        %2787 = vmatpush.bf16.msra.mxu0 0
        %2788 = vmatpush.bf16.msra.mxu0 0
        %2789 = vmatpush.bf16.msra.mxu0 0
        %2790 = vmatpush.bf16.msra.mxu0 0
        %2791 = vmatpush.bf16.msra.mxu0 0
        %2792 = vmatpush.bf16.msra.mxu0 0
        %2793 = vmatpush.bf16.msra.mxu0 %v2781
        %2794 = vmatpush.bf16.msra.mxu0 %v2780
        %2795 = vmatmul.bf16.gmra.mxu0 %v2785
        %v2796 = vpop.f32.mrf.mxu0
        %v2797 = vadd.f32 %v2771, %v2796
        %v2798 = vpop.f32.mrf.mxu0
        %2799 = vdwg.mxu0
        %v2800 = vmax.f32 %v2797, 0.0
        %v2801 = vld [vmem:[%s13] sm:$0xf]
        %v2802 = vld [vmem:[%s13 + $0x4] sm:$0xf]
        %v2803 = vld [vmem:[%s13 + $0x8] sm:$0xf]
        %v2804 = vld [vmem:[%s13 + $0xc] sm:$0xf]
        %v2805 = vpack.c.bf16 %v2800, %v2800
        %v2806 = vperm.slane %v480, 4
        %v2811 = vunpack.c.l.b16 %v2801
        %v2812 = vunpack.c.l.b16 %v2802
        %v2813 = vunpack.c.l.b16 %v2803
        %v2814 = vunpack.c.l.b16 %v2804
        %v2815 = vpack.c.b16 %v2812, %v2811
        %v2816 = vpack.c.b16 %v2814, %v2813
        %v2820 = vsel %vm562, %v2805, 0
        %2822 = vmatpush.bf16.msra.mxu0 0
        %2823 = vmatpush.bf16.msra.mxu0 0
        %2824 = vmatpush.bf16.msra.mxu0 0
        %2825 = vmatpush.bf16.msra.mxu0 0
        %2826 = vmatpush.bf16.msra.mxu0 0
        %2827 = vmatpush.bf16.msra.mxu0 0
        %2828 = vmatpush.bf16.msra.mxu0 %v2816
        %2829 = vmatpush.bf16.msra.mxu0 %v2815
        %2830 = vmatmul.bf16.gmra.mxu0 %v2820
        %v2831 = vpop.f32.mrf.mxu0
        %v2832 = vadd.f32 %v2806, %v2831
        %v2833 = vpop.f32.mrf.mxu0
        %2834 = vdwg.mxu0
        %vm2835 = vcmask 1043456
        %v2836 = vsel %vm2835, %v2832, -inf
        %2837 = vmax.xlane.f32.xlu0 %v2836
        %v2838 = vpop.xlane.xlu0 %2837
        %v2839 = vsub.f32 %v2832, %v2838
        %v2840 = vmul.f32 %v2839, 1.442695
        %v2841 = vpow.pop %v2840
        %v2842 = vsel %vm2835, %v2841, 0.0
        %2843 = vadd.xlane.f32.xlu0 %v2842
        %v2844 = vpop.xlane.xlu0 %2843
        %v2845 = vlog2.pop %v2844
        %v2846 = vmul.f32 %v2845, 0.6931472
        %v2847 = vadd.f32 %v2846, %v2838
        %v2848 = vsub.f32 %v2847, %v2832
        %v2849 = vld [vmem:[%s5] sm:$0xf]
        %v2850 = vmul.f32 %v2848, %v2849
        %v2851 = vsel %vm2835, %v2850, 0.0
        %v2852 = vrot.slane %v2851, 4
        %v2853 = vadd.f32 %v2851, %v2852
        %v2854 = vrot.slane %v2853, 2
        %v2855 = vadd.f32 %v2853, %v2854
        %v2856 = vrot.slane %v2855, 1
        %v2857 = vadd.f32 %v2855, %v2856
        %2858 = vst [vmem:[%s477] sm:$0x1] %v2857
      $region84: #{forward.3} parent=75 // pred_fallthru
        _
      %p2859 = scmp.lt.s32.totalorder %s25, 1
      %s2860 = scalar_select %p2859, %s25, 1
      %s2861 = scalar_lea.vmem %s14, %s2860
      // Predicated region
      $region85: #{forward.3} parent=75 // pred_check
        %p2862 = pneg %p347
      $region86: #{forward.3} parent=75 // pred_check_branch
        %2864 = sbr.rel (%p2862) target = $region88
      $region87: #{forward.3} parent=75 // pred_region
        _
      $region88: #{forward.3} parent=75 // pred_fallthru
        _
    $region76: #{forward.3} parent=5 // pred_fallthru
      _
    %p2865 = scmp.le.s32.totalorder 2, %s20
    // Predicated region
    $region89: #{forward.3} parent=5 // pred_check
      %p2866 = pneg %p2865
    $region90: #{forward.3} parent=5 // pred_check_branch
      %2868 = sbr.rel (%p2866) target = $region92
    $region91: #{forward.3} parent=5 // pred_region
      %s2869 = ssub.s32 %s20, 2
      // Predicated region
      $region93: #{forward.3} parent=91 // pred_check
        %p2870 = pneg %p353
      $region94: #{forward.3} parent=91 // pred_check_branch
        %2872 = sbr.rel (%p2870) target = $region96
      $region95: #{forward.3} parent=91 // pred_region
        %p2873 = scmp.lt.s32.totalorder %s26, 1
        %s2874 = scalar_select %p2873, %s26, 1
        %s2875 = scalar_lea.vmem %s14, %s2874
      $region96: #{forward.3} parent=91 // pred_fallthru
        _
    $region92: #{forward.3} parent=5 // pred_fallthru
      _
  $region6: #{forward.3} parent=0 // loop_footer
    %s24 = sadd.s32 1, %s20
  $region7: #{forward.3} parent=0 // loop_footer_branch
    %19 = sbr.rel target = $region3
  $region8: #{forward.3} parent=0 // loop_exit
    _

</llo_original>
